<compile_context>
chip_gen: v6e
topology: v6e:2x2x1
jax: 0.10.0
libtpu: 0.0.40
codegen_flags: <defaults>
</compile_context>

<pallas_src>
import jax
import jax.numpy as jnp
from jax.experimental import pallas as pl
from jax.experimental.pallas import tpu as pltpu


# ----------------------------- fused BiLSTM layer kernel -----------------------------
def _make_bilstm_kernel(T, B, H, project):
    """Build a fused bidirectional LSTM layer kernel (single grid point, all-VMEM).

    Inputs:
      x         : (T*B, E_in)   time-major, batch padded to a multiple of 8
      W_ih_f^T  : (E_in, 4H)    forward input weights (pre-transposed)
      W_hh_f^T  : (H, 4H)
      b_f       : (1, 4H)       b_ih + b_hh (forward)
      W_ih_b^T, W_hh_b^T, b_b   same for the backward direction
      [W_out^T  : (2H, E), b_out: (1, E)]   only when project=True (last layer)
    Output:
      (T*B, 2H)  concat(h_fwd, h_bwd)            when project=False
      (T*B, E)   hidden2hidden(concat(h_f, h_b)) when project=True
    """

    def kernel(x_ref, wihf_ref, whhf_ref, bf_ref,
               wihb_ref, whhb_ref, bb_ref, *rest):
        if project:
            wout_ref, bout_ref, out_ref, hf_sc, hb_sc = rest
        else:
            out_ref, hf_sc, hb_sc = rest

        x = x_ref[...]                                           # (T*B, E_in)

        # Time-batched input projections: one MXU matmul per direction, off the
        # serialized recurrence path.
        gx_f = (jnp.dot(x, wihf_ref[...], preferred_element_type=jnp.float32)
                + bf_ref[...])                                   # (T*B, 4H)
        gx_b = (jnp.dot(x, wihb_ref[...], preferred_element_type=jnp.float32)
                + bb_ref[...])                                   # (T*B, 4H)

        whh_f = whhf_ref[...]                                    # (H, 4H)
        whh_b = whhb_ref[...]

        def cell(gx_t, h, c, whh):
            gates = gx_t + jnp.dot(h, whh, preferred_element_type=jnp.float32)
            i_g = jax.nn.sigmoid(gates[:, 0 * H:1 * H])
            f_g = jax.nn.sigmoid(gates[:, 1 * H:2 * H])
            g_g = jnp.tanh(gates[:, 2 * H:3 * H])
            o_g = jax.nn.sigmoid(gates[:, 3 * H:4 * H])
            c_new = f_g * c + i_g * g_g
            h_new = o_g * jnp.tanh(c_new)
            return h_new, c_new

        h_f = jnp.zeros((B, H), jnp.float32)
        c_f = jnp.zeros((B, H), jnp.float32)
        h_b = jnp.zeros((B, H), jnp.float32)
        c_b = jnp.zeros((B, H), jnp.float32)

        # Fully unrolled over the small, static sequence length: only the tiny
        # h @ W_hh matmul + gate math sits on the serial dependency chain.
        for t in range(T):
            rf = t * B                  # forward processes original position t
            rb = (T - 1 - t) * B        # backward processes position T-1-t
            h_f, c_f = cell(gx_f[rf:rf + B, :], h_f, c_f, whh_f)
            h_b, c_b = cell(gx_b[rb:rb + B, :], h_b, c_b, whh_b)
            hf_sc[pl.ds(rf, B), :] = h_f        # 8-sublane-aligned static-offset stores
            hb_sc[pl.ds(rb, B), :] = h_b

        full = jnp.concatenate([hf_sc[...], hb_sc[...]], axis=-1)   # (T*B, 2H)
        if project:
            out_ref[...] = (jnp.dot(full, wout_ref[...],
                                    preferred_element_type=jnp.float32)
                            + bout_ref[...])
        else:
            out_ref[...] = full

    return kernel


def bilstm_layer(x2, layer, T, B, w_out_t=None, b_out=None):
    """x2: (T*B, E_in) -> (T*B, 2H), or (T*B, E) if projection weights are given."""
    H = layer["fwd"]["w_hh_t"].shape[0]
    project = w_out_t is not None
    out_dim = w_out_t.shape[1] if project else 2 * H

    args = [x2,
            layer["fwd"]["w_ih_t"], layer["fwd"]["w_hh_t"], layer["fwd"]["bias"],
            layer["bwd"]["w_ih_t"], layer["bwd"]["w_hh_t"], layer["bwd"]["bias"]]
    if project:
        args += [w_out_t, b_out.reshape(1, -1)]

    return pl.pallas_call(
        _make_bilstm_kernel(T, B, H, project),
        out_shape=jax.ShapeDtypeStruct((T * B, out_dim), jnp.float32),
        scratch_shapes=[pltpu.VMEM((T * B, H), jnp.float32),   # fwd hidden per step
                        pltpu.VMEM((T * B, H), jnp.float32)],  # bwd hidden per step
    )(*args)


# ----------------------------- parameter init (deterministic, synthetic) -----------------------------
def init_params(key, vocab, embed_dim, hid_dim, num_layers, pad_idx):
    keys = iter(jax.random.split(key, 4 + 4 * 2 * num_layers))
    scale = 0.1

    embed = jax.random.uniform(next(keys), (vocab, embed_dim), jnp.float32, -scale, scale)
    embed = embed.at[pad_idx].set(0.0)  # padding_idx row is zero

    layers = []
    for l in range(num_layers):
        e_in = embed_dim if l == 0 else 2 * hid_dim
        dirs = {}
        for d in ("fwd", "bwd"):
            w_ih = jax.random.uniform(next(keys), (4 * hid_dim, e_in), jnp.float32, -scale, scale)
            w_hh = jax.random.uniform(next(keys), (4 * hid_dim, hid_dim), jnp.float32, -scale, scale)
            b_ih = jax.random.uniform(next(keys), (4 * hid_dim,), jnp.float32, -scale, scale)
            b_hh = jax.random.uniform(next(keys), (4 * hid_dim,), jnp.float32, -scale, scale)
            dirs[d] = dict(
                w_ih_t=jnp.transpose(w_ih),
                w_hh_t=jnp.transpose(w_hh),
                bias=(b_ih + b_hh).reshape(1, 4 * hid_dim),
            )
        layers.append(dirs)

    w_out = jax.random.uniform(next(keys), (embed_dim, 2 * hid_dim), jnp.float32, -scale, scale)
    b_out = jax.random.uniform(next(keys), (embed_dim,), jnp.float32, -scale, scale)
    return dict(embed=embed, layers=layers, w_out_t=jnp.transpose(w_out), b_out=b_out)


# ----------------------------- forward (matches PyTorch module semantics) -----------------------------
def forward(tokens, params):
    # tokens: (T, B) int32
    T, B = tokens.shape
    x = jnp.take(params["embed"], tokens, axis=0)          # (T, B, E) embedding lookup (glue)

    B_pad = max(8, ((B + 7) // 8) * 8)                      # pad batch to 8 sublanes
    if B_pad != B:
        x = jnp.pad(x, ((0, 0), (0, B_pad - B), (0, 0)))
    x2 = x.reshape(T * B_pad, x.shape[-1])                  # (T*B_pad, E)

    n_layers = len(params["layers"])
    for li, layer in enumerate(params["layers"]):
        if li == n_layers - 1:
            # last layer: hidden2hidden Linear fused into the kernel epilogue
            x2 = bilstm_layer(x2, layer, T, B_pad,
                              w_out_t=params["w_out_t"], b_out=params["b_out"])
        else:
            x2 = bilstm_layer(x2, layer, T, B_pad)

    E = params["b_out"].shape[0]
    y = x2.reshape(T, B_pad, E)[:, :B, :]                   # (T, B, E) drop padded batch rows
    return jnp.transpose(y, (1, 2, 0))                      # (B, E, T)


# ----------------------------- pure-JAX reference (for correctness check) -----------------------------
def _reference_forward(tokens, params):
    x = jnp.take(params["embed"], tokens, axis=0)           # (T, B, E)
    T, B, _ = x.shape
    for layer in params["layers"]:
        outs = []
        for name, reverse in (("fwd", False), ("bwd", True)):
            p = layer[name]
            H = p["w_hh_t"].shape[0]
            h = jnp.zeros((B, H), jnp.float32)
            c = jnp.zeros((B, H), jnp.float32)
            hs = [None] * T
            order = range(T - 1, -1, -1) if reverse else range(T)
            for t in order:
                gates = x[t] @ p["w_ih_t"] + h @ p["w_hh_t"] + p["bias"]
                i_g = jax.nn.sigmoid(gates[:, :H])
                f_g = jax.nn.sigmoid(gates[:, H:2 * H])
                g_g = jnp.tanh(gates[:, 2 * H:3 * H])
                o_g = jax.nn.sigmoid(gates[:, 3 * H:4 * H])
                c = f_g * c + i_g * g_g
                h = o_g * jnp.tanh(c)
                hs[t] = h
            outs.append(jnp.stack(hs, axis=0))
        x = jnp.concatenate(outs, axis=-1)                   # (T, B, 2H)
    y = x @ params["w_out_t"] + params["b_out"]              # (T, B, E)
    return jnp.transpose(y, (1, 2, 0))                       # (B, E, T)


if __name__ == "__main__":
    key = jax.random.PRNGKey(0)
    T, B = 8, 2
    vocab, E, H, num_layers, pad_idx = 50, 32, 32, 2, 0

    pkey, tkey = jax.random.split(key)
    params = init_params(pkey, vocab, E, H, num_layers, pad_idx)
    tokens = jax.random.randint(tkey, (T, B), 0, vocab, dtype=jnp.int32)

    out = jax.jit(forward)(tokens, params)
    jax.block_until_ready(out)
    assert out.shape == (B, E, T) and out.dtype == jnp.float32

    ref = _reference_forward(tokens, params)
    err = float(jnp.max(jnp.abs(out - ref)))
    assert err < 2e-3, f"mismatch vs pure-JAX reference: max abs err {err}"

    print("KERNEL_OK")
</pallas_src>

<mosaic_0001>
module attributes {stable_mosaic.version = 11 : i64} {
  func.func @kernel(%arg0: memref<64x64xf32, #tpu.memory_space<vmem>>, %arg1: memref<64x128xf32, #tpu.memory_space<vmem>>, %arg2: memref<32x128xf32, #tpu.memory_space<vmem>>, %arg3: memref<1x128xf32, #tpu.memory_space<vmem>>, %arg4: memref<64x128xf32, #tpu.memory_space<vmem>>, %arg5: memref<32x128xf32, #tpu.memory_space<vmem>>, %arg6: memref<1x128xf32, #tpu.memory_space<vmem>>, %arg7: memref<64x32xf32, #tpu.memory_space<vmem>>, %arg8: memref<1x32xf32, #tpu.memory_space<vmem>>, %arg9: memref<64x32xf32, #tpu.memory_space<vmem>>, %arg10: memref<64x32xf32, #tpu.memory_space<vmem>>, %arg11: memref<64x32xf32, #tpu.memory_space<vmem>>) attributes {dimension_semantics = [], scalar_prefetch = 0 : i64, scratch_operands = 2 : i64, tpu.core_type = #tpu.core_type<tc>} {
    %c0 = arith.constant 0 : index
    %c0_0 = arith.constant 0 : index
    %0 = vector.load %arg0[%c0, %c0_0] : memref<64x64xf32, #tpu.memory_space<vmem>>, vector<64x64xf32>
    %c0_1 = arith.constant 0 : index
    %c0_2 = arith.constant 0 : index
    %1 = vector.load %arg1[%c0_1, %c0_2] : memref<64x128xf32, #tpu.memory_space<vmem>>, vector<64x128xf32>
    %cst = arith.constant dense<0.000000e+00> : vector<64x128xf32>
    %2 = tpu.matmul %0, %1, %cst {dimension_numbers = #tpu.dot_dimension_numbers<[1], [0], [0], [1], [0, 0, 1, 1], [], []>} : vector<64x64xf32>, vector<64x128xf32>, vector<64x128xf32> -> vector<64x128xf32>
    %c0_3 = arith.constant 0 : index
    %c0_4 = arith.constant 0 : index
    %3 = vector.load %arg3[%c0_3, %c0_4] : memref<1x128xf32, #tpu.memory_space<vmem>>, vector<1x128xf32>
    %4 = vector.broadcast %3 : vector<1x128xf32> to vector<64x128xf32>
    %5 = arith.addf %2, %4 : vector<64x128xf32>
    %c0_5 = arith.constant 0 : index
    %c0_6 = arith.constant 0 : index
    %6 = vector.load %arg4[%c0_5, %c0_6] : memref<64x128xf32, #tpu.memory_space<vmem>>, vector<64x128xf32>
    %cst_7 = arith.constant dense<0.000000e+00> : vector<64x128xf32>
    %7 = tpu.matmul %0, %6, %cst_7 {dimension_numbers = #tpu.dot_dimension_numbers<[1], [0], [0], [1], [0, 0, 1, 1], [], []>} : vector<64x64xf32>, vector<64x128xf32>, vector<64x128xf32> -> vector<64x128xf32>
    %c0_8 = arith.constant 0 : index
    %c0_9 = arith.constant 0 : index
    %8 = vector.load %arg6[%c0_8, %c0_9] : memref<1x128xf32, #tpu.memory_space<vmem>>, vector<1x128xf32>
    %9 = vector.broadcast %8 : vector<1x128xf32> to vector<64x128xf32>
    %10 = arith.addf %7, %9 : vector<64x128xf32>
    %c0_10 = arith.constant 0 : index
    %c0_11 = arith.constant 0 : index
    %11 = vector.load %arg2[%c0_10, %c0_11] : memref<32x128xf32, #tpu.memory_space<vmem>>, vector<32x128xf32>
    %c0_12 = arith.constant 0 : index
    %c0_13 = arith.constant 0 : index
    %12 = vector.load %arg5[%c0_12, %c0_13] : memref<32x128xf32, #tpu.memory_space<vmem>>, vector<32x128xf32>
    %cst_14 = arith.constant 0.000000e+00 : f32
    %13 = vector.broadcast %cst_14 : f32 to vector<8x32xf32>
    %cst_15 = arith.constant 0.000000e+00 : f32
    %14 = vector.broadcast %cst_15 : f32 to vector<8x32xf32>
    %cst_16 = arith.constant 0.000000e+00 : f32
    %15 = vector.broadcast %cst_16 : f32 to vector<8x32xf32>
    %cst_17 = arith.constant 0.000000e+00 : f32
    %16 = vector.broadcast %cst_17 : f32 to vector<8x32xf32>
    %17 = vector.extract_strided_slice %5 {offsets = [0, 0], sizes = [8, 128], strides = [1, 1]} : vector<64x128xf32> to vector<8x128xf32>
    %cst_18 = arith.constant dense<0.000000e+00> : vector<8x128xf32>
    %18 = tpu.matmul %13, %11, %cst_18 {dimension_numbers = #tpu.dot_dimension_numbers<[1], [0], [0], [1], [0, 0, 1, 1], [], []>} : vector<8x32xf32>, vector<32x128xf32>, vector<8x128xf32> -> vector<8x128xf32>
    %19 = arith.addf %17, %18 : vector<8x128xf32>
    %20 = vector.extract_strided_slice %19 {offsets = [0, 0], sizes = [8, 32], strides = [1, 1]} : vector<8x128xf32> to vector<8x32xf32>
    %21 = arith.negf %20 : vector<8x32xf32>
    %22 = math.exp %21 : vector<8x32xf32>
    %cst_19 = arith.constant 1.000000e+00 : f32
    %23 = vector.broadcast %cst_19 : f32 to vector<8x32xf32>
    %24 = arith.addf %23, %22 : vector<8x32xf32>
    %25 = arith.divf %23, %24 : vector<8x32xf32>
    %26 = vector.extract_strided_slice %19 {offsets = [0, 32], sizes = [8, 32], strides = [1, 1]} : vector<8x128xf32> to vector<8x32xf32>
    %27 = arith.negf %26 : vector<8x32xf32>
    %28 = math.exp %27 : vector<8x32xf32>
    %cst_20 = arith.constant 1.000000e+00 : f32
    %29 = vector.broadcast %cst_20 : f32 to vector<8x32xf32>
    %30 = arith.addf %29, %28 : vector<8x32xf32>
    %31 = arith.divf %29, %30 : vector<8x32xf32>
    %32 = vector.extract_strided_slice %19 {offsets = [0, 64], sizes = [8, 32], strides = [1, 1]} : vector<8x128xf32> to vector<8x32xf32>
    %33 = math.tanh %32 : vector<8x32xf32>
    %34 = vector.extract_strided_slice %19 {offsets = [0, 96], sizes = [8, 32], strides = [1, 1]} : vector<8x128xf32> to vector<8x32xf32>
    %35 = arith.negf %34 : vector<8x32xf32>
    %36 = math.exp %35 : vector<8x32xf32>
    %cst_21 = arith.constant 1.000000e+00 : f32
    %37 = vector.broadcast %cst_21 : f32 to vector<8x32xf32>
    %38 = arith.addf %37, %36 : vector<8x32xf32>
    %39 = arith.divf %37, %38 : vector<8x32xf32>
    %40 = arith.mulf %31, %14 : vector<8x32xf32>
    %41 = arith.mulf %25, %33 : vector<8x32xf32>
    %42 = arith.addf %40, %41 : vector<8x32xf32>
    %43 = math.tanh %42 : vector<8x32xf32>
    %44 = arith.mulf %39, %43 : vector<8x32xf32>
    %45 = vector.extract_strided_slice %10 {offsets = [56, 0], sizes = [8, 128], strides = [1, 1]} : vector<64x128xf32> to vector<8x128xf32>
    %cst_22 = arith.constant dense<0.000000e+00> : vector<8x128xf32>
    %46 = tpu.matmul %15, %12, %cst_22 {dimension_numbers = #tpu.dot_dimension_numbers<[1], [0], [0], [1], [0, 0, 1, 1], [], []>} : vector<8x32xf32>, vector<32x128xf32>, vector<8x128xf32> -> vector<8x128xf32>
    %47 = arith.addf %45, %46 : vector<8x128xf32>
    %48 = vector.extract_strided_slice %47 {offsets = [0, 0], sizes = [8, 32], strides = [1, 1]} : vector<8x128xf32> to vector<8x32xf32>
    %49 = arith.negf %48 : vector<8x32xf32>
    %50 = math.exp %49 : vector<8x32xf32>
    %cst_23 = arith.constant 1.000000e+00 : f32
    %51 = vector.broadcast %cst_23 : f32 to vector<8x32xf32>
    %52 = arith.addf %51, %50 : vector<8x32xf32>
    %53 = arith.divf %51, %52 : vector<8x32xf32>
    %54 = vector.extract_strided_slice %47 {offsets = [0, 32], sizes = [8, 32], strides = [1, 1]} : vector<8x128xf32> to vector<8x32xf32>
    %55 = arith.negf %54 : vector<8x32xf32>
    %56 = math.exp %55 : vector<8x32xf32>
    %cst_24 = arith.constant 1.000000e+00 : f32
    %57 = vector.broadcast %cst_24 : f32 to vector<8x32xf32>
    %58 = arith.addf %57, %56 : vector<8x32xf32>
    %59 = arith.divf %57, %58 : vector<8x32xf32>
    %60 = vector.extract_strided_slice %47 {offsets = [0, 64], sizes = [8, 32], strides = [1, 1]} : vector<8x128xf32> to vector<8x32xf32>
    %61 = math.tanh %60 : vector<8x32xf32>
    %62 = vector.extract_strided_slice %47 {offsets = [0, 96], sizes = [8, 32], strides = [1, 1]} : vector<8x128xf32> to vector<8x32xf32>
    %63 = arith.negf %62 : vector<8x32xf32>
    %64 = math.exp %63 : vector<8x32xf32>
    %cst_25 = arith.constant 1.000000e+00 : f32
    %65 = vector.broadcast %cst_25 : f32 to vector<8x32xf32>
    %66 = arith.addf %65, %64 : vector<8x32xf32>
    %67 = arith.divf %65, %66 : vector<8x32xf32>
    %68 = arith.mulf %59, %16 : vector<8x32xf32>
    %69 = arith.mulf %53, %61 : vector<8x32xf32>
    %70 = arith.addf %68, %69 : vector<8x32xf32>
    %71 = math.tanh %70 : vector<8x32xf32>
    %72 = arith.mulf %67, %71 : vector<8x32xf32>
    %c0_26 = arith.constant 0 : index
    %c0_27 = arith.constant 0 : index
    %73 = vector.load %arg10[%c0_26, %c0_27] : memref<64x32xf32, #tpu.memory_space<vmem>>, vector<8x32xf32>
    tpu.vector_store %arg10[%c0_26, %c0_27], %44 {strides = array<i32>} : memref<64x32xf32, #tpu.memory_space<vmem>>, vector<8x32xf32>,
    %c56 = arith.constant 56 : index
    %c0_28 = arith.constant 0 : index
    %74 = vector.load %arg11[%c56, %c0_28] : memref<64x32xf32, #tpu.memory_space<vmem>>, vector<8x32xf32>
    tpu.vector_store %arg11[%c56, %c0_28], %72 {strides = array<i32>} : memref<64x32xf32, #tpu.memory_space<vmem>>, vector<8x32xf32>,
    %75 = vector.extract_strided_slice %5 {offsets = [8, 0], sizes = [8, 128], strides = [1, 1]} : vector<64x128xf32> to vector<8x128xf32>
    %cst_29 = arith.constant dense<0.000000e+00> : vector<8x128xf32>
    %76 = tpu.matmul %44, %11, %cst_29 {dimension_numbers = #tpu.dot_dimension_numbers<[1], [0], [0], [1], [0, 0, 1, 1], [], []>} : vector<8x32xf32>, vector<32x128xf32>, vector<8x128xf32> -> vector<8x128xf32>
    %77 = arith.addf %75, %76 : vector<8x128xf32>
    %78 = vector.extract_strided_slice %77 {offsets = [0, 0], sizes = [8, 32], strides = [1, 1]} : vector<8x128xf32> to vector<8x32xf32>
    %79 = arith.negf %78 : vector<8x32xf32>
    %80 = math.exp %79 : vector<8x32xf32>
    %cst_30 = arith.constant 1.000000e+00 : f32
    %81 = vector.broadcast %cst_30 : f32 to vector<8x32xf32>
    %82 = arith.addf %81, %80 : vector<8x32xf32>
    %83 = arith.divf %81, %82 : vector<8x32xf32>
    %84 = vector.extract_strided_slice %77 {offsets = [0, 32], sizes = [8, 32], strides = [1, 1]} : vector<8x128xf32> to vector<8x32xf32>
    %85 = arith.negf %84 : vector<8x32xf32>
    %86 = math.exp %85 : vector<8x32xf32>
    %cst_31 = arith.constant 1.000000e+00 : f32
    %87 = vector.broadcast %cst_31 : f32 to vector<8x32xf32>
    %88 = arith.addf %87, %86 : vector<8x32xf32>
    %89 = arith.divf %87, %88 : vector<8x32xf32>
    %90 = vector.extract_strided_slice %77 {offsets = [0, 64], sizes = [8, 32], strides = [1, 1]} : vector<8x128xf32> to vector<8x32xf32>
    %91 = math.tanh %90 : vector<8x32xf32>
    %92 = vector.extract_strided_slice %77 {offsets = [0, 96], sizes = [8, 32], strides = [1, 1]} : vector<8x128xf32> to vector<8x32xf32>
    %93 = arith.negf %92 : vector<8x32xf32>
    %94 = math.exp %93 : vector<8x32xf32>
    %cst_32 = arith.constant 1.000000e+00 : f32
    %95 = vector.broadcast %cst_32 : f32 to vector<8x32xf32>
    %96 = arith.addf %95, %94 : vector<8x32xf32>
    %97 = arith.divf %95, %96 : vector<8x32xf32>
    %98 = arith.mulf %89, %42 : vector<8x32xf32>
    %99 = arith.mulf %83, %91 : vector<8x32xf32>
    %100 = arith.addf %98, %99 : vector<8x32xf32>
    %101 = math.tanh %100 : vector<8x32xf32>
    %102 = arith.mulf %97, %101 : vector<8x32xf32>
    %103 = vector.extract_strided_slice %10 {offsets = [48, 0], sizes = [8, 128], strides = [1, 1]} : vector<64x128xf32> to vector<8x128xf32>
    %cst_33 = arith.constant dense<0.000000e+00> : vector<8x128xf32>
    %104 = tpu.matmul %72, %12, %cst_33 {dimension_numbers = #tpu.dot_dimension_numbers<[1], [0], [0], [1], [0, 0, 1, 1], [], []>} : vector<8x32xf32>, vector<32x128xf32>, vector<8x128xf32> -> vector<8x128xf32>
    %105 = arith.addf %103, %104 : vector<8x128xf32>
    %106 = vector.extract_strided_slice %105 {offsets = [0, 0], sizes = [8, 32], strides = [1, 1]} : vector<8x128xf32> to vector<8x32xf32>
    %107 = arith.negf %106 : vector<8x32xf32>
    %108 = math.exp %107 : vector<8x32xf32>
    %cst_34 = arith.constant 1.000000e+00 : f32
    %109 = vector.broadcast %cst_34 : f32 to vector<8x32xf32>
    %110 = arith.addf %109, %108 : vector<8x32xf32>
    %111 = arith.divf %109, %110 : vector<8x32xf32>
    %112 = vector.extract_strided_slice %105 {offsets = [0, 32], sizes = [8, 32], strides = [1, 1]} : vector<8x128xf32> to vector<8x32xf32>
    %113 = arith.negf %112 : vector<8x32xf32>
    %114 = math.exp %113 : vector<8x32xf32>
    %cst_35 = arith.constant 1.000000e+00 : f32
    %115 = vector.broadcast %cst_35 : f32 to vector<8x32xf32>
    %116 = arith.addf %115, %114 : vector<8x32xf32>
    %117 = arith.divf %115, %116 : vector<8x32xf32>
    %118 = vector.extract_strided_slice %105 {offsets = [0, 64], sizes = [8, 32], strides = [1, 1]} : vector<8x128xf32> to vector<8x32xf32>
    %119 = math.tanh %118 : vector<8x32xf32>
    %120 = vector.extract_strided_slice %105 {offsets = [0, 96], sizes = [8, 32], strides = [1, 1]} : vector<8x128xf32> to vector<8x32xf32>
    %121 = arith.negf %120 : vector<8x32xf32>
    %122 = math.exp %121 : vector<8x32xf32>
    %cst_36 = arith.constant 1.000000e+00 : f32
    %123 = vector.broadcast %cst_36 : f32 to vector<8x32xf32>
    %124 = arith.addf %123, %122 : vector<8x32xf32>
    %125 = arith.divf %123, %124 : vector<8x32xf32>
    %126 = arith.mulf %117, %70 : vector<8x32xf32>
    %127 = arith.mulf %111, %119 : vector<8x32xf32>
    %128 = arith.addf %126, %127 : vector<8x32xf32>
    %129 = math.tanh %128 : vector<8x32xf32>
    %130 = arith.mulf %125, %129 : vector<8x32xf32>
    %c8 = arith.constant 8 : index
    %c0_37 = arith.constant 0 : index
    %131 = vector.load %arg10[%c8, %c0_37] : memref<64x32xf32, #tpu.memory_space<vmem>>, vector<8x32xf32>
    tpu.vector_store %arg10[%c8, %c0_37], %102 {strides = array<i32>} : memref<64x32xf32, #tpu.memory_space<vmem>>, vector<8x32xf32>,
    %c48 = arith.constant 48 : index
    %c0_38 = arith.constant 0 : index
    %132 = vector.load %arg11[%c48, %c0_38] : memref<64x32xf32, #tpu.memory_space<vmem>>, vector<8x32xf32>
    tpu.vector_store %arg11[%c48, %c0_38], %130 {strides = array<i32>} : memref<64x32xf32, #tpu.memory_space<vmem>>, vector<8x32xf32>,
    %133 = vector.extract_strided_slice %5 {offsets = [16, 0], sizes = [8, 128], strides = [1, 1]} : vector<64x128xf32> to vector<8x128xf32>
    %cst_39 = arith.constant dense<0.000000e+00> : vector<8x128xf32>
    %134 = tpu.matmul %102, %11, %cst_39 {dimension_numbers = #tpu.dot_dimension_numbers<[1], [0], [0], [1], [0, 0, 1, 1], [], []>} : vector<8x32xf32>, vector<32x128xf32>, vector<8x128xf32> -> vector<8x128xf32>
    %135 = arith.addf %133, %134 : vector<8x128xf32>
    %136 = vector.extract_strided_slice %135 {offsets = [0, 0], sizes = [8, 32], strides = [1, 1]} : vector<8x128xf32> to vector<8x32xf32>
    %137 = arith.negf %136 : vector<8x32xf32>
    %138 = math.exp %137 : vector<8x32xf32>
    %cst_40 = arith.constant 1.000000e+00 : f32
    %139 = vector.broadcast %cst_40 : f32 to vector<8x32xf32>
    %140 = arith.addf %139, %138 : vector<8x32xf32>
    %141 = arith.divf %139, %140 : vector<8x32xf32>
    %142 = vector.extract_strided_slice %135 {offsets = [0, 32], sizes = [8, 32], strides = [1, 1]} : vector<8x128xf32> to vector<8x32xf32>
    %143 = arith.negf %142 : vector<8x32xf32>
    %144 = math.exp %143 : vector<8x32xf32>
    %cst_41 = arith.constant 1.000000e+00 : f32
    %145 = vector.broadcast %cst_41 : f32 to vector<8x32xf32>
    %146 = arith.addf %145, %144 : vector<8x32xf32>
    %147 = arith.divf %145, %146 : vector<8x32xf32>
    %148 = vector.extract_strided_slice %135 {offsets = [0, 64], sizes = [8, 32], strides = [1, 1]} : vector<8x128xf32> to vector<8x32xf32>
    %149 = math.tanh %148 : vector<8x32xf32>
    %150 = vector.extract_strided_slice %135 {offsets = [0, 96], sizes = [8, 32], strides = [1, 1]} : vector<8x128xf32> to vector<8x32xf32>
    %151 = arith.negf %150 : vector<8x32xf32>
    %152 = math.exp %151 : vector<8x32xf32>
    %cst_42 = arith.constant 1.000000e+00 : f32
    %153 = vector.broadcast %cst_42 : f32 to vector<8x32xf32>
    %154 = arith.addf %153, %152 : vector<8x32xf32>
    %155 = arith.divf %153, %154 : vector<8x32xf32>
    %156 = arith.mulf %147, %100 : vector<8x32xf32>
    %157 = arith.mulf %141, %149 : vector<8x32xf32>
    %158 = arith.addf %156, %157 : vector<8x32xf32>
    %159 = math.tanh %158 : vector<8x32xf32>
    %160 = arith.mulf %155, %159 : vector<8x32xf32>
    %161 = vector.extract_strided_slice %10 {offsets = [40, 0], sizes = [8, 128], strides = [1, 1]} : vector<64x128xf32> to vector<8x128xf32>
    %cst_43 = arith.constant dense<0.000000e+00> : vector<8x128xf32>
    %162 = tpu.matmul %130, %12, %cst_43 {dimension_numbers = #tpu.dot_dimension_numbers<[1], [0], [0], [1], [0, 0, 1, 1], [], []>} : vector<8x32xf32>, vector<32x128xf32>, vector<8x128xf32> -> vector<8x128xf32>
    %163 = arith.addf %161, %162 : vector<8x128xf32>
    %164 = vector.extract_strided_slice %163 {offsets = [0, 0], sizes = [8, 32], strides = [1, 1]} : vector<8x128xf32> to vector<8x32xf32>
    %165 = arith.negf %164 : vector<8x32xf32>
    %166 = math.exp %165 : vector<8x32xf32>
    %cst_44 = arith.constant 1.000000e+00 : f32
    %167 = vector.broadcast %cst_44 : f32 to vector<8x32xf32>
    %168 = arith.addf %167, %166 : vector<8x32xf32>
    %169 = arith.divf %167, %168 : vector<8x32xf32>
    %170 = vector.extract_strided_slice %163 {offsets = [0, 32], sizes = [8, 32], strides = [1, 1]} : vector<8x128xf32> to vector<8x32xf32>
    %171 = arith.negf %170 : vector<8x32xf32>
    %172 = math.exp %171 : vector<8x32xf32>
    %cst_45 = arith.constant 1.000000e+00 : f32
    %173 = vector.broadcast %cst_45 : f32 to vector<8x32xf32>
    %174 = arith.addf %173, %172 : vector<8x32xf32>
    %175 = arith.divf %173, %174 : vector<8x32xf32>
    %176 = vector.extract_strided_slice %163 {offsets = [0, 64], sizes = [8, 32], strides = [1, 1]} : vector<8x128xf32> to vector<8x32xf32>
    %177 = math.tanh %176 : vector<8x32xf32>
    %178 = vector.extract_strided_slice %163 {offsets = [0, 96], sizes = [8, 32], strides = [1, 1]} : vector<8x128xf32> to vector<8x32xf32>
    %179 = arith.negf %178 : vector<8x32xf32>
    %180 = math.exp %179 : vector<8x32xf32>
    %cst_46 = arith.constant 1.000000e+00 : f32
    %181 = vector.broadcast %cst_46 : f32 to vector<8x32xf32>
    %182 = arith.addf %181, %180 : vector<8x32xf32>
    %183 = arith.divf %181, %182 : vector<8x32xf32>
    %184 = arith.mulf %175, %128 : vector<8x32xf32>
    %185 = arith.mulf %169, %177 : vector<8x32xf32>
    %186 = arith.addf %184, %185 : vector<8x32xf32>
    %187 = math.tanh %186 : vector<8x32xf32>
    %188 = arith.mulf %183, %187 : vector<8x32xf32>
    %c16 = arith.constant 16 : index
    %c0_47 = arith.constant 0 : index
    %189 = vector.load %arg10[%c16, %c0_47] : memref<64x32xf32, #tpu.memory_space<vmem>>, vector<8x32xf32>
    tpu.vector_store %arg10[%c16, %c0_47], %160 {strides = array<i32>} : memref<64x32xf32, #tpu.memory_space<vmem>>, vector<8x32xf32>,
    %c40 = arith.constant 40 : index
    %c0_48 = arith.constant 0 : index
    %190 = vector.load %arg11[%c40, %c0_48] : memref<64x32xf32, #tpu.memory_space<vmem>>, vector<8x32xf32>
    tpu.vector_store %arg11[%c40, %c0_48], %188 {strides = array<i32>} : memref<64x32xf32, #tpu.memory_space<vmem>>, vector<8x32xf32>,
    %191 = vector.extract_strided_slice %5 {offsets = [24, 0], sizes = [8, 128], strides = [1, 1]} : vector<64x128xf32> to vector<8x128xf32>
    %cst_49 = arith.constant dense<0.000000e+00> : vector<8x128xf32>
    %192 = tpu.matmul %160, %11, %cst_49 {dimension_numbers = #tpu.dot_dimension_numbers<[1], [0], [0], [1], [0, 0, 1, 1], [], []>} : vector<8x32xf32>, vector<32x128xf32>, vector<8x128xf32> -> vector<8x128xf32>
    %193 = arith.addf %191, %192 : vector<8x128xf32>
    %194 = vector.extract_strided_slice %193 {offsets = [0, 0], sizes = [8, 32], strides = [1, 1]} : vector<8x128xf32> to vector<8x32xf32>
    %195 = arith.negf %194 : vector<8x32xf32>
    %196 = math.exp %195 : vector<8x32xf32>
    %cst_50 = arith.constant 1.000000e+00 : f32
    %197 = vector.broadcast %cst_50 : f32 to vector<8x32xf32>
    %198 = arith.addf %197, %196 : vector<8x32xf32>
    %199 = arith.divf %197, %198 : vector<8x32xf32>
    %200 = vector.extract_strided_slice %193 {offsets = [0, 32], sizes = [8, 32], strides = [1, 1]} : vector<8x128xf32> to vector<8x32xf32>
    %201 = arith.negf %200 : vector<8x32xf32>
    %202 = math.exp %201 : vector<8x32xf32>
    %cst_51 = arith.constant 1.000000e+00 : f32
    %203 = vector.broadcast %cst_51 : f32 to vector<8x32xf32>
    %204 = arith.addf %203, %202 : vector<8x32xf32>
    %205 = arith.divf %203, %204 : vector<8x32xf32>
    %206 = vector.extract_strided_slice %193 {offsets = [0, 64], sizes = [8, 32], strides = [1, 1]} : vector<8x128xf32> to vector<8x32xf32>
    %207 = math.tanh %206 : vector<8x32xf32>
    %208 = vector.extract_strided_slice %193 {offsets = [0, 96], sizes = [8, 32], strides = [1, 1]} : vector<8x128xf32> to vector<8x32xf32>
    %209 = arith.negf %208 : vector<8x32xf32>
    %210 = math.exp %209 : vector<8x32xf32>
    %cst_52 = arith.constant 1.000000e+00 : f32
    %211 = vector.broadcast %cst_52 : f32 to vector<8x32xf32>
    %212 = arith.addf %211, %210 : vector<8x32xf32>
    %213 = arith.divf %211, %212 : vector<8x32xf32>
    %214 = arith.mulf %205, %158 : vector<8x32xf32>
    %215 = arith.mulf %199, %207 : vector<8x32xf32>
    %216 = arith.addf %214, %215 : vector<8x32xf32>
    %217 = math.tanh %216 : vector<8x32xf32>
    %218 = arith.mulf %213, %217 : vector<8x32xf32>
    %219 = vector.extract_strided_slice %10 {offsets = [32, 0], sizes = [8, 128], strides = [1, 1]} : vector<64x128xf32> to vector<8x128xf32>
    %cst_53 = arith.constant dense<0.000000e+00> : vector<8x128xf32>
    %220 = tpu.matmul %188, %12, %cst_53 {dimension_numbers = #tpu.dot_dimension_numbers<[1], [0], [0], [1], [0, 0, 1, 1], [], []>} : vector<8x32xf32>, vector<32x128xf32>, vector<8x128xf32> -> vector<8x128xf32>
    %221 = arith.addf %219, %220 : vector<8x128xf32>
    %222 = vector.extract_strided_slice %221 {offsets = [0, 0], sizes = [8, 32], strides = [1, 1]} : vector<8x128xf32> to vector<8x32xf32>
    %223 = arith.negf %222 : vector<8x32xf32>
    %224 = math.exp %223 : vector<8x32xf32>
    %cst_54 = arith.constant 1.000000e+00 : f32
    %225 = vector.broadcast %cst_54 : f32 to vector<8x32xf32>
    %226 = arith.addf %225, %224 : vector<8x32xf32>
    %227 = arith.divf %225, %226 : vector<8x32xf32>
    %228 = vector.extract_strided_slice %221 {offsets = [0, 32], sizes = [8, 32], strides = [1, 1]} : vector<8x128xf32> to vector<8x32xf32>
    %229 = arith.negf %228 : vector<8x32xf32>
    %230 = math.exp %229 : vector<8x32xf32>
    %cst_55 = arith.constant 1.000000e+00 : f32
    %231 = vector.broadcast %cst_55 : f32 to vector<8x32xf32>
    %232 = arith.addf %231, %230 : vector<8x32xf32>
    %233 = arith.divf %231, %232 : vector<8x32xf32>
    %234 = vector.extract_strided_slice %221 {offsets = [0, 64], sizes = [8, 32], strides = [1, 1]} : vector<8x128xf32> to vector<8x32xf32>
    %235 = math.tanh %234 : vector<8x32xf32>
    %236 = vector.extract_strided_slice %221 {offsets = [0, 96], sizes = [8, 32], strides = [1, 1]} : vector<8x128xf32> to vector<8x32xf32>
    %237 = arith.negf %236 : vector<8x32xf32>
    %238 = math.exp %237 : vector<8x32xf32>
    %cst_56 = arith.constant 1.000000e+00 : f32
    %239 = vector.broadcast %cst_56 : f32 to vector<8x32xf32>
    %240 = arith.addf %239, %238 : vector<8x32xf32>
    %241 = arith.divf %239, %240 : vector<8x32xf32>
    %242 = arith.mulf %233, %186 : vector<8x32xf32>
    %243 = arith.mulf %227, %235 : vector<8x32xf32>
    %244 = arith.addf %242, %243 : vector<8x32xf32>
    %245 = math.tanh %244 : vector<8x32xf32>
    %246 = arith.mulf %241, %245 : vector<8x32xf32>
    %c24 = arith.constant 24 : index
    %c0_57 = arith.constant 0 : index
    %247 = vector.load %arg10[%c24, %c0_57] : memref<64x32xf32, #tpu.memory_space<vmem>>, vector<8x32xf32>
    tpu.vector_store %arg10[%c24, %c0_57], %218 {strides = array<i32>} : memref<64x32xf32, #tpu.memory_space<vmem>>, vector<8x32xf32>,
    %c32 = arith.constant 32 : index
    %c0_58 = arith.constant 0 : index
    %248 = vector.load %arg11[%c32, %c0_58] : memref<64x32xf32, #tpu.memory_space<vmem>>, vector<8x32xf32>
    tpu.vector_store %arg11[%c32, %c0_58], %246 {strides = array<i32>} : memref<64x32xf32, #tpu.memory_space<vmem>>, vector<8x32xf32>,
    %249 = vector.extract_strided_slice %5 {offsets = [32, 0], sizes = [8, 128], strides = [1, 1]} : vector<64x128xf32> to vector<8x128xf32>
    %cst_59 = arith.constant dense<0.000000e+00> : vector<8x128xf32>
    %250 = tpu.matmul %218, %11, %cst_59 {dimension_numbers = #tpu.dot_dimension_numbers<[1], [0], [0], [1], [0, 0, 1, 1], [], []>} : vector<8x32xf32>, vector<32x128xf32>, vector<8x128xf32> -> vector<8x128xf32>
    %251 = arith.addf %249, %250 : vector<8x128xf32>
    %252 = vector.extract_strided_slice %251 {offsets = [0, 0], sizes = [8, 32], strides = [1, 1]} : vector<8x128xf32> to vector<8x32xf32>
    %253 = arith.negf %252 : vector<8x32xf32>
    %254 = math.exp %253 : vector<8x32xf32>
    %cst_60 = arith.constant 1.000000e+00 : f32
    %255 = vector.broadcast %cst_60 : f32 to vector<8x32xf32>
    %256 = arith.addf %255, %254 : vector<8x32xf32>
    %257 = arith.divf %255, %256 : vector<8x32xf32>
    %258 = vector.extract_strided_slice %251 {offsets = [0, 32], sizes = [8, 32], strides = [1, 1]} : vector<8x128xf32> to vector<8x32xf32>
    %259 = arith.negf %258 : vector<8x32xf32>
    %260 = math.exp %259 : vector<8x32xf32>
    %cst_61 = arith.constant 1.000000e+00 : f32
    %261 = vector.broadcast %cst_61 : f32 to vector<8x32xf32>
    %262 = arith.addf %261, %260 : vector<8x32xf32>
    %263 = arith.divf %261, %262 : vector<8x32xf32>
    %264 = vector.extract_strided_slice %251 {offsets = [0, 64], sizes = [8, 32], strides = [1, 1]} : vector<8x128xf32> to vector<8x32xf32>
    %265 = math.tanh %264 : vector<8x32xf32>
    %266 = vector.extract_strided_slice %251 {offsets = [0, 96], sizes = [8, 32], strides = [1, 1]} : vector<8x128xf32> to vector<8x32xf32>
    %267 = arith.negf %266 : vector<8x32xf32>
    %268 = math.exp %267 : vector<8x32xf32>
    %cst_62 = arith.constant 1.000000e+00 : f32
    %269 = vector.broadcast %cst_62 : f32 to vector<8x32xf32>
    %270 = arith.addf %269, %268 : vector<8x32xf32>
    %271 = arith.divf %269, %270 : vector<8x32xf32>
    %272 = arith.mulf %263, %216 : vector<8x32xf32>
    %273 = arith.mulf %257, %265 : vector<8x32xf32>
    %274 = arith.addf %272, %273 : vector<8x32xf32>
    %275 = math.tanh %274 : vector<8x32xf32>
    %276 = arith.mulf %271, %275 : vector<8x32xf32>
    %277 = vector.extract_strided_slice %10 {offsets = [24, 0], sizes = [8, 128], strides = [1, 1]} : vector<64x128xf32> to vector<8x128xf32>
    %cst_63 = arith.constant dense<0.000000e+00> : vector<8x128xf32>
    %278 = tpu.matmul %246, %12, %cst_63 {dimension_numbers = #tpu.dot_dimension_numbers<[1], [0], [0], [1], [0, 0, 1, 1], [], []>} : vector<8x32xf32>, vector<32x128xf32>, vector<8x128xf32> -> vector<8x128xf32>
    %279 = arith.addf %277, %278 : vector<8x128xf32>
    %280 = vector.extract_strided_slice %279 {offsets = [0, 0], sizes = [8, 32], strides = [1, 1]} : vector<8x128xf32> to vector<8x32xf32>
    %281 = arith.negf %280 : vector<8x32xf32>
    %282 = math.exp %281 : vector<8x32xf32>
    %cst_64 = arith.constant 1.000000e+00 : f32
    %283 = vector.broadcast %cst_64 : f32 to vector<8x32xf32>
    %284 = arith.addf %283, %282 : vector<8x32xf32>
    %285 = arith.divf %283, %284 : vector<8x32xf32>
    %286 = vector.extract_strided_slice %279 {offsets = [0, 32], sizes = [8, 32], strides = [1, 1]} : vector<8x128xf32> to vector<8x32xf32>
    %287 = arith.negf %286 : vector<8x32xf32>
    %288 = math.exp %287 : vector<8x32xf32>
    %cst_65 = arith.constant 1.000000e+00 : f32
    %289 = vector.broadcast %cst_65 : f32 to vector<8x32xf32>
    %290 = arith.addf %289, %288 : vector<8x32xf32>
    %291 = arith.divf %289, %290 : vector<8x32xf32>
    %292 = vector.extract_strided_slice %279 {offsets = [0, 64], sizes = [8, 32], strides = [1, 1]} : vector<8x128xf32> to vector<8x32xf32>
    %293 = math.tanh %292 : vector<8x32xf32>
    %294 = vector.extract_strided_slice %279 {offsets = [0, 96], sizes = [8, 32], strides = [1, 1]} : vector<8x128xf32> to vector<8x32xf32>
    %295 = arith.negf %294 : vector<8x32xf32>
    %296 = math.exp %295 : vector<8x32xf32>
    %cst_66 = arith.constant 1.000000e+00 : f32
    %297 = vector.broadcast %cst_66 : f32 to vector<8x32xf32>
    %298 = arith.addf %297, %296 : vector<8x32xf32>
    %299 = arith.divf %297, %298 : vector<8x32xf32>
    %300 = arith.mulf %291, %244 : vector<8x32xf32>
    %301 = arith.mulf %285, %293 : vector<8x32xf32>
    %302 = arith.addf %300, %301 : vector<8x32xf32>
    %303 = math.tanh %302 : vector<8x32xf32>
    %304 = arith.mulf %299, %303 : vector<8x32xf32>
    %c32_67 = arith.constant 32 : index
    %c0_68 = arith.constant 0 : index
    %305 = vector.load %arg10[%c32_67, %c0_68] : memref<64x32xf32, #tpu.memory_space<vmem>>, vector<8x32xf32>
    tpu.vector_store %arg10[%c32_67, %c0_68], %276 {strides = array<i32>} : memref<64x32xf32, #tpu.memory_space<vmem>>, vector<8x32xf32>,
    %c24_69 = arith.constant 24 : index
    %c0_70 = arith.constant 0 : index
    %306 = vector.load %arg11[%c24_69, %c0_70] : memref<64x32xf32, #tpu.memory_space<vmem>>, vector<8x32xf32>
    tpu.vector_store %arg11[%c24_69, %c0_70], %304 {strides = array<i32>} : memref<64x32xf32, #tpu.memory_space<vmem>>, vector<8x32xf32>,
    %307 = vector.extract_strided_slice %5 {offsets = [40, 0], sizes = [8, 128], strides = [1, 1]} : vector<64x128xf32> to vector<8x128xf32>
    %cst_71 = arith.constant dense<0.000000e+00> : vector<8x128xf32>
    %308 = tpu.matmul %276, %11, %cst_71 {dimension_numbers = #tpu.dot_dimension_numbers<[1], [0], [0], [1], [0, 0, 1, 1], [], []>} : vector<8x32xf32>, vector<32x128xf32>, vector<8x128xf32> -> vector<8x128xf32>
    %309 = arith.addf %307, %308 : vector<8x128xf32>
    %310 = vector.extract_strided_slice %309 {offsets = [0, 0], sizes = [8, 32], strides = [1, 1]} : vector<8x128xf32> to vector<8x32xf32>
    %311 = arith.negf %310 : vector<8x32xf32>
    %312 = math.exp %311 : vector<8x32xf32>
    %cst_72 = arith.constant 1.000000e+00 : f32
    %313 = vector.broadcast %cst_72 : f32 to vector<8x32xf32>
    %314 = arith.addf %313, %312 : vector<8x32xf32>
    %315 = arith.divf %313, %314 : vector<8x32xf32>
    %316 = vector.extract_strided_slice %309 {offsets = [0, 32], sizes = [8, 32], strides = [1, 1]} : vector<8x128xf32> to vector<8x32xf32>
    %317 = arith.negf %316 : vector<8x32xf32>
    %318 = math.exp %317 : vector<8x32xf32>
    %cst_73 = arith.constant 1.000000e+00 : f32
    %319 = vector.broadcast %cst_73 : f32 to vector<8x32xf32>
    %320 = arith.addf %319, %318 : vector<8x32xf32>
    %321 = arith.divf %319, %320 : vector<8x32xf32>
    %322 = vector.extract_strided_slice %309 {offsets = [0, 64], sizes = [8, 32], strides = [1, 1]} : vector<8x128xf32> to vector<8x32xf32>
    %323 = math.tanh %322 : vector<8x32xf32>
    %324 = vector.extract_strided_slice %309 {offsets = [0, 96], sizes = [8, 32], strides = [1, 1]} : vector<8x128xf32> to vector<8x32xf32>
    %325 = arith.negf %324 : vector<8x32xf32>
    %326 = math.exp %325 : vector<8x32xf32>
    %cst_74 = arith.constant 1.000000e+00 : f32
    %327 = vector.broadcast %cst_74 : f32 to vector<8x32xf32>
    %328 = arith.addf %327, %326 : vector<8x32xf32>
    %329 = arith.divf %327, %328 : vector<8x32xf32>
    %330 = arith.mulf %321, %274 : vector<8x32xf32>
    %331 = arith.mulf %315, %323 : vector<8x32xf32>
    %332 = arith.addf %330, %331 : vector<8x32xf32>
    %333 = math.tanh %332 : vector<8x32xf32>
    %334 = arith.mulf %329, %333 : vector<8x32xf32>
    %335 = vector.extract_strided_slice %10 {offsets = [16, 0], sizes = [8, 128], strides = [1, 1]} : vector<64x128xf32> to vector<8x128xf32>
    %cst_75 = arith.constant dense<0.000000e+00> : vector<8x128xf32>
    %336 = tpu.matmul %304, %12, %cst_75 {dimension_numbers = #tpu.dot_dimension_numbers<[1], [0], [0], [1], [0, 0, 1, 1], [], []>} : vector<8x32xf32>, vector<32x128xf32>, vector<8x128xf32> -> vector<8x128xf32>
    %337 = arith.addf %335, %336 : vector<8x128xf32>
    %338 = vector.extract_strided_slice %337 {offsets = [0, 0], sizes = [8, 32], strides = [1, 1]} : vector<8x128xf32> to vector<8x32xf32>
    %339 = arith.negf %338 : vector<8x32xf32>
    %340 = math.exp %339 : vector<8x32xf32>
    %cst_76 = arith.constant 1.000000e+00 : f32
    %341 = vector.broadcast %cst_76 : f32 to vector<8x32xf32>
    %342 = arith.addf %341, %340 : vector<8x32xf32>
    %343 = arith.divf %341, %342 : vector<8x32xf32>
    %344 = vector.extract_strided_slice %337 {offsets = [0, 32], sizes = [8, 32], strides = [1, 1]} : vector<8x128xf32> to vector<8x32xf32>
    %345 = arith.negf %344 : vector<8x32xf32>
    %346 = math.exp %345 : vector<8x32xf32>
    %cst_77 = arith.constant 1.000000e+00 : f32
    %347 = vector.broadcast %cst_77 : f32 to vector<8x32xf32>
    %348 = arith.addf %347, %346 : vector<8x32xf32>
    %349 = arith.divf %347, %348 : vector<8x32xf32>
    %350 = vector.extract_strided_slice %337 {offsets = [0, 64], sizes = [8, 32], strides = [1, 1]} : vector<8x128xf32> to vector<8x32xf32>
    %351 = math.tanh %350 : vector<8x32xf32>
    %352 = vector.extract_strided_slice %337 {offsets = [0, 96], sizes = [8, 32], strides = [1, 1]} : vector<8x128xf32> to vector<8x32xf32>
    %353 = arith.negf %352 : vector<8x32xf32>
    %354 = math.exp %353 : vector<8x32xf32>
    %cst_78 = arith.constant 1.000000e+00 : f32
    %355 = vector.broadcast %cst_78 : f32 to vector<8x32xf32>
    %356 = arith.addf %355, %354 : vector<8x32xf32>
    %357 = arith.divf %355, %356 : vector<8x32xf32>
    %358 = arith.mulf %349, %302 : vector<8x32xf32>
    %359 = arith.mulf %343, %351 : vector<8x32xf32>
    %360 = arith.addf %358, %359 : vector<8x32xf32>
    %361 = math.tanh %360 : vector<8x32xf32>
    %362 = arith.mulf %357, %361 : vector<8x32xf32>
    %c40_79 = arith.constant 40 : index
    %c0_80 = arith.constant 0 : index
    %363 = vector.load %arg10[%c40_79, %c0_80] : memref<64x32xf32, #tpu.memory_space<vmem>>, vector<8x32xf32>
    tpu.vector_store %arg10[%c40_79, %c0_80], %334 {strides = array<i32>} : memref<64x32xf32, #tpu.memory_space<vmem>>, vector<8x32xf32>,
    %c16_81 = arith.constant 16 : index
    %c0_82 = arith.constant 0 : index
    %364 = vector.load %arg11[%c16_81, %c0_82] : memref<64x32xf32, #tpu.memory_space<vmem>>, vector<8x32xf32>
    tpu.vector_store %arg11[%c16_81, %c0_82], %362 {strides = array<i32>} : memref<64x32xf32, #tpu.memory_space<vmem>>, vector<8x32xf32>,
    %365 = vector.extract_strided_slice %5 {offsets = [48, 0], sizes = [8, 128], strides = [1, 1]} : vector<64x128xf32> to vector<8x128xf32>
    %cst_83 = arith.constant dense<0.000000e+00> : vector<8x128xf32>
    %366 = tpu.matmul %334, %11, %cst_83 {dimension_numbers = #tpu.dot_dimension_numbers<[1], [0], [0], [1], [0, 0, 1, 1], [], []>} : vector<8x32xf32>, vector<32x128xf32>, vector<8x128xf32> -> vector<8x128xf32>
    %367 = arith.addf %365, %366 : vector<8x128xf32>
    %368 = vector.extract_strided_slice %367 {offsets = [0, 0], sizes = [8, 32], strides = [1, 1]} : vector<8x128xf32> to vector<8x32xf32>
    %369 = arith.negf %368 : vector<8x32xf32>
    %370 = math.exp %369 : vector<8x32xf32>
    %cst_84 = arith.constant 1.000000e+00 : f32
    %371 = vector.broadcast %cst_84 : f32 to vector<8x32xf32>
    %372 = arith.addf %371, %370 : vector<8x32xf32>
    %373 = arith.divf %371, %372 : vector<8x32xf32>
    %374 = vector.extract_strided_slice %367 {offsets = [0, 32], sizes = [8, 32], strides = [1, 1]} : vector<8x128xf32> to vector<8x32xf32>
    %375 = arith.negf %374 : vector<8x32xf32>
    %376 = math.exp %375 : vector<8x32xf32>
    %cst_85 = arith.constant 1.000000e+00 : f32
    %377 = vector.broadcast %cst_85 : f32 to vector<8x32xf32>
    %378 = arith.addf %377, %376 : vector<8x32xf32>
    %379 = arith.divf %377, %378 : vector<8x32xf32>
    %380 = vector.extract_strided_slice %367 {offsets = [0, 64], sizes = [8, 32], strides = [1, 1]} : vector<8x128xf32> to vector<8x32xf32>
    %381 = math.tanh %380 : vector<8x32xf32>
    %382 = vector.extract_strided_slice %367 {offsets = [0, 96], sizes = [8, 32], strides = [1, 1]} : vector<8x128xf32> to vector<8x32xf32>
    %383 = arith.negf %382 : vector<8x32xf32>
    %384 = math.exp %383 : vector<8x32xf32>
    %cst_86 = arith.constant 1.000000e+00 : f32
    %385 = vector.broadcast %cst_86 : f32 to vector<8x32xf32>
    %386 = arith.addf %385, %384 : vector<8x32xf32>
    %387 = arith.divf %385, %386 : vector<8x32xf32>
    %388 = arith.mulf %379, %332 : vector<8x32xf32>
    %389 = arith.mulf %373, %381 : vector<8x32xf32>
    %390 = arith.addf %388, %389 : vector<8x32xf32>
    %391 = math.tanh %390 : vector<8x32xf32>
    %392 = arith.mulf %387, %391 : vector<8x32xf32>
    %393 = vector.extract_strided_slice %10 {offsets = [8, 0], sizes = [8, 128], strides = [1, 1]} : vector<64x128xf32> to vector<8x128xf32>
    %cst_87 = arith.constant dense<0.000000e+00> : vector<8x128xf32>
    %394 = tpu.matmul %362, %12, %cst_87 {dimension_numbers = #tpu.dot_dimension_numbers<[1], [0], [0], [1], [0, 0, 1, 1], [], []>} : vector<8x32xf32>, vector<32x128xf32>, vector<8x128xf32> -> vector<8x128xf32>
    %395 = arith.addf %393, %394 : vector<8x128xf32>
    %396 = vector.extract_strided_slice %395 {offsets = [0, 0], sizes = [8, 32], strides = [1, 1]} : vector<8x128xf32> to vector<8x32xf32>
    %397 = arith.negf %396 : vector<8x32xf32>
    %398 = math.exp %397 : vector<8x32xf32>
    %cst_88 = arith.constant 1.000000e+00 : f32
    %399 = vector.broadcast %cst_88 : f32 to vector<8x32xf32>
    %400 = arith.addf %399, %398 : vector<8x32xf32>
    %401 = arith.divf %399, %400 : vector<8x32xf32>
    %402 = vector.extract_strided_slice %395 {offsets = [0, 32], sizes = [8, 32], strides = [1, 1]} : vector<8x128xf32> to vector<8x32xf32>
    %403 = arith.negf %402 : vector<8x32xf32>
    %404 = math.exp %403 : vector<8x32xf32>
    %cst_89 = arith.constant 1.000000e+00 : f32
    %405 = vector.broadcast %cst_89 : f32 to vector<8x32xf32>
    %406 = arith.addf %405, %404 : vector<8x32xf32>
    %407 = arith.divf %405, %406 : vector<8x32xf32>
    %408 = vector.extract_strided_slice %395 {offsets = [0, 64], sizes = [8, 32], strides = [1, 1]} : vector<8x128xf32> to vector<8x32xf32>
    %409 = math.tanh %408 : vector<8x32xf32>
    %410 = vector.extract_strided_slice %395 {offsets = [0, 96], sizes = [8, 32], strides = [1, 1]} : vector<8x128xf32> to vector<8x32xf32>
    %411 = arith.negf %410 : vector<8x32xf32>
    %412 = math.exp %411 : vector<8x32xf32>
    %cst_90 = arith.constant 1.000000e+00 : f32
    %413 = vector.broadcast %cst_90 : f32 to vector<8x32xf32>
    %414 = arith.addf %413, %412 : vector<8x32xf32>
    %415 = arith.divf %413, %414 : vector<8x32xf32>
    %416 = arith.mulf %407, %360 : vector<8x32xf32>
    %417 = arith.mulf %401, %409 : vector<8x32xf32>
    %418 = arith.addf %416, %417 : vector<8x32xf32>
    %419 = math.tanh %418 : vector<8x32xf32>
    %420 = arith.mulf %415, %419 : vector<8x32xf32>
    %c48_91 = arith.constant 48 : index
    %c0_92 = arith.constant 0 : index
    %421 = vector.load %arg10[%c48_91, %c0_92] : memref<64x32xf32, #tpu.memory_space<vmem>>, vector<8x32xf32>
    tpu.vector_store %arg10[%c48_91, %c0_92], %392 {strides = array<i32>} : memref<64x32xf32, #tpu.memory_space<vmem>>, vector<8x32xf32>,
    %c8_93 = arith.constant 8 : index
    %c0_94 = arith.constant 0 : index
    %422 = vector.load %arg11[%c8_93, %c0_94] : memref<64x32xf32, #tpu.memory_space<vmem>>, vector<8x32xf32>
    tpu.vector_store %arg11[%c8_93, %c0_94], %420 {strides = array<i32>} : memref<64x32xf32, #tpu.memory_space<vmem>>, vector<8x32xf32>,
    %423 = vector.extract_strided_slice %5 {offsets = [56, 0], sizes = [8, 128], strides = [1, 1]} : vector<64x128xf32> to vector<8x128xf32>
    %cst_95 = arith.constant dense<0.000000e+00> : vector<8x128xf32>
    %424 = tpu.matmul %392, %11, %cst_95 {dimension_numbers = #tpu.dot_dimension_numbers<[1], [0], [0], [1], [0, 0, 1, 1], [], []>} : vector<8x32xf32>, vector<32x128xf32>, vector<8x128xf32> -> vector<8x128xf32>
    %425 = arith.addf %423, %424 : vector<8x128xf32>
    %426 = vector.extract_strided_slice %425 {offsets = [0, 0], sizes = [8, 32], strides = [1, 1]} : vector<8x128xf32> to vector<8x32xf32>
    %427 = arith.negf %426 : vector<8x32xf32>
    %428 = math.exp %427 : vector<8x32xf32>
    %cst_96 = arith.constant 1.000000e+00 : f32
    %429 = vector.broadcast %cst_96 : f32 to vector<8x32xf32>
    %430 = arith.addf %429, %428 : vector<8x32xf32>
    %431 = arith.divf %429, %430 : vector<8x32xf32>
    %432 = vector.extract_strided_slice %425 {offsets = [0, 32], sizes = [8, 32], strides = [1, 1]} : vector<8x128xf32> to vector<8x32xf32>
    %433 = arith.negf %432 : vector<8x32xf32>
    %434 = math.exp %433 : vector<8x32xf32>
    %cst_97 = arith.constant 1.000000e+00 : f32
    %435 = vector.broadcast %cst_97 : f32 to vector<8x32xf32>
    %436 = arith.addf %435, %434 : vector<8x32xf32>
    %437 = arith.divf %435, %436 : vector<8x32xf32>
    %438 = vector.extract_strided_slice %425 {offsets = [0, 64], sizes = [8, 32], strides = [1, 1]} : vector<8x128xf32> to vector<8x32xf32>
    %439 = math.tanh %438 : vector<8x32xf32>
    %440 = vector.extract_strided_slice %425 {offsets = [0, 96], sizes = [8, 32], strides = [1, 1]} : vector<8x128xf32> to vector<8x32xf32>
    %441 = arith.negf %440 : vector<8x32xf32>
    %442 = math.exp %441 : vector<8x32xf32>
    %cst_98 = arith.constant 1.000000e+00 : f32
    %443 = vector.broadcast %cst_98 : f32 to vector<8x32xf32>
    %444 = arith.addf %443, %442 : vector<8x32xf32>
    %445 = arith.divf %443, %444 : vector<8x32xf32>
    %446 = arith.mulf %437, %390 : vector<8x32xf32>
    %447 = arith.mulf %431, %439 : vector<8x32xf32>
    %448 = arith.addf %446, %447 : vector<8x32xf32>
    %449 = math.tanh %448 : vector<8x32xf32>
    %450 = arith.mulf %445, %449 : vector<8x32xf32>
    %451 = vector.extract_strided_slice %10 {offsets = [0, 0], sizes = [8, 128], strides = [1, 1]} : vector<64x128xf32> to vector<8x128xf32>
    %cst_99 = arith.constant dense<0.000000e+00> : vector<8x128xf32>
    %452 = tpu.matmul %420, %12, %cst_99 {dimension_numbers = #tpu.dot_dimension_numbers<[1], [0], [0], [1], [0, 0, 1, 1], [], []>} : vector<8x32xf32>, vector<32x128xf32>, vector<8x128xf32> -> vector<8x128xf32>
    %453 = arith.addf %451, %452 : vector<8x128xf32>
    %454 = vector.extract_strided_slice %453 {offsets = [0, 0], sizes = [8, 32], strides = [1, 1]} : vector<8x128xf32> to vector<8x32xf32>
    %455 = arith.negf %454 : vector<8x32xf32>
    %456 = math.exp %455 : vector<8x32xf32>
    %cst_100 = arith.constant 1.000000e+00 : f32
    %457 = vector.broadcast %cst_100 : f32 to vector<8x32xf32>
    %458 = arith.addf %457, %456 : vector<8x32xf32>
    %459 = arith.divf %457, %458 : vector<8x32xf32>
    %460 = vector.extract_strided_slice %453 {offsets = [0, 32], sizes = [8, 32], strides = [1, 1]} : vector<8x128xf32> to vector<8x32xf32>
    %461 = arith.negf %460 : vector<8x32xf32>
    %462 = math.exp %461 : vector<8x32xf32>
    %cst_101 = arith.constant 1.000000e+00 : f32
    %463 = vector.broadcast %cst_101 : f32 to vector<8x32xf32>
    %464 = arith.addf %463, %462 : vector<8x32xf32>
    %465 = arith.divf %463, %464 : vector<8x32xf32>
    %466 = vector.extract_strided_slice %453 {offsets = [0, 64], sizes = [8, 32], strides = [1, 1]} : vector<8x128xf32> to vector<8x32xf32>
    %467 = math.tanh %466 : vector<8x32xf32>
    %468 = vector.extract_strided_slice %453 {offsets = [0, 96], sizes = [8, 32], strides = [1, 1]} : vector<8x128xf32> to vector<8x32xf32>
    %469 = arith.negf %468 : vector<8x32xf32>
    %470 = math.exp %469 : vector<8x32xf32>
    %cst_102 = arith.constant 1.000000e+00 : f32
    %471 = vector.broadcast %cst_102 : f32 to vector<8x32xf32>
    %472 = arith.addf %471, %470 : vector<8x32xf32>
    %473 = arith.divf %471, %472 : vector<8x32xf32>
    %474 = arith.mulf %465, %418 : vector<8x32xf32>
    %475 = arith.mulf %459, %467 : vector<8x32xf32>
    %476 = arith.addf %474, %475 : vector<8x32xf32>
    %477 = math.tanh %476 : vector<8x32xf32>
    %478 = arith.mulf %473, %477 : vector<8x32xf32>
    %c56_103 = arith.constant 56 : index
    %c0_104 = arith.constant 0 : index
    %479 = vector.load %arg10[%c56_103, %c0_104] : memref<64x32xf32, #tpu.memory_space<vmem>>, vector<8x32xf32>
    tpu.vector_store %arg10[%c56_103, %c0_104], %450 {strides = array<i32>} : memref<64x32xf32, #tpu.memory_space<vmem>>, vector<8x32xf32>,
    %c0_105 = arith.constant 0 : index
    %c0_106 = arith.constant 0 : index
    %480 = vector.load %arg11[%c0_105, %c0_106] : memref<64x32xf32, #tpu.memory_space<vmem>>, vector<8x32xf32>
    tpu.vector_store %arg11[%c0_105, %c0_106], %478 {strides = array<i32>} : memref<64x32xf32, #tpu.memory_space<vmem>>, vector<8x32xf32>,
    %c0_107 = arith.constant 0 : index
    %c0_108 = arith.constant 0 : index
    %481 = vector.load %arg10[%c0_107, %c0_108] : memref<64x32xf32, #tpu.memory_space<vmem>>, vector<64x32xf32>
    %c0_109 = arith.constant 0 : index
    %c0_110 = arith.constant 0 : index
    %482 = vector.load %arg11[%c0_109, %c0_110] : memref<64x32xf32, #tpu.memory_space<vmem>>, vector<64x32xf32>
    %483 = tpu.concatenate %481, %482 in 1 : vector<64x32xf32>, vector<64x32xf32> -> vector<64x64xf32>
    %c0_111 = arith.constant 0 : index
    %c0_112 = arith.constant 0 : index
    %484 = vector.load %arg7[%c0_111, %c0_112] : memref<64x32xf32, #tpu.memory_space<vmem>>, vector<64x32xf32>
    %cst_113 = arith.constant dense<0.000000e+00> : vector<64x32xf32>
    %485 = tpu.matmul %483, %484, %cst_113 {dimension_numbers = #tpu.dot_dimension_numbers<[1], [0], [0], [1], [0, 0, 1, 1], [], []>} : vector<64x64xf32>, vector<64x32xf32>, vector<64x32xf32> -> vector<64x32xf32>
    %c0_114 = arith.constant 0 : index
    %c0_115 = arith.constant 0 : index
    %486 = vector.load %arg8[%c0_114, %c0_115] : memref<1x32xf32, #tpu.memory_space<vmem>>, vector<1x32xf32>
    %487 = vector.broadcast %486 : vector<1x32xf32> to vector<64x32xf32>
    %488 = arith.addf %485, %487 : vector<64x32xf32>
    %c0_116 = arith.constant 0 : index
    %c0_117 = arith.constant 0 : index
    %489 = vector.load %arg9[%c0_116, %c0_117] : memref<64x32xf32, #tpu.memory_space<vmem>>, vector<64x32xf32>
    tpu.vector_store %arg9[%c0_116, %c0_117], %488 {strides = array<i32>} : memref<64x32xf32, #tpu.memory_space<vmem>>, vector<64x32xf32>,
    return
  }
}

module attributes {stable_mosaic.version = 11 : i64} {
  func.func @kernel(%arg0: memref<64x32xf32, #tpu.memory_space<vmem>>, %arg1: memref<32x128xf32, #tpu.memory_space<vmem>>, %arg2: memref<32x128xf32, #tpu.memory_space<vmem>>, %arg3: memref<1x128xf32, #tpu.memory_space<vmem>>, %arg4: memref<32x128xf32, #tpu.memory_space<vmem>>, %arg5: memref<32x128xf32, #tpu.memory_space<vmem>>, %arg6: memref<1x128xf32, #tpu.memory_space<vmem>>, %arg7: memref<64x64xf32, #tpu.memory_space<vmem>>, %arg8: memref<64x32xf32, #tpu.memory_space<vmem>>, %arg9: memref<64x32xf32, #tpu.memory_space<vmem>>) attributes {dimension_semantics = [], scalar_prefetch = 0 : i64, scratch_operands = 2 : i64, tpu.core_type = #tpu.core_type<tc>} {
    %c0 = arith.constant 0 : index
    %c0_0 = arith.constant 0 : index
    %0 = vector.load %arg0[%c0, %c0_0] : memref<64x32xf32, #tpu.memory_space<vmem>>, vector<64x32xf32>
    %c0_1 = arith.constant 0 : index
    %c0_2 = arith.constant 0 : index
    %1 = vector.load %arg1[%c0_1, %c0_2] : memref<32x128xf32, #tpu.memory_space<vmem>>, vector<32x128xf32>
    %cst = arith.constant dense<0.000000e+00> : vector<64x128xf32>
    %2 = tpu.matmul %0, %1, %cst {dimension_numbers = #tpu.dot_dimension_numbers<[1], [0], [0], [1], [0, 0, 1, 1], [], []>} : vector<64x32xf32>, vector<32x128xf32>, vector<64x128xf32> -> vector<64x128xf32>
    %c0_3 = arith.constant 0 : index
    %c0_4 = arith.constant 0 : index
    %3 = vector.load %arg3[%c0_3, %c0_4] : memref<1x128xf32, #tpu.memory_space<vmem>>, vector<1x128xf32>
    %4 = vector.broadcast %3 : vector<1x128xf32> to vector<64x128xf32>
    %5 = arith.addf %2, %4 : vector<64x128xf32>
    %c0_5 = arith.constant 0 : index
    %c0_6 = arith.constant 0 : index
    %6 = vector.load %arg4[%c0_5, %c0_6] : memref<32x128xf32, #tpu.memory_space<vmem>>, vector<32x128xf32>
    %cst_7 = arith.constant dense<0.000000e+00> : vector<64x128xf32>
    %7 = tpu.matmul %0, %6, %cst_7 {dimension_numbers = #tpu.dot_dimension_numbers<[1], [0], [0], [1], [0, 0, 1, 1], [], []>} : vector<64x32xf32>, vector<32x128xf32>, vector<64x128xf32> -> vector<64x128xf32>
    %c0_8 = arith.constant 0 : index
    %c0_9 = arith.constant 0 : index
    %8 = vector.load %arg6[%c0_8, %c0_9] : memref<1x128xf32, #tpu.memory_space<vmem>>, vector<1x128xf32>
    %9 = vector.broadcast %8 : vector<1x128xf32> to vector<64x128xf32>
    %10 = arith.addf %7, %9 : vector<64x128xf32>
    %c0_10 = arith.constant 0 : index
    %c0_11 = arith.constant 0 : index
    %11 = vector.load %arg2[%c0_10, %c0_11] : memref<32x128xf32, #tpu.memory_space<vmem>>, vector<32x128xf32>
    %c0_12 = arith.constant 0 : index
    %c0_13 = arith.constant 0 : index
    %12 = vector.load %arg5[%c0_12, %c0_13] : memref<32x128xf32, #tpu.memory_space<vmem>>, vector<32x128xf32>
    %cst_14 = arith.constant 0.000000e+00 : f32
    %13 = vector.broadcast %cst_14 : f32 to vector<8x32xf32>
    %cst_15 = arith.constant 0.000000e+00 : f32
    %14 = vector.broadcast %cst_15 : f32 to vector<8x32xf32>
    %cst_16 = arith.constant 0.000000e+00 : f32
    %15 = vector.broadcast %cst_16 : f32 to vector<8x32xf32>
    %cst_17 = arith.constant 0.000000e+00 : f32
    %16 = vector.broadcast %cst_17 : f32 to vector<8x32xf32>
    %17 = vector.extract_strided_slice %5 {offsets = [0, 0], sizes = [8, 128], strides = [1, 1]} : vector<64x128xf32> to vector<8x128xf32>
    %cst_18 = arith.constant dense<0.000000e+00> : vector<8x128xf32>
    %18 = tpu.matmul %13, %11, %cst_18 {dimension_numbers = #tpu.dot_dimension_numbers<[1], [0], [0], [1], [0, 0, 1, 1], [], []>} : vector<8x32xf32>, vector<32x128xf32>, vector<8x128xf32> -> vector<8x128xf32>
    %19 = arith.addf %17, %18 : vector<8x128xf32>
    %20 = vector.extract_strided_slice %19 {offsets = [0, 0], sizes = [8, 32], strides = [1, 1]} : vector<8x128xf32> to vector<8x32xf32>
    %21 = arith.negf %20 : vector<8x32xf32>
    %22 = math.exp %21 : vector<8x32xf32>
    %cst_19 = arith.constant 1.000000e+00 : f32
    %23 = vector.broadcast %cst_19 : f32 to vector<8x32xf32>
    %24 = arith.addf %23, %22 : vector<8x32xf32>
    %25 = arith.divf %23, %24 : vector<8x32xf32>
    %26 = vector.extract_strided_slice %19 {offsets = [0, 32], sizes = [8, 32], strides = [1, 1]} : vector<8x128xf32> to vector<8x32xf32>
    %27 = arith.negf %26 : vector<8x32xf32>
    %28 = math.exp %27 : vector<8x32xf32>
    %cst_20 = arith.constant 1.000000e+00 : f32
    %29 = vector.broadcast %cst_20 : f32 to vector<8x32xf32>
    %30 = arith.addf %29, %28 : vector<8x32xf32>
    %31 = arith.divf %29, %30 : vector<8x32xf32>
    %32 = vector.extract_strided_slice %19 {offsets = [0, 64], sizes = [8, 32], strides = [1, 1]} : vector<8x128xf32> to vector<8x32xf32>
    %33 = math.tanh %32 : vector<8x32xf32>
    %34 = vector.extract_strided_slice %19 {offsets = [0, 96], sizes = [8, 32], strides = [1, 1]} : vector<8x128xf32> to vector<8x32xf32>
    %35 = arith.negf %34 : vector<8x32xf32>
    %36 = math.exp %35 : vector<8x32xf32>
    %cst_21 = arith.constant 1.000000e+00 : f32
    %37 = vector.broadcast %cst_21 : f32 to vector<8x32xf32>
    %38 = arith.addf %37, %36 : vector<8x32xf32>
    %39 = arith.divf %37, %38 : vector<8x32xf32>
    %40 = arith.mulf %31, %14 : vector<8x32xf32>
    %41 = arith.mulf %25, %33 : vector<8x32xf32>
    %42 = arith.addf %40, %41 : vector<8x32xf32>
    %43 = math.tanh %42 : vector<8x32xf32>
    %44 = arith.mulf %39, %43 : vector<8x32xf32>
    %45 = vector.extract_strided_slice %10 {offsets = [56, 0], sizes = [8, 128], strides = [1, 1]} : vector<64x128xf32> to vector<8x128xf32>
    %cst_22 = arith.constant dense<0.000000e+00> : vector<8x128xf32>
    %46 = tpu.matmul %15, %12, %cst_22 {dimension_numbers = #tpu.dot_dimension_numbers<[1], [0], [0], [1], [0, 0, 1, 1], [], []>} : vector<8x32xf32>, vector<32x128xf32>, vector<8x128xf32> -> vector<8x128xf32>
    %47 = arith.addf %45, %46 : vector<8x128xf32>
    %48 = vector.extract_strided_slice %47 {offsets = [0, 0], sizes = [8, 32], strides = [1, 1]} : vector<8x128xf32> to vector<8x32xf32>
    %49 = arith.negf %48 : vector<8x32xf32>
    %50 = math.exp %49 : vector<8x32xf32>
    %cst_23 = arith.constant 1.000000e+00 : f32
    %51 = vector.broadcast %cst_23 : f32 to vector<8x32xf32>
    %52 = arith.addf %51, %50 : vector<8x32xf32>
    %53 = arith.divf %51, %52 : vector<8x32xf32>
    %54 = vector.extract_strided_slice %47 {offsets = [0, 32], sizes = [8, 32], strides = [1, 1]} : vector<8x128xf32> to vector<8x32xf32>
    %55 = arith.negf %54 : vector<8x32xf32>
    %56 = math.exp %55 : vector<8x32xf32>
    %cst_24 = arith.constant 1.000000e+00 : f32
    %57 = vector.broadcast %cst_24 : f32 to vector<8x32xf32>
    %58 = arith.addf %57, %56 : vector<8x32xf32>
    %59 = arith.divf %57, %58 : vector<8x32xf32>
    %60 = vector.extract_strided_slice %47 {offsets = [0, 64], sizes = [8, 32], strides = [1, 1]} : vector<8x128xf32> to vector<8x32xf32>
    %61 = math.tanh %60 : vector<8x32xf32>
    %62 = vector.extract_strided_slice %47 {offsets = [0, 96], sizes = [8, 32], strides = [1, 1]} : vector<8x128xf32> to vector<8x32xf32>
    %63 = arith.negf %62 : vector<8x32xf32>
    %64 = math.exp %63 : vector<8x32xf32>
    %cst_25 = arith.constant 1.000000e+00 : f32
    %65 = vector.broadcast %cst_25 : f32 to vector<8x32xf32>
    %66 = arith.addf %65, %64 : vector<8x32xf32>
    %67 = arith.divf %65, %66 : vector<8x32xf32>
    %68 = arith.mulf %59, %16 : vector<8x32xf32>
    %69 = arith.mulf %53, %61 : vector<8x32xf32>
    %70 = arith.addf %68, %69 : vector<8x32xf32>
    %71 = math.tanh %70 : vector<8x32xf32>
    %72 = arith.mulf %67, %71 : vector<8x32xf32>
    %c0_26 = arith.constant 0 : index
    %c0_27 = arith.constant 0 : index
    %73 = vector.load %arg8[%c0_26, %c0_27] : memref<64x32xf32, #tpu.memory_space<vmem>>, vector<8x32xf32>
    tpu.vector_store %arg8[%c0_26, %c0_27], %44 {strides = array<i32>} : memref<64x32xf32, #tpu.memory_space<vmem>>, vector<8x32xf32>,
    %c56 = arith.constant 56 : index
    %c0_28 = arith.constant 0 : index
    %74 = vector.load %arg9[%c56, %c0_28] : memref<64x32xf32, #tpu.memory_space<vmem>>, vector<8x32xf32>
    tpu.vector_store %arg9[%c56, %c0_28], %72 {strides = array<i32>} : memref<64x32xf32, #tpu.memory_space<vmem>>, vector<8x32xf32>,
    %75 = vector.extract_strided_slice %5 {offsets = [8, 0], sizes = [8, 128], strides = [1, 1]} : vector<64x128xf32> to vector<8x128xf32>
    %cst_29 = arith.constant dense<0.000000e+00> : vector<8x128xf32>
    %76 = tpu.matmul %44, %11, %cst_29 {dimension_numbers = #tpu.dot_dimension_numbers<[1], [0], [0], [1], [0, 0, 1, 1], [], []>} : vector<8x32xf32>, vector<32x128xf32>, vector<8x128xf32> -> vector<8x128xf32>
    %77 = arith.addf %75, %76 : vector<8x128xf32>
    %78 = vector.extract_strided_slice %77 {offsets = [0, 0], sizes = [8, 32], strides = [1, 1]} : vector<8x128xf32> to vector<8x32xf32>
    %79 = arith.negf %78 : vector<8x32xf32>
    %80 = math.exp %79 : vector<8x32xf32>
    %cst_30 = arith.constant 1.000000e+00 : f32
    %81 = vector.broadcast %cst_30 : f32 to vector<8x32xf32>
    %82 = arith.addf %81, %80 : vector<8x32xf32>
    %83 = arith.divf %81, %82 : vector<8x32xf32>
    %84 = vector.extract_strided_slice %77 {offsets = [0, 32], sizes = [8, 32], strides = [1, 1]} : vector<8x128xf32> to vector<8x32xf32>
    %85 = arith.negf %84 : vector<8x32xf32>
    %86 = math.exp %85 : vector<8x32xf32>
    %cst_31 = arith.constant 1.000000e+00 : f32
    %87 = vector.broadcast %cst_31 : f32 to vector<8x32xf32>
    %88 = arith.addf %87, %86 : vector<8x32xf32>
    %89 = arith.divf %87, %88 : vector<8x32xf32>
    %90 = vector.extract_strided_slice %77 {offsets = [0, 64], sizes = [8, 32], strides = [1, 1]} : vector<8x128xf32> to vector<8x32xf32>
    %91 = math.tanh %90 : vector<8x32xf32>
    %92 = vector.extract_strided_slice %77 {offsets = [0, 96], sizes = [8, 32], strides = [1, 1]} : vector<8x128xf32> to vector<8x32xf32>
    %93 = arith.negf %92 : vector<8x32xf32>
    %94 = math.exp %93 : vector<8x32xf32>
    %cst_32 = arith.constant 1.000000e+00 : f32
    %95 = vector.broadcast %cst_32 : f32 to vector<8x32xf32>
    %96 = arith.addf %95, %94 : vector<8x32xf32>
    %97 = arith.divf %95, %96 : vector<8x32xf32>
    %98 = arith.mulf %89, %42 : vector<8x32xf32>
    %99 = arith.mulf %83, %91 : vector<8x32xf32>
    %100 = arith.addf %98, %99 : vector<8x32xf32>
    %101 = math.tanh %100 : vector<8x32xf32>
    %102 = arith.mulf %97, %101 : vector<8x32xf32>
    %103 = vector.extract_strided_slice %10 {offsets = [48, 0], sizes = [8, 128], strides = [1, 1]} : vector<64x128xf32> to vector<8x128xf32>
    %cst_33 = arith.constant dense<0.000000e+00> : vector<8x128xf32>
    %104 = tpu.matmul %72, %12, %cst_33 {dimension_numbers = #tpu.dot_dimension_numbers<[1], [0], [0], [1], [0, 0, 1, 1], [], []>} : vector<8x32xf32>, vector<32x128xf32>, vector<8x128xf32> -> vector<8x128xf32>
    %105 = arith.addf %103, %104 : vector<8x128xf32>
    %106 = vector.extract_strided_slice %105 {offsets = [0, 0], sizes = [8, 32], strides = [1, 1]} : vector<8x128xf32> to vector<8x32xf32>
    %107 = arith.negf %106 : vector<8x32xf32>
    %108 = math.exp %107 : vector<8x32xf32>
    %cst_34 = arith.constant 1.000000e+00 : f32
    %109 = vector.broadcast %cst_34 : f32 to vector<8x32xf32>
    %110 = arith.addf %109, %108 : vector<8x32xf32>
    %111 = arith.divf %109, %110 : vector<8x32xf32>
    %112 = vector.extract_strided_slice %105 {offsets = [0, 32], sizes = [8, 32], strides = [1, 1]} : vector<8x128xf32> to vector<8x32xf32>
    %113 = arith.negf %112 : vector<8x32xf32>
    %114 = math.exp %113 : vector<8x32xf32>
    %cst_35 = arith.constant 1.000000e+00 : f32
    %115 = vector.broadcast %cst_35 : f32 to vector<8x32xf32>
    %116 = arith.addf %115, %114 : vector<8x32xf32>
    %117 = arith.divf %115, %116 : vector<8x32xf32>
    %118 = vector.extract_strided_slice %105 {offsets = [0, 64], sizes = [8, 32], strides = [1, 1]} : vector<8x128xf32> to vector<8x32xf32>
    %119 = math.tanh %118 : vector<8x32xf32>
    %120 = vector.extract_strided_slice %105 {offsets = [0, 96], sizes = [8, 32], strides = [1, 1]} : vector<8x128xf32> to vector<8x32xf32>
    %121 = arith.negf %120 : vector<8x32xf32>
    %122 = math.exp %121 : vector<8x32xf32>
    %cst_36 = arith.constant 1.000000e+00 : f32
    %123 = vector.broadcast %cst_36 : f32 to vector<8x32xf32>
    %124 = arith.addf %123, %122 : vector<8x32xf32>
    %125 = arith.divf %123, %124 : vector<8x32xf32>
    %126 = arith.mulf %117, %70 : vector<8x32xf32>
    %127 = arith.mulf %111, %119 : vector<8x32xf32>
    %128 = arith.addf %126, %127 : vector<8x32xf32>
    %129 = math.tanh %128 : vector<8x32xf32>
    %130 = arith.mulf %125, %129 : vector<8x32xf32>
    %c8 = arith.constant 8 : index
    %c0_37 = arith.constant 0 : index
    %131 = vector.load %arg8[%c8, %c0_37] : memref<64x32xf32, #tpu.memory_space<vmem>>, vector<8x32xf32>
    tpu.vector_store %arg8[%c8, %c0_37], %102 {strides = array<i32>} : memref<64x32xf32, #tpu.memory_space<vmem>>, vector<8x32xf32>,
    %c48 = arith.constant 48 : index
    %c0_38 = arith.constant 0 : index
    %132 = vector.load %arg9[%c48, %c0_38] : memref<64x32xf32, #tpu.memory_space<vmem>>, vector<8x32xf32>
    tpu.vector_store %arg9[%c48, %c0_38], %130 {strides = array<i32>} : memref<64x32xf32, #tpu.memory_space<vmem>>, vector<8x32xf32>,
    %133 = vector.extract_strided_slice %5 {offsets = [16, 0], sizes = [8, 128], strides = [1, 1]} : vector<64x128xf32> to vector<8x128xf32>
    %cst_39 = arith.constant dense<0.000000e+00> : vector<8x128xf32>
    %134 = tpu.matmul %102, %11, %cst_39 {dimension_numbers = #tpu.dot_dimension_numbers<[1], [0], [0], [1], [0, 0, 1, 1], [], []>} : vector<8x32xf32>, vector<32x128xf32>, vector<8x128xf32> -> vector<8x128xf32>
    %135 = arith.addf %133, %134 : vector<8x128xf32>
    %136 = vector.extract_strided_slice %135 {offsets = [0, 0], sizes = [8, 32], strides = [1, 1]} : vector<8x128xf32> to vector<8x32xf32>
    %137 = arith.negf %136 : vector<8x32xf32>
    %138 = math.exp %137 : vector<8x32xf32>
    %cst_40 = arith.constant 1.000000e+00 : f32
    %139 = vector.broadcast %cst_40 : f32 to vector<8x32xf32>
    %140 = arith.addf %139, %138 : vector<8x32xf32>
    %141 = arith.divf %139, %140 : vector<8x32xf32>
    %142 = vector.extract_strided_slice %135 {offsets = [0, 32], sizes = [8, 32], strides = [1, 1]} : vector<8x128xf32> to vector<8x32xf32>
    %143 = arith.negf %142 : vector<8x32xf32>
    %144 = math.exp %143 : vector<8x32xf32>
    %cst_41 = arith.constant 1.000000e+00 : f32
    %145 = vector.broadcast %cst_41 : f32 to vector<8x32xf32>
    %146 = arith.addf %145, %144 : vector<8x32xf32>
    %147 = arith.divf %145, %146 : vector<8x32xf32>
    %148 = vector.extract_strided_slice %135 {offsets = [0, 64], sizes = [8, 32], strides = [1, 1]} : vector<8x128xf32> to vector<8x32xf32>
    %149 = math.tanh %148 : vector<8x32xf32>
    %150 = vector.extract_strided_slice %135 {offsets = [0, 96], sizes = [8, 32], strides = [1, 1]} : vector<8x128xf32> to vector<8x32xf32>
    %151 = arith.negf %150 : vector<8x32xf32>
    %152 = math.exp %151 : vector<8x32xf32>
    %cst_42 = arith.constant 1.000000e+00 : f32
    %153 = vector.broadcast %cst_42 : f32 to vector<8x32xf32>
    %154 = arith.addf %153, %152 : vector<8x32xf32>
    %155 = arith.divf %153, %154 : vector<8x32xf32>
    %156 = arith.mulf %147, %100 : vector<8x32xf32>
    %157 = arith.mulf %141, %149 : vector<8x32xf32>
    %158 = arith.addf %156, %157 : vector<8x32xf32>
    %159 = math.tanh %158 : vector<8x32xf32>
    %160 = arith.mulf %155, %159 : vector<8x32xf32>
    %161 = vector.extract_strided_slice %10 {offsets = [40, 0], sizes = [8, 128], strides = [1, 1]} : vector<64x128xf32> to vector<8x128xf32>
    %cst_43 = arith.constant dense<0.000000e+00> : vector<8x128xf32>
    %162 = tpu.matmul %130, %12, %cst_43 {dimension_numbers = #tpu.dot_dimension_numbers<[1], [0], [0], [1], [0, 0, 1, 1], [], []>} : vector<8x32xf32>, vector<32x128xf32>, vector<8x128xf32> -> vector<8x128xf32>
    %163 = arith.addf %161, %162 : vector<8x128xf32>
    %164 = vector.extract_strided_slice %163 {offsets = [0, 0], sizes = [8, 32], strides = [1, 1]} : vector<8x128xf32> to vector<8x32xf32>
    %165 = arith.negf %164 : vector<8x32xf32>
    %166 = math.exp %165 : vector<8x32xf32>
    %cst_44 = arith.constant 1.000000e+00 : f32
    %167 = vector.broadcast %cst_44 : f32 to vector<8x32xf32>
    %168 = arith.addf %167, %166 : vector<8x32xf32>
    %169 = arith.divf %167, %168 : vector<8x32xf32>
    %170 = vector.extract_strided_slice %163 {offsets = [0, 32], sizes = [8, 32], strides = [1, 1]} : vector<8x128xf32> to vector<8x32xf32>
    %171 = arith.negf %170 : vector<8x32xf32>
    %172 = math.exp %171 : vector<8x32xf32>
    %cst_45 = arith.constant 1.000000e+00 : f32
    %173 = vector.broadcast %cst_45 : f32 to vector<8x32xf32>
    %174 = arith.addf %173, %172 : vector<8x32xf32>
    %175 = arith.divf %173, %174 : vector<8x32xf32>
    %176 = vector.extract_strided_slice %163 {offsets = [0, 64], sizes = [8, 32], strides = [1, 1]} : vector<8x128xf32> to vector<8x32xf32>
    %177 = math.tanh %176 : vector<8x32xf32>
    %178 = vector.extract_strided_slice %163 {offsets = [0, 96], sizes = [8, 32], strides = [1, 1]} : vector<8x128xf32> to vector<8x32xf32>
    %179 = arith.negf %178 : vector<8x32xf32>
    %180 = math.exp %179 : vector<8x32xf32>
    %cst_46 = arith.constant 1.000000e+00 : f32
    %181 = vector.broadcast %cst_46 : f32 to vector<8x32xf32>
    %182 = arith.addf %181, %180 : vector<8x32xf32>
    %183 = arith.divf %181, %182 : vector<8x32xf32>
    %184 = arith.mulf %175, %128 : vector<8x32xf32>
    %185 = arith.mulf %169, %177 : vector<8x32xf32>
    %186 = arith.addf %184, %185 : vector<8x32xf32>
    %187 = math.tanh %186 : vector<8x32xf32>
    %188 = arith.mulf %183, %187 : vector<8x32xf32>
    %c16 = arith.constant 16 : index
    %c0_47 = arith.constant 0 : index
    %189 = vector.load %arg8[%c16, %c0_47] : memref<64x32xf32, #tpu.memory_space<vmem>>, vector<8x32xf32>
    tpu.vector_store %arg8[%c16, %c0_47], %160 {strides = array<i32>} : memref<64x32xf32, #tpu.memory_space<vmem>>, vector<8x32xf32>,
    %c40 = arith.constant 40 : index
    %c0_48 = arith.constant 0 : index
    %190 = vector.load %arg9[%c40, %c0_48] : memref<64x32xf32, #tpu.memory_space<vmem>>, vector<8x32xf32>
    tpu.vector_store %arg9[%c40, %c0_48], %188 {strides = array<i32>} : memref<64x32xf32, #tpu.memory_space<vmem>>, vector<8x32xf32>,
    %191 = vector.extract_strided_slice %5 {offsets = [24, 0], sizes = [8, 128], strides = [1, 1]} : vector<64x128xf32> to vector<8x128xf32>
    %cst_49 = arith.constant dense<0.000000e+00> : vector<8x128xf32>
    %192 = tpu.matmul %160, %11, %cst_49 {dimension_numbers = #tpu.dot_dimension_numbers<[1], [0], [0], [1], [0, 0, 1, 1], [], []>} : vector<8x32xf32>, vector<32x128xf32>, vector<8x128xf32> -> vector<8x128xf32>
    %193 = arith.addf %191, %192 : vector<8x128xf32>
    %194 = vector.extract_strided_slice %193 {offsets = [0, 0], sizes = [8, 32], strides = [1, 1]} : vector<8x128xf32> to vector<8x32xf32>
    %195 = arith.negf %194 : vector<8x32xf32>
    %196 = math.exp %195 : vector<8x32xf32>
    %cst_50 = arith.constant 1.000000e+00 : f32
    %197 = vector.broadcast %cst_50 : f32 to vector<8x32xf32>
    %198 = arith.addf %197, %196 : vector<8x32xf32>
    %199 = arith.divf %197, %198 : vector<8x32xf32>
    %200 = vector.extract_strided_slice %193 {offsets = [0, 32], sizes = [8, 32], strides = [1, 1]} : vector<8x128xf32> to vector<8x32xf32>
    %201 = arith.negf %200 : vector<8x32xf32>
    %202 = math.exp %201 : vector<8x32xf32>
    %cst_51 = arith.constant 1.000000e+00 : f32
    %203 = vector.broadcast %cst_51 : f32 to vector<8x32xf32>
    %204 = arith.addf %203, %202 : vector<8x32xf32>
    %205 = arith.divf %203, %204 : vector<8x32xf32>
    %206 = vector.extract_strided_slice %193 {offsets = [0, 64], sizes = [8, 32], strides = [1, 1]} : vector<8x128xf32> to vector<8x32xf32>
    %207 = math.tanh %206 : vector<8x32xf32>
    %208 = vector.extract_strided_slice %193 {offsets = [0, 96], sizes = [8, 32], strides = [1, 1]} : vector<8x128xf32> to vector<8x32xf32>
    %209 = arith.negf %208 : vector<8x32xf32>
    %210 = math.exp %209 : vector<8x32xf32>
    %cst_52 = arith.constant 1.000000e+00 : f32
    %211 = vector.broadcast %cst_52 : f32 to vector<8x32xf32>
    %212 = arith.addf %211, %210 : vector<8x32xf32>
    %213 = arith.divf %211, %212 : vector<8x32xf32>
    %214 = arith.mulf %205, %158 : vector<8x32xf32>
    %215 = arith.mulf %199, %207 : vector<8x32xf32>
    %216 = arith.addf %214, %215 : vector<8x32xf32>
    %217 = math.tanh %216 : vector<8x32xf32>
    %218 = arith.mulf %213, %217 : vector<8x32xf32>
    %219 = vector.extract_strided_slice %10 {offsets = [32, 0], sizes = [8, 128], strides = [1, 1]} : vector<64x128xf32> to vector<8x128xf32>
    %cst_53 = arith.constant dense<0.000000e+00> : vector<8x128xf32>
    %220 = tpu.matmul %188, %12, %cst_53 {dimension_numbers = #tpu.dot_dimension_numbers<[1], [0], [0], [1], [0, 0, 1, 1], [], []>} : vector<8x32xf32>, vector<32x128xf32>, vector<8x128xf32> -> vector<8x128xf32>
    %221 = arith.addf %219, %220 : vector<8x128xf32>
    %222 = vector.extract_strided_slice %221 {offsets = [0, 0], sizes = [8, 32], strides = [1, 1]} : vector<8x128xf32> to vector<8x32xf32>
    %223 = arith.negf %222 : vector<8x32xf32>
    %224 = math.exp %223 : vector<8x32xf32>
    %cst_54 = arith.constant 1.000000e+00 : f32
    %225 = vector.broadcast %cst_54 : f32 to vector<8x32xf32>
    %226 = arith.addf %225, %224 : vector<8x32xf32>
    %227 = arith.divf %225, %226 : vector<8x32xf32>
    %228 = vector.extract_strided_slice %221 {offsets = [0, 32], sizes = [8, 32], strides = [1, 1]} : vector<8x128xf32> to vector<8x32xf32>
    %229 = arith.negf %228 : vector<8x32xf32>
    %230 = math.exp %229 : vector<8x32xf32>
    %cst_55 = arith.constant 1.000000e+00 : f32
    %231 = vector.broadcast %cst_55 : f32 to vector<8x32xf32>
    %232 = arith.addf %231, %230 : vector<8x32xf32>
    %233 = arith.divf %231, %232 : vector<8x32xf32>
    %234 = vector.extract_strided_slice %221 {offsets = [0, 64], sizes = [8, 32], strides = [1, 1]} : vector<8x128xf32> to vector<8x32xf32>
    %235 = math.tanh %234 : vector<8x32xf32>
    %236 = vector.extract_strided_slice %221 {offsets = [0, 96], sizes = [8, 32], strides = [1, 1]} : vector<8x128xf32> to vector<8x32xf32>
    %237 = arith.negf %236 : vector<8x32xf32>
    %238 = math.exp %237 : vector<8x32xf32>
    %cst_56 = arith.constant 1.000000e+00 : f32
    %239 = vector.broadcast %cst_56 : f32 to vector<8x32xf32>
    %240 = arith.addf %239, %238 : vector<8x32xf32>
    %241 = arith.divf %239, %240 : vector<8x32xf32>
    %242 = arith.mulf %233, %186 : vector<8x32xf32>
    %243 = arith.mulf %227, %235 : vector<8x32xf32>
    %244 = arith.addf %242, %243 : vector<8x32xf32>
    %245 = math.tanh %244 : vector<8x32xf32>
    %246 = arith.mulf %241, %245 : vector<8x32xf32>
    %c24 = arith.constant 24 : index
    %c0_57 = arith.constant 0 : index
    %247 = vector.load %arg8[%c24, %c0_57] : memref<64x32xf32, #tpu.memory_space<vmem>>, vector<8x32xf32>
    tpu.vector_store %arg8[%c24, %c0_57], %218 {strides = array<i32>} : memref<64x32xf32, #tpu.memory_space<vmem>>, vector<8x32xf32>,
    %c32 = arith.constant 32 : index
    %c0_58 = arith.constant 0 : index
    %248 = vector.load %arg9[%c32, %c0_58] : memref<64x32xf32, #tpu.memory_space<vmem>>, vector<8x32xf32>
    tpu.vector_store %arg9[%c32, %c0_58], %246 {strides = array<i32>} : memref<64x32xf32, #tpu.memory_space<vmem>>, vector<8x32xf32>,
    %249 = vector.extract_strided_slice %5 {offsets = [32, 0], sizes = [8, 128], strides = [1, 1]} : vector<64x128xf32> to vector<8x128xf32>
    %cst_59 = arith.constant dense<0.000000e+00> : vector<8x128xf32>
    %250 = tpu.matmul %218, %11, %cst_59 {dimension_numbers = #tpu.dot_dimension_numbers<[1], [0], [0], [1], [0, 0, 1, 1], [], []>} : vector<8x32xf32>, vector<32x128xf32>, vector<8x128xf32> -> vector<8x128xf32>
    %251 = arith.addf %249, %250 : vector<8x128xf32>
    %252 = vector.extract_strided_slice %251 {offsets = [0, 0], sizes = [8, 32], strides = [1, 1]} : vector<8x128xf32> to vector<8x32xf32>
    %253 = arith.negf %252 : vector<8x32xf32>
    %254 = math.exp %253 : vector<8x32xf32>
    %cst_60 = arith.constant 1.000000e+00 : f32
    %255 = vector.broadcast %cst_60 : f32 to vector<8x32xf32>
    %256 = arith.addf %255, %254 : vector<8x32xf32>
    %257 = arith.divf %255, %256 : vector<8x32xf32>
    %258 = vector.extract_strided_slice %251 {offsets = [0, 32], sizes = [8, 32], strides = [1, 1]} : vector<8x128xf32> to vector<8x32xf32>
    %259 = arith.negf %258 : vector<8x32xf32>
    %260 = math.exp %259 : vector<8x32xf32>
    %cst_61 = arith.constant 1.000000e+00 : f32
    %261 = vector.broadcast %cst_61 : f32 to vector<8x32xf32>
    %262 = arith.addf %261, %260 : vector<8x32xf32>
    %263 = arith.divf %261, %262 : vector<8x32xf32>
    %264 = vector.extract_strided_slice %251 {offsets = [0, 64], sizes = [8, 32], strides = [1, 1]} : vector<8x128xf32> to vector<8x32xf32>
    %265 = math.tanh %264 : vector<8x32xf32>
    %266 = vector.extract_strided_slice %251 {offsets = [0, 96], sizes = [8, 32], strides = [1, 1]} : vector<8x128xf32> to vector<8x32xf32>
    %267 = arith.negf %266 : vector<8x32xf32>
    %268 = math.exp %267 : vector<8x32xf32>
    %cst_62 = arith.constant 1.000000e+00 : f32
    %269 = vector.broadcast %cst_62 : f32 to vector<8x32xf32>
    %270 = arith.addf %269, %268 : vector<8x32xf32>
    %271 = arith.divf %269, %270 : vector<8x32xf32>
    %272 = arith.mulf %263, %216 : vector<8x32xf32>
    %273 = arith.mulf %257, %265 : vector<8x32xf32>
    %274 = arith.addf %272, %273 : vector<8x32xf32>
    %275 = math.tanh %274 : vector<8x32xf32>
    %276 = arith.mulf %271, %275 : vector<8x32xf32>
    %277 = vector.extract_strided_slice %10 {offsets = [24, 0], sizes = [8, 128], strides = [1, 1]} : vector<64x128xf32> to vector<8x128xf32>
    %cst_63 = arith.constant dense<0.000000e+00> : vector<8x128xf32>
    %278 = tpu.matmul %246, %12, %cst_63 {dimension_numbers = #tpu.dot_dimension_numbers<[1], [0], [0], [1], [0, 0, 1, 1], [], []>} : vector<8x32xf32>, vector<32x128xf32>, vector<8x128xf32> -> vector<8x128xf32>
    %279 = arith.addf %277, %278 : vector<8x128xf32>
    %280 = vector.extract_strided_slice %279 {offsets = [0, 0], sizes = [8, 32], strides = [1, 1]} : vector<8x128xf32> to vector<8x32xf32>
    %281 = arith.negf %280 : vector<8x32xf32>
    %282 = math.exp %281 : vector<8x32xf32>
    %cst_64 = arith.constant 1.000000e+00 : f32
    %283 = vector.broadcast %cst_64 : f32 to vector<8x32xf32>
    %284 = arith.addf %283, %282 : vector<8x32xf32>
    %285 = arith.divf %283, %284 : vector<8x32xf32>
    %286 = vector.extract_strided_slice %279 {offsets = [0, 32], sizes = [8, 32], strides = [1, 1]} : vector<8x128xf32> to vector<8x32xf32>
    %287 = arith.negf %286 : vector<8x32xf32>
    %288 = math.exp %287 : vector<8x32xf32>
    %cst_65 = arith.constant 1.000000e+00 : f32
    %289 = vector.broadcast %cst_65 : f32 to vector<8x32xf32>
    %290 = arith.addf %289, %288 : vector<8x32xf32>
    %291 = arith.divf %289, %290 : vector<8x32xf32>
    %292 = vector.extract_strided_slice %279 {offsets = [0, 64], sizes = [8, 32], strides = [1, 1]} : vector<8x128xf32> to vector<8x32xf32>
    %293 = math.tanh %292 : vector<8x32xf32>
    %294 = vector.extract_strided_slice %279 {offsets = [0, 96], sizes = [8, 32], strides = [1, 1]} : vector<8x128xf32> to vector<8x32xf32>
    %295 = arith.negf %294 : vector<8x32xf32>
    %296 = math.exp %295 : vector<8x32xf32>
    %cst_66 = arith.constant 1.000000e+00 : f32
    %297 = vector.broadcast %cst_66 : f32 to vector<8x32xf32>
    %298 = arith.addf %297, %296 : vector<8x32xf32>
    %299 = arith.divf %297, %298 : vector<8x32xf32>
    %300 = arith.mulf %291, %244 : vector<8x32xf32>
    %301 = arith.mulf %285, %293 : vector<8x32xf32>
    %302 = arith.addf %300, %301 : vector<8x32xf32>
    %303 = math.tanh %302 : vector<8x32xf32>
    %304 = arith.mulf %299, %303 : vector<8x32xf32>
    %c32_67 = arith.constant 32 : index
    %c0_68 = arith.constant 0 : index
    %305 = vector.load %arg8[%c32_67, %c0_68] : memref<64x32xf32, #tpu.memory_space<vmem>>, vector<8x32xf32>
    tpu.vector_store %arg8[%c32_67, %c0_68], %276 {strides = array<i32>} : memref<64x32xf32, #tpu.memory_space<vmem>>, vector<8x32xf32>,
    %c24_69 = arith.constant 24 : index
    %c0_70 = arith.constant 0 : index
    %306 = vector.load %arg9[%c24_69, %c0_70] : memref<64x32xf32, #tpu.memory_space<vmem>>, vector<8x32xf32>
    tpu.vector_store %arg9[%c24_69, %c0_70], %304 {strides = array<i32>} : memref<64x32xf32, #tpu.memory_space<vmem>>, vector<8x32xf32>,
    %307 = vector.extract_strided_slice %5 {offsets = [40, 0], sizes = [8, 128], strides = [1, 1]} : vector<64x128xf32> to vector<8x128xf32>
    %cst_71 = arith.constant dense<0.000000e+00> : vector<8x128xf32>
    %308 = tpu.matmul %276, %11, %cst_71 {dimension_numbers = #tpu.dot_dimension_numbers<[1], [0], [0], [1], [0, 0, 1, 1], [], []>} : vector<8x32xf32>, vector<32x128xf32>, vector<8x128xf32> -> vector<8x128xf32>
    %309 = arith.addf %307, %308 : vector<8x128xf32>
    %310 = vector.extract_strided_slice %309 {offsets = [0, 0], sizes = [8, 32], strides = [1, 1]} : vector<8x128xf32> to vector<8x32xf32>
    %311 = arith.negf %310 : vector<8x32xf32>
    %312 = math.exp %311 : vector<8x32xf32>
    %cst_72 = arith.constant 1.000000e+00 : f32
    %313 = vector.broadcast %cst_72 : f32 to vector<8x32xf32>
    %314 = arith.addf %313, %312 : vector<8x32xf32>
    %315 = arith.divf %313, %314 : vector<8x32xf32>
    %316 = vector.extract_strided_slice %309 {offsets = [0, 32], sizes = [8, 32], strides = [1, 1]} : vector<8x128xf32> to vector<8x32xf32>
    %317 = arith.negf %316 : vector<8x32xf32>
    %318 = math.exp %317 : vector<8x32xf32>
    %cst_73 = arith.constant 1.000000e+00 : f32
    %319 = vector.broadcast %cst_73 : f32 to vector<8x32xf32>
    %320 = arith.addf %319, %318 : vector<8x32xf32>
    %321 = arith.divf %319, %320 : vector<8x32xf32>
    %322 = vector.extract_strided_slice %309 {offsets = [0, 64], sizes = [8, 32], strides = [1, 1]} : vector<8x128xf32> to vector<8x32xf32>
    %323 = math.tanh %322 : vector<8x32xf32>
    %324 = vector.extract_strided_slice %309 {offsets = [0, 96], sizes = [8, 32], strides = [1, 1]} : vector<8x128xf32> to vector<8x32xf32>
    %325 = arith.negf %324 : vector<8x32xf32>
    %326 = math.exp %325 : vector<8x32xf32>
    %cst_74 = arith.constant 1.000000e+00 : f32
    %327 = vector.broadcast %cst_74 : f32 to vector<8x32xf32>
    %328 = arith.addf %327, %326 : vector<8x32xf32>
    %329 = arith.divf %327, %328 : vector<8x32xf32>
    %330 = arith.mulf %321, %274 : vector<8x32xf32>
    %331 = arith.mulf %315, %323 : vector<8x32xf32>
    %332 = arith.addf %330, %331 : vector<8x32xf32>
    %333 = math.tanh %332 : vector<8x32xf32>
    %334 = arith.mulf %329, %333 : vector<8x32xf32>
    %335 = vector.extract_strided_slice %10 {offsets = [16, 0], sizes = [8, 128], strides = [1, 1]} : vector<64x128xf32> to vector<8x128xf32>
    %cst_75 = arith.constant dense<0.000000e+00> : vector<8x128xf32>
    %336 = tpu.matmul %304, %12, %cst_75 {dimension_numbers = #tpu.dot_dimension_numbers<[1], [0], [0], [1], [0, 0, 1, 1], [], []>} : vector<8x32xf32>, vector<32x128xf32>, vector<8x128xf32> -> vector<8x128xf32>
    %337 = arith.addf %335, %336 : vector<8x128xf32>
    %338 = vector.extract_strided_slice %337 {offsets = [0, 0], sizes = [8, 32], strides = [1, 1]} : vector<8x128xf32> to vector<8x32xf32>
    %339 = arith.negf %338 : vector<8x32xf32>
    %340 = math.exp %339 : vector<8x32xf32>
    %cst_76 = arith.constant 1.000000e+00 : f32
    %341 = vector.broadcast %cst_76 : f32 to vector<8x32xf32>
    %342 = arith.addf %341, %340 : vector<8x32xf32>
    %343 = arith.divf %341, %342 : vector<8x32xf32>
    %344 = vector.extract_strided_slice %337 {offsets = [0, 32], sizes = [8, 32], strides = [1, 1]} : vector<8x128xf32> to vector<8x32xf32>
    %345 = arith.negf %344 : vector<8x32xf32>
    %346 = math.exp %345 : vector<8x32xf32>
    %cst_77 = arith.constant 1.000000e+00 : f32
    %347 = vector.broadcast %cst_77 : f32 to vector<8x32xf32>
    %348 = arith.addf %347, %346 : vector<8x32xf32>
    %349 = arith.divf %347, %348 : vector<8x32xf32>
    %350 = vector.extract_strided_slice %337 {offsets = [0, 64], sizes = [8, 32], strides = [1, 1]} : vector<8x128xf32> to vector<8x32xf32>
    %351 = math.tanh %350 : vector<8x32xf32>
    %352 = vector.extract_strided_slice %337 {offsets = [0, 96], sizes = [8, 32], strides = [1, 1]} : vector<8x128xf32> to vector<8x32xf32>
    %353 = arith.negf %352 : vector<8x32xf32>
    %354 = math.exp %353 : vector<8x32xf32>
    %cst_78 = arith.constant 1.000000e+00 : f32
    %355 = vector.broadcast %cst_78 : f32 to vector<8x32xf32>
    %356 = arith.addf %355, %354 : vector<8x32xf32>
    %357 = arith.divf %355, %356 : vector<8x32xf32>
    %358 = arith.mulf %349, %302 : vector<8x32xf32>
    %359 = arith.mulf %343, %351 : vector<8x32xf32>
    %360 = arith.addf %358, %359 : vector<8x32xf32>
    %361 = math.tanh %360 : vector<8x32xf32>
    %362 = arith.mulf %357, %361 : vector<8x32xf32>
    %c40_79 = arith.constant 40 : index
    %c0_80 = arith.constant 0 : index
    %363 = vector.load %arg8[%c40_79, %c0_80] : memref<64x32xf32, #tpu.memory_space<vmem>>, vector<8x32xf32>
    tpu.vector_store %arg8[%c40_79, %c0_80], %334 {strides = array<i32>} : memref<64x32xf32, #tpu.memory_space<vmem>>, vector<8x32xf32>,
    %c16_81 = arith.constant 16 : index
    %c0_82 = arith.constant 0 : index
    %364 = vector.load %arg9[%c16_81, %c0_82] : memref<64x32xf32, #tpu.memory_space<vmem>>, vector<8x32xf32>
    tpu.vector_store %arg9[%c16_81, %c0_82], %362 {strides = array<i32>} : memref<64x32xf32, #tpu.memory_space<vmem>>, vector<8x32xf32>,
    %365 = vector.extract_strided_slice %5 {offsets = [48, 0], sizes = [8, 128], strides = [1, 1]} : vector<64x128xf32> to vector<8x128xf32>
    %cst_83 = arith.constant dense<0.000000e+00> : vector<8x128xf32>
    %366 = tpu.matmul %334, %11, %cst_83 {dimension_numbers = #tpu.dot_dimension_numbers<[1], [0], [0], [1], [0, 0, 1, 1], [], []>} : vector<8x32xf32>, vector<32x128xf32>, vector<8x128xf32> -> vector<8x128xf32>
    %367 = arith.addf %365, %366 : vector<8x128xf32>
    %368 = vector.extract_strided_slice %367 {offsets = [0, 0], sizes = [8, 32], strides = [1, 1]} : vector<8x128xf32> to vector<8x32xf32>
    %369 = arith.negf %368 : vector<8x32xf32>
    %370 = math.exp %369 : vector<8x32xf32>
    %cst_84 = arith.constant 1.000000e+00 : f32
    %371 = vector.broadcast %cst_84 : f32 to vector<8x32xf32>
    %372 = arith.addf %371, %370 : vector<8x32xf32>
    %373 = arith.divf %371, %372 : vector<8x32xf32>
    %374 = vector.extract_strided_slice %367 {offsets = [0, 32], sizes = [8, 32], strides = [1, 1]} : vector<8x128xf32> to vector<8x32xf32>
    %375 = arith.negf %374 : vector<8x32xf32>
    %376 = math.exp %375 : vector<8x32xf32>
    %cst_85 = arith.constant 1.000000e+00 : f32
    %377 = vector.broadcast %cst_85 : f32 to vector<8x32xf32>
    %378 = arith.addf %377, %376 : vector<8x32xf32>
    %379 = arith.divf %377, %378 : vector<8x32xf32>
    %380 = vector.extract_strided_slice %367 {offsets = [0, 64], sizes = [8, 32], strides = [1, 1]} : vector<8x128xf32> to vector<8x32xf32>
    %381 = math.tanh %380 : vector<8x32xf32>
    %382 = vector.extract_strided_slice %367 {offsets = [0, 96], sizes = [8, 32], strides = [1, 1]} : vector<8x128xf32> to vector<8x32xf32>
    %383 = arith.negf %382 : vector<8x32xf32>
    %384 = math.exp %383 : vector<8x32xf32>
    %cst_86 = arith.constant 1.000000e+00 : f32
    %385 = vector.broadcast %cst_86 : f32 to vector<8x32xf32>
    %386 = arith.addf %385, %384 : vector<8x32xf32>
    %387 = arith.divf %385, %386 : vector<8x32xf32>
    %388 = arith.mulf %379, %332 : vector<8x32xf32>
    %389 = arith.mulf %373, %381 : vector<8x32xf32>
    %390 = arith.addf %388, %389 : vector<8x32xf32>
    %391 = math.tanh %390 : vector<8x32xf32>
    %392 = arith.mulf %387, %391 : vector<8x32xf32>
    %393 = vector.extract_strided_slice %10 {offsets = [8, 0], sizes = [8, 128], strides = [1, 1]} : vector<64x128xf32> to vector<8x128xf32>
    %cst_87 = arith.constant dense<0.000000e+00> : vector<8x128xf32>
    %394 = tpu.matmul %362, %12, %cst_87 {dimension_numbers = #tpu.dot_dimension_numbers<[1], [0], [0], [1], [0, 0, 1, 1], [], []>} : vector<8x32xf32>, vector<32x128xf32>, vector<8x128xf32> -> vector<8x128xf32>
    %395 = arith.addf %393, %394 : vector<8x128xf32>
    %396 = vector.extract_strided_slice %395 {offsets = [0, 0], sizes = [8, 32], strides = [1, 1]} : vector<8x128xf32> to vector<8x32xf32>
    %397 = arith.negf %396 : vector<8x32xf32>
    %398 = math.exp %397 : vector<8x32xf32>
    %cst_88 = arith.constant 1.000000e+00 : f32
    %399 = vector.broadcast %cst_88 : f32 to vector<8x32xf32>
    %400 = arith.addf %399, %398 : vector<8x32xf32>
    %401 = arith.divf %399, %400 : vector<8x32xf32>
    %402 = vector.extract_strided_slice %395 {offsets = [0, 32], sizes = [8, 32], strides = [1, 1]} : vector<8x128xf32> to vector<8x32xf32>
    %403 = arith.negf %402 : vector<8x32xf32>
    %404 = math.exp %403 : vector<8x32xf32>
    %cst_89 = arith.constant 1.000000e+00 : f32
    %405 = vector.broadcast %cst_89 : f32 to vector<8x32xf32>
    %406 = arith.addf %405, %404 : vector<8x32xf32>
    %407 = arith.divf %405, %406 : vector<8x32xf32>
    %408 = vector.extract_strided_slice %395 {offsets = [0, 64], sizes = [8, 32], strides = [1, 1]} : vector<8x128xf32> to vector<8x32xf32>
    %409 = math.tanh %408 : vector<8x32xf32>
    %410 = vector.extract_strided_slice %395 {offsets = [0, 96], sizes = [8, 32], strides = [1, 1]} : vector<8x128xf32> to vector<8x32xf32>
    %411 = arith.negf %410 : vector<8x32xf32>
    %412 = math.exp %411 : vector<8x32xf32>
    %cst_90 = arith.constant 1.000000e+00 : f32
    %413 = vector.broadcast %cst_90 : f32 to vector<8x32xf32>
    %414 = arith.addf %413, %412 : vector<8x32xf32>
    %415 = arith.divf %413, %414 : vector<8x32xf32>
    %416 = arith.mulf %407, %360 : vector<8x32xf32>
    %417 = arith.mulf %401, %409 : vector<8x32xf32>
    %418 = arith.addf %416, %417 : vector<8x32xf32>
    %419 = math.tanh %418 : vector<8x32xf32>
    %420 = arith.mulf %415, %419 : vector<8x32xf32>
    %c48_91 = arith.constant 48 : index
    %c0_92 = arith.constant 0 : index
    %421 = vector.load %arg8[%c48_91, %c0_92] : memref<64x32xf32, #tpu.memory_space<vmem>>, vector<8x32xf32>
    tpu.vector_store %arg8[%c48_91, %c0_92], %392 {strides = array<i32>} : memref<64x32xf32, #tpu.memory_space<vmem>>, vector<8x32xf32>,
    %c8_93 = arith.constant 8 : index
    %c0_94 = arith.constant 0 : index
    %422 = vector.load %arg9[%c8_93, %c0_94] : memref<64x32xf32, #tpu.memory_space<vmem>>, vector<8x32xf32>
    tpu.vector_store %arg9[%c8_93, %c0_94], %420 {strides = array<i32>} : memref<64x32xf32, #tpu.memory_space<vmem>>, vector<8x32xf32>,
    %423 = vector.extract_strided_slice %5 {offsets = [56, 0], sizes = [8, 128], strides = [1, 1]} : vector<64x128xf32> to vector<8x128xf32>
    %cst_95 = arith.constant dense<0.000000e+00> : vector<8x128xf32>
    %424 = tpu.matmul %392, %11, %cst_95 {dimension_numbers = #tpu.dot_dimension_numbers<[1], [0], [0], [1], [0, 0, 1, 1], [], []>} : vector<8x32xf32>, vector<32x128xf32>, vector<8x128xf32> -> vector<8x128xf32>
    %425 = arith.addf %423, %424 : vector<8x128xf32>
    %426 = vector.extract_strided_slice %425 {offsets = [0, 0], sizes = [8, 32], strides = [1, 1]} : vector<8x128xf32> to vector<8x32xf32>
    %427 = arith.negf %426 : vector<8x32xf32>
    %428 = math.exp %427 : vector<8x32xf32>
    %cst_96 = arith.constant 1.000000e+00 : f32
    %429 = vector.broadcast %cst_96 : f32 to vector<8x32xf32>
    %430 = arith.addf %429, %428 : vector<8x32xf32>
    %431 = arith.divf %429, %430 : vector<8x32xf32>
    %432 = vector.extract_strided_slice %425 {offsets = [0, 32], sizes = [8, 32], strides = [1, 1]} : vector<8x128xf32> to vector<8x32xf32>
    %433 = arith.negf %432 : vector<8x32xf32>
    %434 = math.exp %433 : vector<8x32xf32>
    %cst_97 = arith.constant 1.000000e+00 : f32
    %435 = vector.broadcast %cst_97 : f32 to vector<8x32xf32>
    %436 = arith.addf %435, %434 : vector<8x32xf32>
    %437 = arith.divf %435, %436 : vector<8x32xf32>
    %438 = vector.extract_strided_slice %425 {offsets = [0, 64], sizes = [8, 32], strides = [1, 1]} : vector<8x128xf32> to vector<8x32xf32>
    %439 = math.tanh %438 : vector<8x32xf32>
    %440 = vector.extract_strided_slice %425 {offsets = [0, 96], sizes = [8, 32], strides = [1, 1]} : vector<8x128xf32> to vector<8x32xf32>
    %441 = arith.negf %440 : vector<8x32xf32>
    %442 = math.exp %441 : vector<8x32xf32>
    %cst_98 = arith.constant 1.000000e+00 : f32
    %443 = vector.broadcast %cst_98 : f32 to vector<8x32xf32>
    %444 = arith.addf %443, %442 : vector<8x32xf32>
    %445 = arith.divf %443, %444 : vector<8x32xf32>
    %446 = arith.mulf %437, %390 : vector<8x32xf32>
    %447 = arith.mulf %431, %439 : vector<8x32xf32>
    %448 = arith.addf %446, %447 : vector<8x32xf32>
    %449 = math.tanh %448 : vector<8x32xf32>
    %450 = arith.mulf %445, %449 : vector<8x32xf32>
    %451 = vector.extract_strided_slice %10 {offsets = [0, 0], sizes = [8, 128], strides = [1, 1]} : vector<64x128xf32> to vector<8x128xf32>
    %cst_99 = arith.constant dense<0.000000e+00> : vector<8x128xf32>
    %452 = tpu.matmul %420, %12, %cst_99 {dimension_numbers = #tpu.dot_dimension_numbers<[1], [0], [0], [1], [0, 0, 1, 1], [], []>} : vector<8x32xf32>, vector<32x128xf32>, vector<8x128xf32> -> vector<8x128xf32>
    %453 = arith.addf %451, %452 : vector<8x128xf32>
    %454 = vector.extract_strided_slice %453 {offsets = [0, 0], sizes = [8, 32], strides = [1, 1]} : vector<8x128xf32> to vector<8x32xf32>
    %455 = arith.negf %454 : vector<8x32xf32>
    %456 = math.exp %455 : vector<8x32xf32>
    %cst_100 = arith.constant 1.000000e+00 : f32
    %457 = vector.broadcast %cst_100 : f32 to vector<8x32xf32>
    %458 = arith.addf %457, %456 : vector<8x32xf32>
    %459 = arith.divf %457, %458 : vector<8x32xf32>
    %460 = vector.extract_strided_slice %453 {offsets = [0, 32], sizes = [8, 32], strides = [1, 1]} : vector<8x128xf32> to vector<8x32xf32>
    %461 = arith.negf %460 : vector<8x32xf32>
    %462 = math.exp %461 : vector<8x32xf32>
    %cst_101 = arith.constant 1.000000e+00 : f32
    %463 = vector.broadcast %cst_101 : f32 to vector<8x32xf32>
    %464 = arith.addf %463, %462 : vector<8x32xf32>
    %465 = arith.divf %463, %464 : vector<8x32xf32>
    %466 = vector.extract_strided_slice %453 {offsets = [0, 64], sizes = [8, 32], strides = [1, 1]} : vector<8x128xf32> to vector<8x32xf32>
    %467 = math.tanh %466 : vector<8x32xf32>
    %468 = vector.extract_strided_slice %453 {offsets = [0, 96], sizes = [8, 32], strides = [1, 1]} : vector<8x128xf32> to vector<8x32xf32>
    %469 = arith.negf %468 : vector<8x32xf32>
    %470 = math.exp %469 : vector<8x32xf32>
    %cst_102 = arith.constant 1.000000e+00 : f32
    %471 = vector.broadcast %cst_102 : f32 to vector<8x32xf32>
    %472 = arith.addf %471, %470 : vector<8x32xf32>
    %473 = arith.divf %471, %472 : vector<8x32xf32>
    %474 = arith.mulf %465, %418 : vector<8x32xf32>
    %475 = arith.mulf %459, %467 : vector<8x32xf32>
    %476 = arith.addf %474, %475 : vector<8x32xf32>
    %477 = math.tanh %476 : vector<8x32xf32>
    %478 = arith.mulf %473, %477 : vector<8x32xf32>
    %c56_103 = arith.constant 56 : index
    %c0_104 = arith.constant 0 : index
    %479 = vector.load %arg8[%c56_103, %c0_104] : memref<64x32xf32, #tpu.memory_space<vmem>>, vector<8x32xf32>
    tpu.vector_store %arg8[%c56_103, %c0_104], %450 {strides = array<i32>} : memref<64x32xf32, #tpu.memory_space<vmem>>, vector<8x32xf32>,
    %c0_105 = arith.constant 0 : index
    %c0_106 = arith.constant 0 : index
    %480 = vector.load %arg9[%c0_105, %c0_106] : memref<64x32xf32, #tpu.memory_space<vmem>>, vector<8x32xf32>
    tpu.vector_store %arg9[%c0_105, %c0_106], %478 {strides = array<i32>} : memref<64x32xf32, #tpu.memory_space<vmem>>, vector<8x32xf32>,
    %c0_107 = arith.constant 0 : index
    %c0_108 = arith.constant 0 : index
    %481 = vector.load %arg8[%c0_107, %c0_108] : memref<64x32xf32, #tpu.memory_space<vmem>>, vector<64x32xf32>
    %c0_109 = arith.constant 0 : index
    %c0_110 = arith.constant 0 : index
    %482 = vector.load %arg9[%c0_109, %c0_110] : memref<64x32xf32, #tpu.memory_space<vmem>>, vector<64x32xf32>
    %483 = tpu.concatenate %481, %482 in 1 : vector<64x32xf32>, vector<64x32xf32> -> vector<64x64xf32>
    %c0_111 = arith.constant 0 : index
    %c0_112 = arith.constant 0 : index
    %484 = vector.load %arg7[%c0_111, %c0_112] : memref<64x64xf32, #tpu.memory_space<vmem>>, vector<64x64xf32>
    tpu.vector_store %arg7[%c0_111, %c0_112], %483 {strides = array<i32>} : memref<64x64xf32, #tpu.memory_space<vmem>>, vector<64x64xf32>,
    return
  }
}

</mosaic_0001>

<llo_original>
// kernel: forward.3
$region0: #{forward.3}
  #allocation0 [shape = 'u32[]', space=smem, size = 0x4, offset = 0x4, fixed_abs, tag = 'smem constant byte address 0x4 - core index']
  #allocation1 [shape = 'u32[144,128]{1,0:T(1,128)}', space=vmem, size = 0x12000, scoped, tag = 'internal scratch']
  #allocation2 [shape = 'f32[64,32]{1,0:T(8,128)}', space=vmem, size = 0x8000, scoped, tag = 'scratch operand']
  #allocation3 [shape = 'f32[64,32]{1,0:T(8,128)}', space=vmem, size = 0x8000, scoped, tag = 'scratch operand']
  %s0 = inlined_call_operand.vmem [shape: f32[64,64], index: 0, kind: input, shape index: {}]
  %s1 = inlined_call_operand.vmem [shape: f32[64,128], index: 1, kind: input, shape index: {}]
  %s2 = inlined_call_operand.vmem [shape: f32[32,128], index: 2, kind: input, shape index: {}]
  %s3 = inlined_call_operand.vmem [shape: f32[1,128], index: 3, kind: input, shape index: {}]
  %s4 = inlined_call_operand.vmem [shape: f32[64,128], index: 4, kind: input, shape index: {}]
  %s5 = inlined_call_operand.vmem [shape: f32[32,128], index: 5, kind: input, shape index: {}]
  %s6 = inlined_call_operand.vmem [shape: f32[1,128], index: 6, kind: input, shape index: {}]
  %s7 = inlined_call_operand.vmem [shape: f32[64,32], index: 7, kind: input, shape index: {}]
  %s8 = inlined_call_operand.vmem [shape: f32[1,32], index: 8, kind: input, shape index: {}]
  %s9 = inlined_call_operand.vmem [shape: f32[64,32], index: 9, kind: output, shape index: {}]
  %s10 = sld [smem:[#allocation0]]
  $region46: #{forward.3} parent=0
    _
  %s12 = ssub.s32 1, %s10
  %s13 = scalar_select 0, %s12, %s10
  // Predicated region
  $region2: #{forward.3} parent=0 // pred_check
    _
  $region3: #{forward.3} parent=0 // pred_check_branch
    %15 = sbr.rel (0) target = $region5
  $region4: #{forward.3} parent=0 // pred_region
    _
  $region5: #{forward.3} parent=0 // pred_fallthru
    _
  // Predicated region
  $region6: #{forward.3} parent=0 // pred_check
    _
  $region7: #{forward.3} parent=0 // pred_check_branch
    %17 = sbr.rel (0) target = $region9
  $region8: #{forward.3} parent=0 // pred_region
    _
  $region9: #{forward.3} parent=0 // pred_fallthru
    _
  // Predicated region
  $region10: #{forward.3} parent=0 // pred_check
    _
  $region11: #{forward.3} parent=0 // pred_check_branch
    %19 = sbr.rel (0) target = $region13
  $region12: #{forward.3} parent=0 // pred_region
    _
  $region13: #{forward.3} parent=0 // pred_fallthru
    _
  // Predicated region
  $region14: #{forward.3} parent=0 // pred_check
    _
  $region15: #{forward.3} parent=0 // pred_check_branch
    %21 = sbr.rel (0) target = $region17
  $region16: #{forward.3} parent=0 // pred_region
    _
  $region17: #{forward.3} parent=0 // pred_fallthru
    _
  // Predicated region
  $region18: #{forward.3} parent=0 // pred_check
    _
  $region19: #{forward.3} parent=0 // pred_check_branch
    %23 = sbr.rel (0) target = $region21
  $region20: #{forward.3} parent=0 // pred_region
    _
  $region21: #{forward.3} parent=0 // pred_fallthru
    _
  // Predicated region
  $region22: #{forward.3} parent=0 // pred_check
    _
  $region23: #{forward.3} parent=0 // pred_check_branch
    %25 = sbr.rel (0) target = $region25
  $region24: #{forward.3} parent=0 // pred_region
    _
  $region25: #{forward.3} parent=0 // pred_fallthru
    _
  // Predicated region
  $region26: #{forward.3} parent=0 // pred_check
    _
  $region27: #{forward.3} parent=0 // pred_check_branch
    %27 = sbr.rel (0) target = $region29
  $region28: #{forward.3} parent=0 // pred_region
    _
  $region29: #{forward.3} parent=0 // pred_fallthru
    _
  // Predicated region
  $region30: #{forward.3} parent=0 // pred_check
    _
  $region31: #{forward.3} parent=0 // pred_check_branch
    %29 = sbr.rel (0) target = $region33
  $region32: #{forward.3} parent=0 // pred_region
    _
  $region33: #{forward.3} parent=0 // pred_fallthru
    _
  // Predicated region
  $region34: #{forward.3} parent=0 // pred_check
    _
  $region35: #{forward.3} parent=0 // pred_check_branch
    %31 = sbr.rel (0) target = $region37
  $region36: #{forward.3} parent=0 // pred_region
    _
  $region37: #{forward.3} parent=0 // pred_fallthru
    _
  %v32 = vld [vmem:[%s0] sm:$0xff]
  %v33 = vld [vmem:[%s0 + $0x8] sm:$0xff]
  %v34 = vld [vmem:[%s0 + $0x10] sm:$0xff]
  %v35 = vld [vmem:[%s0 + $0x18] sm:$0xff]
  %v36 = vld [vmem:[%s0 + $0x20] sm:$0xff]
  %v37 = vld [vmem:[%s0 + $0x28] sm:$0xff]
  %v38 = vld [vmem:[%s0 + $0x30] sm:$0xff]
  %v39 = vld [vmem:[%s0 + $0x38] sm:$0xff]
  %v40 = vld [vmem:[%s1] sm:$0xff]
  %v41 = vld [vmem:[%s1 + $0x8] sm:$0xff]
  %v42 = vld [vmem:[%s1 + $0x10] sm:$0xff]
  %v43 = vld [vmem:[%s1 + $0x18] sm:$0xff]
  %v44 = vld [vmem:[%s1 + $0x20] sm:$0xff]
  %v45 = vld [vmem:[%s1 + $0x28] sm:$0xff]
  %v46 = vld [vmem:[%s1 + $0x30] sm:$0xff]
  %v47 = vld [vmem:[%s1 + $0x38] sm:$0xff]
  %v48 = vld [vmem:[%s3] sm:$0x1]
  %v50 = vlaneseq
  %v51 = vshrl.u32 %v50, 7
  %v52 = vsub.s32 0, %v51
  %v53 = vrot.slane %v48, %v52
  %vm55 = vcmask 523264
  %v57 = vsel %vm55, %v32, 0
  %v60 = vsel %vm55, %v33, 0
  %v63 = vsel %vm55, %v34, 0
  %v66 = vsel %vm55, %v35, 0
  %v69 = vsel %vm55, %v36, 0
  %v72 = vsel %vm55, %v37, 0
  %v75 = vsel %vm55, %v38, 0
  %v78 = vsel %vm55, %v39, 0
  %80 = vmatprep.subr.mxu0 0.0
  %81 = vmatpush1.msra.mxu0 0.0
  %82 = vmatprep.subr.mxu0 0.0
  %83 = vmatpush1.msra.mxu0 0.0
  %84 = vmatprep.subr.mxu0 0.0
  %85 = vmatpush1.msra.mxu0 0.0
  %86 = vmatprep.subr.mxu0 0.0
  %87 = vmatpush1.msra.mxu0 0.0
  %88 = vmatprep.subr.mxu0 0.0
  %89 = vmatpush1.msra.mxu0 0.0
  %90 = vmatprep.subr.mxu0 0.0
  %91 = vmatpush1.msra.mxu0 0.0
  %92 = vmatprep.subr.mxu0 0.0
  %93 = vmatpush1.msra.mxu0 0.0
  %94 = vmatprep.subr.mxu0 0.0
  %95 = vmatpush1.msra.mxu0 0.0
  %96 = vmatprep.subr.mxu0 0.0
  %97 = vmatpush1.msra.mxu0 %v47
  %98 = vmatprep.subr.mxu0 0.0
  %99 = vmatpush1.msra.mxu0 %v46
  %100 = vmatprep.subr.mxu0 0.0
  %101 = vmatpush1.msra.mxu0 %v45
  %102 = vmatprep.subr.mxu0 0.0
  %103 = vmatpush1.msra.mxu0 %v44
  %104 = vmatprep.subr.mxu0 0.0
  %105 = vmatpush1.msra.mxu0 %v43
  %106 = vmatprep.subr.mxu0 0.0
  %107 = vmatpush1.msra.mxu0 %v42
  %108 = vmatprep.subr.mxu0 0.0
  %109 = vmatpush1.msra.mxu0 %v41
  %110 = vmatprep.subr.mxu0 0.0
  %111 = vmatpush1.msra.mxu0 %v40
  %112 = vmatprep.subr.mxu0 0.0
  %113 = vmatpush2.msra.mxu0 0.0
  %114 = vmatprep.subr.mxu0 0.0
  %115 = vmatpush2.msra.mxu0 0.0
  %116 = vmatprep.subr.mxu0 0.0
  %117 = vmatpush2.msra.mxu0 0.0
  %118 = vmatprep.subr.mxu0 0.0
  %119 = vmatpush2.msra.mxu0 0.0
  %120 = vmatprep.subr.mxu0 0.0
  %121 = vmatpush2.msra.mxu0 0.0
  %122 = vmatprep.subr.mxu0 0.0
  %123 = vmatpush2.msra.mxu0 0.0
  %124 = vmatprep.subr.mxu0 0.0
  %125 = vmatpush2.msra.mxu0 0.0
  %126 = vmatprep.subr.mxu0 0.0
  %127 = vmatpush2.msra.mxu0 0.0
  %128 = vmatprep.subr.mxu0 0.0
  %129 = vmatpush2.msra.mxu0 0.0
  %130 = vmatprep.subr.mxu0 0.0
  %131 = vmatpush2.msra.mxu0 0.0
  %132 = vmatprep.subr.mxu0 0.0
  %133 = vmatpush2.msra.mxu0 0.0
  %134 = vmatprep.subr.mxu0 0.0
  %135 = vmatpush2.msra.mxu0 0.0
  %136 = vmatprep.subr.mxu0 0.0
  %137 = vmatpush2.msra.mxu0 0.0
  %138 = vmatprep.subr.mxu0 0.0
  %139 = vmatpush2.msra.mxu0 0.0
  %140 = vmatprep.subr.mxu0 0.0
  %141 = vmatpush2.msra.mxu0 0.0
  %142 = vmatprep.subr.mxu0 0.0
  %143 = vmatpush2.msra.mxu0 0.0
  %144 = vmatprep.mubr.f32.mxu0 0.0
  %145 = vmatmul.mubr.f32.gmra.mxu0 %v57
  %v146 = vpop.f32.mrf.mxu0
  %v147 = vadd.f32 %v53, %v146
  %v148 = vpop.f32.mrf.mxu0
  %149 = vmatprep.mubr.f32.mxu0 0.0
  %150 = vmatmul.mubr.f32.gmra.mxu0 %v60
  %v151 = vpop.f32.mrf.mxu0
  %v152 = vadd.f32 %v53, %v151
  %v153 = vpop.f32.mrf.mxu0
  %154 = vmatprep.mubr.f32.mxu0 0.0
  %155 = vmatmul.mubr.f32.gmra.mxu0 %v63
  %v156 = vpop.f32.mrf.mxu0
  %v157 = vadd.f32 %v53, %v156
  %v158 = vpop.f32.mrf.mxu0
  %159 = vmatprep.mubr.f32.mxu0 0.0
  %160 = vmatmul.mubr.f32.gmra.mxu0 %v66
  %v161 = vpop.f32.mrf.mxu0
  %v162 = vadd.f32 %v53, %v161
  %v163 = vpop.f32.mrf.mxu0
  %164 = vmatprep.mubr.f32.mxu0 0.0
  %165 = vmatmul.mubr.f32.gmra.mxu0 %v69
  %v166 = vpop.f32.mrf.mxu0
  %v167 = vadd.f32 %v53, %v166
  %v168 = vpop.f32.mrf.mxu0
  %169 = vmatprep.mubr.f32.mxu0 0.0
  %170 = vmatmul.mubr.f32.gmra.mxu0 %v72
  %v171 = vpop.f32.mrf.mxu0
  %v172 = vadd.f32 %v53, %v171
  %v173 = vpop.f32.mrf.mxu0
  %174 = vmatprep.mubr.f32.mxu0 0.0
  %175 = vmatmul.mubr.f32.gmra.mxu0 %v75
  %v176 = vpop.f32.mrf.mxu0
  %v177 = vadd.f32 %v53, %v176
  %v178 = vpop.f32.mrf.mxu0
  %179 = vmatprep.mubr.f32.mxu0 0.0
  %180 = vmatmul.mubr.f32.gmra.mxu0 %v78
  %v181 = vpop.f32.mrf.mxu0
  %v182 = vadd.f32 %v53, %v181
  %v183 = vpop.f32.mrf.mxu0
  %184 = vdwg.mxu0
  %v185 = vld [vmem:[%s4] sm:$0xff]
  %v186 = vld [vmem:[%s4 + $0x8] sm:$0xff]
  %v187 = vld [vmem:[%s4 + $0x10] sm:$0xff]
  %v188 = vld [vmem:[%s4 + $0x18] sm:$0xff]
  %v189 = vld [vmem:[%s4 + $0x20] sm:$0xff]
  %v190 = vld [vmem:[%s4 + $0x28] sm:$0xff]
  %v191 = vld [vmem:[%s4 + $0x30] sm:$0xff]
  %v192 = vld [vmem:[%s4 + $0x38] sm:$0xff]
  %v193 = vld [vmem:[%s6] sm:$0x1]
  %v195 = vlaneseq
  %v196 = vshrl.u32 %v195, 7
  %v197 = vsub.s32 0, %v196
  %v198 = vrot.slane %v193, %v197
  %200 = vmatprep.subr.mxu0 0.0
  %201 = vmatpush1.msra.mxu0 0.0
  %202 = vmatprep.subr.mxu0 0.0
  %203 = vmatpush1.msra.mxu0 0.0
  %204 = vmatprep.subr.mxu0 0.0
  %205 = vmatpush1.msra.mxu0 0.0
  %206 = vmatprep.subr.mxu0 0.0
  %207 = vmatpush1.msra.mxu0 0.0
  %208 = vmatprep.subr.mxu0 0.0
  %209 = vmatpush1.msra.mxu0 0.0
  %210 = vmatprep.subr.mxu0 0.0
  %211 = vmatpush1.msra.mxu0 0.0
  %212 = vmatprep.subr.mxu0 0.0
  %213 = vmatpush1.msra.mxu0 0.0
  %214 = vmatprep.subr.mxu0 0.0
  %215 = vmatpush1.msra.mxu0 0.0
  %216 = vmatprep.subr.mxu0 0.0
  %217 = vmatpush1.msra.mxu0 %v192
  %218 = vmatprep.subr.mxu0 0.0
  %219 = vmatpush1.msra.mxu0 %v191
  %220 = vmatprep.subr.mxu0 0.0
  %221 = vmatpush1.msra.mxu0 %v190
  %222 = vmatprep.subr.mxu0 0.0
  %223 = vmatpush1.msra.mxu0 %v189
  %224 = vmatprep.subr.mxu0 0.0
  %225 = vmatpush1.msra.mxu0 %v188
  %226 = vmatprep.subr.mxu0 0.0
  %227 = vmatpush1.msra.mxu0 %v187
  %228 = vmatprep.subr.mxu0 0.0
  %229 = vmatpush1.msra.mxu0 %v186
  %230 = vmatprep.subr.mxu0 0.0
  %231 = vmatpush1.msra.mxu0 %v185
  %232 = vmatprep.subr.mxu0 0.0
  %233 = vmatpush2.msra.mxu0 0.0
  %234 = vmatprep.subr.mxu0 0.0
  %235 = vmatpush2.msra.mxu0 0.0
  %236 = vmatprep.subr.mxu0 0.0
  %237 = vmatpush2.msra.mxu0 0.0
  %238 = vmatprep.subr.mxu0 0.0
  %239 = vmatpush2.msra.mxu0 0.0
  %240 = vmatprep.subr.mxu0 0.0
  %241 = vmatpush2.msra.mxu0 0.0
  %242 = vmatprep.subr.mxu0 0.0
  %243 = vmatpush2.msra.mxu0 0.0
  %244 = vmatprep.subr.mxu0 0.0
  %245 = vmatpush2.msra.mxu0 0.0
  %246 = vmatprep.subr.mxu0 0.0
  %247 = vmatpush2.msra.mxu0 0.0
  %248 = vmatprep.subr.mxu0 0.0
  %249 = vmatpush2.msra.mxu0 0.0
  %250 = vmatprep.subr.mxu0 0.0
  %251 = vmatpush2.msra.mxu0 0.0
  %252 = vmatprep.subr.mxu0 0.0
  %253 = vmatpush2.msra.mxu0 0.0
  %254 = vmatprep.subr.mxu0 0.0
  %255 = vmatpush2.msra.mxu0 0.0
  %256 = vmatprep.subr.mxu0 0.0
  %257 = vmatpush2.msra.mxu0 0.0
  %258 = vmatprep.subr.mxu0 0.0
  %259 = vmatpush2.msra.mxu0 0.0
  %260 = vmatprep.subr.mxu0 0.0
  %261 = vmatpush2.msra.mxu0 0.0
  %262 = vmatprep.subr.mxu0 0.0
  %263 = vmatpush2.msra.mxu0 0.0
  %264 = vmatprep.mubr.f32.mxu0 0.0
  %265 = vmatmul.mubr.f32.gmra.mxu0 %v57
  %v266 = vpop.f32.mrf.mxu0
  %v267 = vadd.f32 %v198, %v266
  %v268 = vpop.f32.mrf.mxu0
  %269 = vmatprep.mubr.f32.mxu0 0.0
  %270 = vmatmul.mubr.f32.gmra.mxu0 %v60
  %v271 = vpop.f32.mrf.mxu0
  %v272 = vadd.f32 %v198, %v271
  %v273 = vpop.f32.mrf.mxu0
  %274 = vmatprep.mubr.f32.mxu0 0.0
  %275 = vmatmul.mubr.f32.gmra.mxu0 %v63
  %v276 = vpop.f32.mrf.mxu0
  %v277 = vadd.f32 %v198, %v276
  %v278 = vpop.f32.mrf.mxu0
  %279 = vmatprep.mubr.f32.mxu0 0.0
  %280 = vmatmul.mubr.f32.gmra.mxu0 %v66
  %v281 = vpop.f32.mrf.mxu0
  %v282 = vadd.f32 %v198, %v281
  %v283 = vpop.f32.mrf.mxu0
  %284 = vmatprep.mubr.f32.mxu0 0.0
  %285 = vmatmul.mubr.f32.gmra.mxu0 %v69
  %v286 = vpop.f32.mrf.mxu0
  %v287 = vadd.f32 %v198, %v286
  %v288 = vpop.f32.mrf.mxu0
  %289 = vmatprep.mubr.f32.mxu0 0.0
  %290 = vmatmul.mubr.f32.gmra.mxu0 %v72
  %v291 = vpop.f32.mrf.mxu0
  %v292 = vadd.f32 %v198, %v291
  %v293 = vpop.f32.mrf.mxu0
  %294 = vmatprep.mubr.f32.mxu0 0.0
  %295 = vmatmul.mubr.f32.gmra.mxu0 %v75
  %v296 = vpop.f32.mrf.mxu0
  %v297 = vadd.f32 %v198, %v296
  %v298 = vpop.f32.mrf.mxu0
  %299 = vmatprep.mubr.f32.mxu0 0.0
  %300 = vmatmul.mubr.f32.gmra.mxu0 %v78
  %v301 = vpop.f32.mrf.mxu0
  %v302 = vadd.f32 %v198, %v301
  %v303 = vpop.f32.mrf.mxu0
  %304 = vdwg.mxu0
  %v305 = vld [vmem:[%s2] sm:$0xff]
  %v306 = vld [vmem:[%s2 + $0x8] sm:$0xff]
  %v307 = vld [vmem:[%s2 + $0x10] sm:$0xff]
  %v308 = vld [vmem:[%s2 + $0x18] sm:$0xff]
  %v309 = vld [vmem:[%s5] sm:$0xff]
  %v310 = vld [vmem:[%s5 + $0x8] sm:$0xff]
  %v311 = vld [vmem:[%s5 + $0x10] sm:$0xff]
  %v312 = vld [vmem:[%s5 + $0x18] sm:$0xff]
  %vm313 = vcmask 261120
  %v315 = vsel %vm313, 0.0, 0
  %317 = vmatprep.subr.mxu0 0.0
  %318 = vmatpush1.msra.mxu0 0.0
  %319 = vmatprep.subr.mxu0 0.0
  %320 = vmatpush1.msra.mxu0 0.0
  %321 = vmatprep.subr.mxu0 0.0
  %322 = vmatpush1.msra.mxu0 0.0
  %323 = vmatprep.subr.mxu0 0.0
  %324 = vmatpush1.msra.mxu0 0.0
  %325 = vmatprep.subr.mxu0 0.0
  %326 = vmatpush1.msra.mxu0 0.0
  %327 = vmatprep.subr.mxu0 0.0
  %328 = vmatpush1.msra.mxu0 0.0
  %329 = vmatprep.subr.mxu0 0.0
  %330 = vmatpush1.msra.mxu0 0.0
  %331 = vmatprep.subr.mxu0 0.0
  %332 = vmatpush1.msra.mxu0 0.0
  %333 = vmatprep.subr.mxu0 0.0
  %334 = vmatpush1.msra.mxu0 0.0
  %335 = vmatprep.subr.mxu0 0.0
  %336 = vmatpush1.msra.mxu0 0.0
  %337 = vmatprep.subr.mxu0 0.0
  %338 = vmatpush1.msra.mxu0 0.0
  %339 = vmatprep.subr.mxu0 0.0
  %340 = vmatpush1.msra.mxu0 0.0
  %341 = vmatprep.subr.mxu0 0.0
  %342 = vmatpush1.msra.mxu0 %v308
  %343 = vmatprep.subr.mxu0 0.0
  %344 = vmatpush1.msra.mxu0 %v307
  %345 = vmatprep.subr.mxu0 0.0
  %346 = vmatpush1.msra.mxu0 %v306
  %347 = vmatprep.subr.mxu0 0.0
  %348 = vmatpush1.msra.mxu0 %v305
  %349 = vmatprep.subr.mxu0 0.0
  %350 = vmatpush2.msra.mxu0 0.0
  %351 = vmatprep.subr.mxu0 0.0
  %352 = vmatpush2.msra.mxu0 0.0
  %353 = vmatprep.subr.mxu0 0.0
  %354 = vmatpush2.msra.mxu0 0.0
  %355 = vmatprep.subr.mxu0 0.0
  %356 = vmatpush2.msra.mxu0 0.0
  %357 = vmatprep.subr.mxu0 0.0
  %358 = vmatpush2.msra.mxu0 0.0
  %359 = vmatprep.subr.mxu0 0.0
  %360 = vmatpush2.msra.mxu0 0.0
  %361 = vmatprep.subr.mxu0 0.0
  %362 = vmatpush2.msra.mxu0 0.0
  %363 = vmatprep.subr.mxu0 0.0
  %364 = vmatpush2.msra.mxu0 0.0
  %365 = vmatprep.subr.mxu0 0.0
  %366 = vmatpush2.msra.mxu0 0.0
  %367 = vmatprep.subr.mxu0 0.0
  %368 = vmatpush2.msra.mxu0 0.0
  %369 = vmatprep.subr.mxu0 0.0
  %370 = vmatpush2.msra.mxu0 0.0
  %371 = vmatprep.subr.mxu0 0.0
  %372 = vmatpush2.msra.mxu0 0.0
  %373 = vmatprep.subr.mxu0 0.0
  %374 = vmatpush2.msra.mxu0 0.0
  %375 = vmatprep.subr.mxu0 0.0
  %376 = vmatpush2.msra.mxu0 0.0
  %377 = vmatprep.subr.mxu0 0.0
  %378 = vmatpush2.msra.mxu0 0.0
  %379 = vmatprep.subr.mxu0 0.0
  %380 = vmatpush2.msra.mxu0 0.0
  %381 = vmatprep.mubr.f32.mxu0 0.0
  %382 = vmatmul.mubr.f32.gmra.mxu0 %v315
  %v383 = vpop.f32.mrf.mxu0
  %v384 = vadd.f32 0.0, %v383
  %v385 = vpop.f32.mrf.mxu0
  %386 = vdwg.mxu0
  %v387 = vadd.f32 %v147, %v384
  %v388 = vxor.u32 %v387, 2147483648
  %v389 = vmul.f32 %v388, 1.442695
  %v390 = vpow.pop %v389
  %v391 = vadd.f32 %v390, 1.0
  %v392 = vrcp.pop %v391
  %v393 = vmul.f32 1.0, %v392
  %v394 = vtanh.pop %v387
  %v395 = vmul.f32 %v393, 0.0
  %397 = vrot.lane.b32.xlu0 %v394, 64
  %v398 = vpop.permute.xlu0 %397
  %v400 = vmul.f32 %v393, %v398
  %402 = vrot.lane.b32.xlu0 %v400, 32
  %v403 = vpop.permute.xlu0 %402
  %v405 = vadd.f32 %v395, %v403
  %v406 = vtanh.pop %v405
  %408 = vrot.lane.b32.xlu0 %v406, 64
  %v409 = vpop.permute.xlu0 %408
  %v411 = vmul.f32 %v393, %v409
  %412 = vmatprep.subr.mxu0 0.0
  %413 = vmatpush1.msra.mxu0 0.0
  %414 = vmatprep.subr.mxu0 0.0
  %415 = vmatpush1.msra.mxu0 0.0
  %416 = vmatprep.subr.mxu0 0.0
  %417 = vmatpush1.msra.mxu0 0.0
  %418 = vmatprep.subr.mxu0 0.0
  %419 = vmatpush1.msra.mxu0 0.0
  %420 = vmatprep.subr.mxu0 0.0
  %421 = vmatpush1.msra.mxu0 0.0
  %422 = vmatprep.subr.mxu0 0.0
  %423 = vmatpush1.msra.mxu0 0.0
  %424 = vmatprep.subr.mxu0 0.0
  %425 = vmatpush1.msra.mxu0 0.0
  %426 = vmatprep.subr.mxu0 0.0
  %427 = vmatpush1.msra.mxu0 0.0
  %428 = vmatprep.subr.mxu0 0.0
  %429 = vmatpush1.msra.mxu0 0.0
  %430 = vmatprep.subr.mxu0 0.0
  %431 = vmatpush1.msra.mxu0 0.0
  %432 = vmatprep.subr.mxu0 0.0
  %433 = vmatpush1.msra.mxu0 0.0
  %434 = vmatprep.subr.mxu0 0.0
  %435 = vmatpush1.msra.mxu0 0.0
  %436 = vmatprep.subr.mxu0 0.0
  %437 = vmatpush1.msra.mxu0 %v312
  %438 = vmatprep.subr.mxu0 0.0
  %439 = vmatpush1.msra.mxu0 %v311
  %440 = vmatprep.subr.mxu0 0.0
  %441 = vmatpush1.msra.mxu0 %v310
  %442 = vmatprep.subr.mxu0 0.0
  %443 = vmatpush1.msra.mxu0 %v309
  %444 = vmatprep.subr.mxu0 0.0
  %445 = vmatpush2.msra.mxu0 0.0
  %446 = vmatprep.subr.mxu0 0.0
  %447 = vmatpush2.msra.mxu0 0.0
  %448 = vmatprep.subr.mxu0 0.0
  %449 = vmatpush2.msra.mxu0 0.0
  %450 = vmatprep.subr.mxu0 0.0
  %451 = vmatpush2.msra.mxu0 0.0
  %452 = vmatprep.subr.mxu0 0.0
  %453 = vmatpush2.msra.mxu0 0.0
  %454 = vmatprep.subr.mxu0 0.0
  %455 = vmatpush2.msra.mxu0 0.0
  %456 = vmatprep.subr.mxu0 0.0
  %457 = vmatpush2.msra.mxu0 0.0
  %458 = vmatprep.subr.mxu0 0.0
  %459 = vmatpush2.msra.mxu0 0.0
  %460 = vmatprep.subr.mxu0 0.0
  %461 = vmatpush2.msra.mxu0 0.0
  %462 = vmatprep.subr.mxu0 0.0
  %463 = vmatpush2.msra.mxu0 0.0
  %464 = vmatprep.subr.mxu0 0.0
  %465 = vmatpush2.msra.mxu0 0.0
  %466 = vmatprep.subr.mxu0 0.0
  %467 = vmatpush2.msra.mxu0 0.0
  %468 = vmatprep.subr.mxu0 0.0
  %469 = vmatpush2.msra.mxu0 0.0
  %470 = vmatprep.subr.mxu0 0.0
  %471 = vmatpush2.msra.mxu0 0.0
  %472 = vmatprep.subr.mxu0 0.0
  %473 = vmatpush2.msra.mxu0 0.0
  %474 = vmatprep.subr.mxu0 0.0
  %475 = vmatpush2.msra.mxu0 0.0
  %476 = vmatprep.mubr.f32.mxu0 0.0
  %477 = vmatmul.mubr.f32.gmra.mxu0 %v315
  %v478 = vpop.f32.mrf.mxu0
  %v479 = vadd.f32 0.0, %v478
  %v480 = vpop.f32.mrf.mxu0
  %481 = vdwg.mxu0
  %v482 = vadd.f32 %v302, %v479
  %v483 = vxor.u32 %v482, 2147483648
  %v484 = vmul.f32 %v483, 1.442695
  %v485 = vpow.pop %v484
  %v486 = vadd.f32 %v485, 1.0
  %v487 = vrcp.pop %v486
  %v488 = vmul.f32 1.0, %v487
  %v489 = vtanh.pop %v482
  %v490 = vmul.f32 %v488, 0.0
  %492 = vrot.lane.b32.xlu0 %v489, 64
  %v493 = vpop.permute.xlu0 %492
  %v495 = vmul.f32 %v488, %v493
  %497 = vrot.lane.b32.xlu0 %v495, 32
  %v498 = vpop.permute.xlu0 %497
  %v500 = vadd.f32 %v490, %v498
  %v501 = vtanh.pop %v500
  %503 = vrot.lane.b32.xlu0 %v501, 64
  %v504 = vpop.permute.xlu0 %503
  %v506 = vmul.f32 %v488, %v504
  %508 = vrot.lane.b32.xlu0 %v411, 32
  %v509 = vpop.permute.xlu0 %508
  %511 = vst.msk [vmem:[#allocation2] sm:$0xff] %vm313, %v509
  %513 = vrot.lane.b32.xlu0 %v506, 32
  %v514 = vpop.permute.xlu0 %513
  %516 = vst.msk [vmem:[#allocation3 + $0x38] sm:$0xff] %vm313, %v514
  %v517 = vsel %vm313, %v509, 0
  %519 = vmatprep.subr.mxu0 0.0
  %520 = vmatpush1.msra.mxu0 0.0
  %521 = vmatprep.subr.mxu0 0.0
  %522 = vmatpush1.msra.mxu0 0.0
  %523 = vmatprep.subr.mxu0 0.0
  %524 = vmatpush1.msra.mxu0 0.0
  %525 = vmatprep.subr.mxu0 0.0
  %526 = vmatpush1.msra.mxu0 0.0
  %527 = vmatprep.subr.mxu0 0.0
  %528 = vmatpush1.msra.mxu0 0.0
  %529 = vmatprep.subr.mxu0 0.0
  %530 = vmatpush1.msra.mxu0 0.0
  %531 = vmatprep.subr.mxu0 0.0
  %532 = vmatpush1.msra.mxu0 0.0
  %533 = vmatprep.subr.mxu0 0.0
  %534 = vmatpush1.msra.mxu0 0.0
  %535 = vmatprep.subr.mxu0 0.0
  %536 = vmatpush1.msra.mxu0 0.0
  %537 = vmatprep.subr.mxu0 0.0
  %538 = vmatpush1.msra.mxu0 0.0
  %539 = vmatprep.subr.mxu0 0.0
  %540 = vmatpush1.msra.mxu0 0.0
  %541 = vmatprep.subr.mxu0 0.0
  %542 = vmatpush1.msra.mxu0 0.0
  %543 = vmatprep.subr.mxu0 0.0
  %544 = vmatpush1.msra.mxu0 %v308
  %545 = vmatprep.subr.mxu0 0.0
  %546 = vmatpush1.msra.mxu0 %v307
  %547 = vmatprep.subr.mxu0 0.0
  %548 = vmatpush1.msra.mxu0 %v306
  %549 = vmatprep.subr.mxu0 0.0
  %550 = vmatpush1.msra.mxu0 %v305
  %551 = vmatprep.subr.mxu0 0.0
  %552 = vmatpush2.msra.mxu0 0.0
  %553 = vmatprep.subr.mxu0 0.0
  %554 = vmatpush2.msra.mxu0 0.0
  %555 = vmatprep.subr.mxu0 0.0
  %556 = vmatpush2.msra.mxu0 0.0
  %557 = vmatprep.subr.mxu0 0.0
  %558 = vmatpush2.msra.mxu0 0.0
  %559 = vmatprep.subr.mxu0 0.0
  %560 = vmatpush2.msra.mxu0 0.0
  %561 = vmatprep.subr.mxu0 0.0
  %562 = vmatpush2.msra.mxu0 0.0
  %563 = vmatprep.subr.mxu0 0.0
  %564 = vmatpush2.msra.mxu0 0.0
  %565 = vmatprep.subr.mxu0 0.0
  %566 = vmatpush2.msra.mxu0 0.0
  %567 = vmatprep.subr.mxu0 0.0
  %568 = vmatpush2.msra.mxu0 0.0
  %569 = vmatprep.subr.mxu0 0.0
  %570 = vmatpush2.msra.mxu0 0.0
  %571 = vmatprep.subr.mxu0 0.0
  %572 = vmatpush2.msra.mxu0 0.0
  %573 = vmatprep.subr.mxu0 0.0
  %574 = vmatpush2.msra.mxu0 0.0
  %575 = vmatprep.subr.mxu0 0.0
  %576 = vmatpush2.msra.mxu0 0.0
  %577 = vmatprep.subr.mxu0 0.0
  %578 = vmatpush2.msra.mxu0 0.0
  %579 = vmatprep.subr.mxu0 0.0
  %580 = vmatpush2.msra.mxu0 0.0
  %581 = vmatprep.subr.mxu0 0.0
  %582 = vmatpush2.msra.mxu0 0.0
  %583 = vmatprep.mubr.f32.mxu0 0.0
  %584 = vmatmul.mubr.f32.gmra.mxu0 %v517
  %v585 = vpop.f32.mrf.mxu0
  %v586 = vadd.f32 0.0, %v585
  %v587 = vpop.f32.mrf.mxu0
  %588 = vdwg.mxu0
  %v589 = vadd.f32 %v152, %v586
  %v590 = vxor.u32 %v589, 2147483648
  %v591 = vmul.f32 %v590, 1.442695
  %v592 = vpow.pop %v591
  %v593 = vadd.f32 %v592, 1.0
  %v594 = vrcp.pop %v593
  %v595 = vmul.f32 1.0, %v594
  %v596 = vtanh.pop %v589
  %v597 = vmul.f32 %v595, %v405
  %599 = vrot.lane.b32.xlu0 %v596, 64
  %v600 = vpop.permute.xlu0 %599
  %v602 = vmul.f32 %v595, %v600
  %604 = vrot.lane.b32.xlu0 %v602, 32
  %v605 = vpop.permute.xlu0 %604
  %v607 = vadd.f32 %v597, %v605
  %v608 = vtanh.pop %v607
  %610 = vrot.lane.b32.xlu0 %v608, 64
  %v611 = vpop.permute.xlu0 %610
  %v613 = vmul.f32 %v595, %v611
  %v614 = vsel %vm313, %v514, 0
  %616 = vmatprep.subr.mxu0 0.0
  %617 = vmatpush1.msra.mxu0 0.0
  %618 = vmatprep.subr.mxu0 0.0
  %619 = vmatpush1.msra.mxu0 0.0
  %620 = vmatprep.subr.mxu0 0.0
  %621 = vmatpush1.msra.mxu0 0.0
  %622 = vmatprep.subr.mxu0 0.0
  %623 = vmatpush1.msra.mxu0 0.0
  %624 = vmatprep.subr.mxu0 0.0
  %625 = vmatpush1.msra.mxu0 0.0
  %626 = vmatprep.subr.mxu0 0.0
  %627 = vmatpush1.msra.mxu0 0.0
  %628 = vmatprep.subr.mxu0 0.0
  %629 = vmatpush1.msra.mxu0 0.0
  %630 = vmatprep.subr.mxu0 0.0
  %631 = vmatpush1.msra.mxu0 0.0
  %632 = vmatprep.subr.mxu0 0.0
  %633 = vmatpush1.msra.mxu0 0.0
  %634 = vmatprep.subr.mxu0 0.0
  %635 = vmatpush1.msra.mxu0 0.0
  %636 = vmatprep.subr.mxu0 0.0
  %637 = vmatpush1.msra.mxu0 0.0
  %638 = vmatprep.subr.mxu0 0.0
  %639 = vmatpush1.msra.mxu0 0.0
  %640 = vmatprep.subr.mxu0 0.0
  %641 = vmatpush1.msra.mxu0 %v312
  %642 = vmatprep.subr.mxu0 0.0
  %643 = vmatpush1.msra.mxu0 %v311
  %644 = vmatprep.subr.mxu0 0.0
  %645 = vmatpush1.msra.mxu0 %v310
  %646 = vmatprep.subr.mxu0 0.0
  %647 = vmatpush1.msra.mxu0 %v309
  %648 = vmatprep.subr.mxu0 0.0
  %649 = vmatpush2.msra.mxu0 0.0
  %650 = vmatprep.subr.mxu0 0.0
  %651 = vmatpush2.msra.mxu0 0.0
  %652 = vmatprep.subr.mxu0 0.0
  %653 = vmatpush2.msra.mxu0 0.0
  %654 = vmatprep.subr.mxu0 0.0
  %655 = vmatpush2.msra.mxu0 0.0
  %656 = vmatprep.subr.mxu0 0.0
  %657 = vmatpush2.msra.mxu0 0.0
  %658 = vmatprep.subr.mxu0 0.0
  %659 = vmatpush2.msra.mxu0 0.0
  %660 = vmatprep.subr.mxu0 0.0
  %661 = vmatpush2.msra.mxu0 0.0
  %662 = vmatprep.subr.mxu0 0.0
  %663 = vmatpush2.msra.mxu0 0.0
  %664 = vmatprep.subr.mxu0 0.0
  %665 = vmatpush2.msra.mxu0 0.0
  %666 = vmatprep.subr.mxu0 0.0
  %667 = vmatpush2.msra.mxu0 0.0
  %668 = vmatprep.subr.mxu0 0.0
  %669 = vmatpush2.msra.mxu0 0.0
  %670 = vmatprep.subr.mxu0 0.0
  %671 = vmatpush2.msra.mxu0 0.0
  %672 = vmatprep.subr.mxu0 0.0
  %673 = vmatpush2.msra.mxu0 0.0
  %674 = vmatprep.subr.mxu0 0.0
  %675 = vmatpush2.msra.mxu0 0.0
  %676 = vmatprep.subr.mxu0 0.0
  %677 = vmatpush2.msra.mxu0 0.0
  %678 = vmatprep.subr.mxu0 0.0
  %679 = vmatpush2.msra.mxu0 0.0
  %680 = vmatprep.mubr.f32.mxu0 0.0
  %681 = vmatmul.mubr.f32.gmra.mxu0 %v614
  %v682 = vpop.f32.mrf.mxu0
  %v683 = vadd.f32 0.0, %v682
  %v684 = vpop.f32.mrf.mxu0
  %685 = vdwg.mxu0
  %v686 = vadd.f32 %v297, %v683
  %v687 = vxor.u32 %v686, 2147483648
  %v688 = vmul.f32 %v687, 1.442695
  %v689 = vpow.pop %v688
  %v690 = vadd.f32 %v689, 1.0
  %v691 = vrcp.pop %v690
  %v692 = vmul.f32 1.0, %v691
  %v693 = vtanh.pop %v686
  %v694 = vmul.f32 %v692, %v500
  %696 = vrot.lane.b32.xlu0 %v693, 64
  %v697 = vpop.permute.xlu0 %696
  %v699 = vmul.f32 %v692, %v697
  %701 = vrot.lane.b32.xlu0 %v699, 32
  %v702 = vpop.permute.xlu0 %701
  %v704 = vadd.f32 %v694, %v702
  %v705 = vtanh.pop %v704
  %707 = vrot.lane.b32.xlu0 %v705, 64
  %v708 = vpop.permute.xlu0 %707
  %v710 = vmul.f32 %v692, %v708
  %712 = vrot.lane.b32.xlu0 %v613, 32
  %v713 = vpop.permute.xlu0 %712
  %715 = vst.msk [vmem:[#allocation2 + $0x8] sm:$0xff] %vm313, %v713
  %717 = vrot.lane.b32.xlu0 %v710, 32
  %v718 = vpop.permute.xlu0 %717
  %720 = vst.msk [vmem:[#allocation3 + $0x30] sm:$0xff] %vm313, %v718
  %v721 = vsel %vm313, %v713, 0
  %723 = vmatprep.subr.mxu0 0.0
  %724 = vmatpush1.msra.mxu0 0.0
  %725 = vmatprep.subr.mxu0 0.0
  %726 = vmatpush1.msra.mxu0 0.0
  %727 = vmatprep.subr.mxu0 0.0
  %728 = vmatpush1.msra.mxu0 0.0
  %729 = vmatprep.subr.mxu0 0.0
  %730 = vmatpush1.msra.mxu0 0.0
  %731 = vmatprep.subr.mxu0 0.0
  %732 = vmatpush1.msra.mxu0 0.0
  %733 = vmatprep.subr.mxu0 0.0
  %734 = vmatpush1.msra.mxu0 0.0
  %735 = vmatprep.subr.mxu0 0.0
  %736 = vmatpush1.msra.mxu0 0.0
  %737 = vmatprep.subr.mxu0 0.0
  %738 = vmatpush1.msra.mxu0 0.0
  %739 = vmatprep.subr.mxu0 0.0
  %740 = vmatpush1.msra.mxu0 0.0
  %741 = vmatprep.subr.mxu0 0.0
  %742 = vmatpush1.msra.mxu0 0.0
  %743 = vmatprep.subr.mxu0 0.0
  %744 = vmatpush1.msra.mxu0 0.0
  %745 = vmatprep.subr.mxu0 0.0
  %746 = vmatpush1.msra.mxu0 0.0
  %747 = vmatprep.subr.mxu0 0.0
  %748 = vmatpush1.msra.mxu0 %v308
  %749 = vmatprep.subr.mxu0 0.0
  %750 = vmatpush1.msra.mxu0 %v307
  %751 = vmatprep.subr.mxu0 0.0
  %752 = vmatpush1.msra.mxu0 %v306
  %753 = vmatprep.subr.mxu0 0.0
  %754 = vmatpush1.msra.mxu0 %v305
  %755 = vmatprep.subr.mxu0 0.0
  %756 = vmatpush2.msra.mxu0 0.0
  %757 = vmatprep.subr.mxu0 0.0
  %758 = vmatpush2.msra.mxu0 0.0
  %759 = vmatprep.subr.mxu0 0.0
  %760 = vmatpush2.msra.mxu0 0.0
  %761 = vmatprep.subr.mxu0 0.0
  %762 = vmatpush2.msra.mxu0 0.0
  %763 = vmatprep.subr.mxu0 0.0
  %764 = vmatpush2.msra.mxu0 0.0
  %765 = vmatprep.subr.mxu0 0.0
  %766 = vmatpush2.msra.mxu0 0.0
  %767 = vmatprep.subr.mxu0 0.0
  %768 = vmatpush2.msra.mxu0 0.0
  %769 = vmatprep.subr.mxu0 0.0
  %770 = vmatpush2.msra.mxu0 0.0
  %771 = vmatprep.subr.mxu0 0.0
  %772 = vmatpush2.msra.mxu0 0.0
  %773 = vmatprep.subr.mxu0 0.0
  %774 = vmatpush2.msra.mxu0 0.0
  %775 = vmatprep.subr.mxu0 0.0
  %776 = vmatpush2.msra.mxu0 0.0
  %777 = vmatprep.subr.mxu0 0.0
  %778 = vmatpush2.msra.mxu0 0.0
  %779 = vmatprep.subr.mxu0 0.0
  %780 = vmatpush2.msra.mxu0 0.0
  %781 = vmatprep.subr.mxu0 0.0
  %782 = vmatpush2.msra.mxu0 0.0
  %783 = vmatprep.subr.mxu0 0.0
  %784 = vmatpush2.msra.mxu0 0.0
  %785 = vmatprep.subr.mxu0 0.0
  %786 = vmatpush2.msra.mxu0 0.0
  %787 = vmatprep.mubr.f32.mxu0 0.0
  %788 = vmatmul.mubr.f32.gmra.mxu0 %v721
  %v789 = vpop.f32.mrf.mxu0
  %v790 = vadd.f32 0.0, %v789
  %v791 = vpop.f32.mrf.mxu0
  %792 = vdwg.mxu0
  %v793 = vadd.f32 %v157, %v790
  %v794 = vxor.u32 %v793, 2147483648
  %v795 = vmul.f32 %v794, 1.442695
  %v796 = vpow.pop %v795
  %v797 = vadd.f32 %v796, 1.0
  %v798 = vrcp.pop %v797
  %v799 = vmul.f32 1.0, %v798
  %v800 = vtanh.pop %v793
  %v801 = vmul.f32 %v799, %v607
  %803 = vrot.lane.b32.xlu0 %v800, 64
  %v804 = vpop.permute.xlu0 %803
  %v806 = vmul.f32 %v799, %v804
  %808 = vrot.lane.b32.xlu0 %v806, 32
  %v809 = vpop.permute.xlu0 %808
  %v811 = vadd.f32 %v801, %v809
  %v812 = vtanh.pop %v811
  %814 = vrot.lane.b32.xlu0 %v812, 64
  %v815 = vpop.permute.xlu0 %814
  %v817 = vmul.f32 %v799, %v815
  %v818 = vsel %vm313, %v718, 0
  %820 = vmatprep.subr.mxu0 0.0
  %821 = vmatpush1.msra.mxu0 0.0
  %822 = vmatprep.subr.mxu0 0.0
  %823 = vmatpush1.msra.mxu0 0.0
  %824 = vmatprep.subr.mxu0 0.0
  %825 = vmatpush1.msra.mxu0 0.0
  %826 = vmatprep.subr.mxu0 0.0
  %827 = vmatpush1.msra.mxu0 0.0
  %828 = vmatprep.subr.mxu0 0.0
  %829 = vmatpush1.msra.mxu0 0.0
  %830 = vmatprep.subr.mxu0 0.0
  %831 = vmatpush1.msra.mxu0 0.0
  %832 = vmatprep.subr.mxu0 0.0
  %833 = vmatpush1.msra.mxu0 0.0
  %834 = vmatprep.subr.mxu0 0.0
  %835 = vmatpush1.msra.mxu0 0.0
  %836 = vmatprep.subr.mxu0 0.0
  %837 = vmatpush1.msra.mxu0 0.0
  %838 = vmatprep.subr.mxu0 0.0
  %839 = vmatpush1.msra.mxu0 0.0
  %840 = vmatprep.subr.mxu0 0.0
  %841 = vmatpush1.msra.mxu0 0.0
  %842 = vmatprep.subr.mxu0 0.0
  %843 = vmatpush1.msra.mxu0 0.0
  %844 = vmatprep.subr.mxu0 0.0
  %845 = vmatpush1.msra.mxu0 %v312
  %846 = vmatprep.subr.mxu0 0.0
  %847 = vmatpush1.msra.mxu0 %v311
  %848 = vmatprep.subr.mxu0 0.0
  %849 = vmatpush1.msra.mxu0 %v310
  %850 = vmatprep.subr.mxu0 0.0
  %851 = vmatpush1.msra.mxu0 %v309
  %852 = vmatprep.subr.mxu0 0.0
  %853 = vmatpush2.msra.mxu0 0.0
  %854 = vmatprep.subr.mxu0 0.0
  %855 = vmatpush2.msra.mxu0 0.0
  %856 = vmatprep.subr.mxu0 0.0
  %857 = vmatpush2.msra.mxu0 0.0
  %858 = vmatprep.subr.mxu0 0.0
  %859 = vmatpush2.msra.mxu0 0.0
  %860 = vmatprep.subr.mxu0 0.0
  %861 = vmatpush2.msra.mxu0 0.0
  %862 = vmatprep.subr.mxu0 0.0
  %863 = vmatpush2.msra.mxu0 0.0
  %864 = vmatprep.subr.mxu0 0.0
  %865 = vmatpush2.msra.mxu0 0.0
  %866 = vmatprep.subr.mxu0 0.0
  %867 = vmatpush2.msra.mxu0 0.0
  %868 = vmatprep.subr.mxu0 0.0
  %869 = vmatpush2.msra.mxu0 0.0
  %870 = vmatprep.subr.mxu0 0.0
  %871 = vmatpush2.msra.mxu0 0.0
  %872 = vmatprep.subr.mxu0 0.0
  %873 = vmatpush2.msra.mxu0 0.0
  %874 = vmatprep.subr.mxu0 0.0
  %875 = vmatpush2.msra.mxu0 0.0
  %876 = vmatprep.subr.mxu0 0.0
  %877 = vmatpush2.msra.mxu0 0.0
  %878 = vmatprep.subr.mxu0 0.0
  %879 = vmatpush2.msra.mxu0 0.0
  %880 = vmatprep.subr.mxu0 0.0
  %881 = vmatpush2.msra.mxu0 0.0
  %882 = vmatprep.subr.mxu0 0.0
  %883 = vmatpush2.msra.mxu0 0.0
  %884 = vmatprep.mubr.f32.mxu0 0.0
  %885 = vmatmul.mubr.f32.gmra.mxu0 %v818
  %v886 = vpop.f32.mrf.mxu0
  %v887 = vadd.f32 0.0, %v886
  %v888 = vpop.f32.mrf.mxu0
  %889 = vdwg.mxu0
  %v890 = vadd.f32 %v292, %v887
  %v891 = vxor.u32 %v890, 2147483648
  %v892 = vmul.f32 %v891, 1.442695
  %v893 = vpow.pop %v892
  %v894 = vadd.f32 %v893, 1.0
  %v895 = vrcp.pop %v894
  %v896 = vmul.f32 1.0, %v895
  %v897 = vtanh.pop %v890
  %v898 = vmul.f32 %v896, %v704
  %900 = vrot.lane.b32.xlu0 %v897, 64
  %v901 = vpop.permute.xlu0 %900
  %v903 = vmul.f32 %v896, %v901
  %905 = vrot.lane.b32.xlu0 %v903, 32
  %v906 = vpop.permute.xlu0 %905
  %v908 = vadd.f32 %v898, %v906
  %v909 = vtanh.pop %v908
  %911 = vrot.lane.b32.xlu0 %v909, 64
  %v912 = vpop.permute.xlu0 %911
  %v914 = vmul.f32 %v896, %v912
  %916 = vrot.lane.b32.xlu0 %v817, 32
  %v917 = vpop.permute.xlu0 %916
  %919 = vst.msk [vmem:[#allocation2 + $0x10] sm:$0xff] %vm313, %v917
  %921 = vrot.lane.b32.xlu0 %v914, 32
  %v922 = vpop.permute.xlu0 %921
  %924 = vst.msk [vmem:[#allocation3 + $0x28] sm:$0xff] %vm313, %v922
  %v925 = vsel %vm313, %v917, 0
  %927 = vmatprep.subr.mxu0 0.0
  %928 = vmatpush1.msra.mxu0 0.0
  %929 = vmatprep.subr.mxu0 0.0
  %930 = vmatpush1.msra.mxu0 0.0
  %931 = vmatprep.subr.mxu0 0.0
  %932 = vmatpush1.msra.mxu0 0.0
  %933 = vmatprep.subr.mxu0 0.0
  %934 = vmatpush1.msra.mxu0 0.0
  %935 = vmatprep.subr.mxu0 0.0
  %936 = vmatpush1.msra.mxu0 0.0
  %937 = vmatprep.subr.mxu0 0.0
  %938 = vmatpush1.msra.mxu0 0.0
  %939 = vmatprep.subr.mxu0 0.0
  %940 = vmatpush1.msra.mxu0 0.0
  %941 = vmatprep.subr.mxu0 0.0
  %942 = vmatpush1.msra.mxu0 0.0
  %943 = vmatprep.subr.mxu0 0.0
  %944 = vmatpush1.msra.mxu0 0.0
  %945 = vmatprep.subr.mxu0 0.0
  %946 = vmatpush1.msra.mxu0 0.0
  %947 = vmatprep.subr.mxu0 0.0
  %948 = vmatpush1.msra.mxu0 0.0
  %949 = vmatprep.subr.mxu0 0.0
  %950 = vmatpush1.msra.mxu0 0.0
  %951 = vmatprep.subr.mxu0 0.0
  %952 = vmatpush1.msra.mxu0 %v308
  %953 = vmatprep.subr.mxu0 0.0
  %954 = vmatpush1.msra.mxu0 %v307
  %955 = vmatprep.subr.mxu0 0.0
  %956 = vmatpush1.msra.mxu0 %v306
  %957 = vmatprep.subr.mxu0 0.0
  %958 = vmatpush1.msra.mxu0 %v305
  %959 = vmatprep.subr.mxu0 0.0
  %960 = vmatpush2.msra.mxu0 0.0
  %961 = vmatprep.subr.mxu0 0.0
  %962 = vmatpush2.msra.mxu0 0.0
  %963 = vmatprep.subr.mxu0 0.0
  %964 = vmatpush2.msra.mxu0 0.0
  %965 = vmatprep.subr.mxu0 0.0
  %966 = vmatpush2.msra.mxu0 0.0
  %967 = vmatprep.subr.mxu0 0.0
  %968 = vmatpush2.msra.mxu0 0.0
  %969 = vmatprep.subr.mxu0 0.0
  %970 = vmatpush2.msra.mxu0 0.0
  %971 = vmatprep.subr.mxu0 0.0
  %972 = vmatpush2.msra.mxu0 0.0
  %973 = vmatprep.subr.mxu0 0.0
  %974 = vmatpush2.msra.mxu0 0.0
  %975 = vmatprep.subr.mxu0 0.0
  %976 = vmatpush2.msra.mxu0 0.0
  %977 = vmatprep.subr.mxu0 0.0
  %978 = vmatpush2.msra.mxu0 0.0
  %979 = vmatprep.subr.mxu0 0.0
  %980 = vmatpush2.msra.mxu0 0.0
  %981 = vmatprep.subr.mxu0 0.0
  %982 = vmatpush2.msra.mxu0 0.0
  %983 = vmatprep.subr.mxu0 0.0
  %984 = vmatpush2.msra.mxu0 0.0
  %985 = vmatprep.subr.mxu0 0.0
  %986 = vmatpush2.msra.mxu0 0.0
  %987 = vmatprep.subr.mxu0 0.0
  %988 = vmatpush2.msra.mxu0 0.0
  %989 = vmatprep.subr.mxu0 0.0
  %990 = vmatpush2.msra.mxu0 0.0
  %991 = vmatprep.mubr.f32.mxu0 0.0
  %992 = vmatmul.mubr.f32.gmra.mxu0 %v925
  %v993 = vpop.f32.mrf.mxu0
  %v994 = vadd.f32 0.0, %v993
  %v995 = vpop.f32.mrf.mxu0
  %996 = vdwg.mxu0
  %v997 = vadd.f32 %v162, %v994
  %v998 = vxor.u32 %v997, 2147483648
  %v999 = vmul.f32 %v998, 1.442695
  %v1000 = vpow.pop %v999
  %v1001 = vadd.f32 %v1000, 1.0
  %v1002 = vrcp.pop %v1001
  %v1003 = vmul.f32 1.0, %v1002
  %v1004 = vtanh.pop %v997
  %v1005 = vmul.f32 %v1003, %v811
  %1007 = vrot.lane.b32.xlu0 %v1004, 64
  %v1008 = vpop.permute.xlu0 %1007
  %v1010 = vmul.f32 %v1003, %v1008
  %1012 = vrot.lane.b32.xlu0 %v1010, 32
  %v1013 = vpop.permute.xlu0 %1012
  %v1015 = vadd.f32 %v1005, %v1013
  %v1016 = vtanh.pop %v1015
  %1018 = vrot.lane.b32.xlu0 %v1016, 64
  %v1019 = vpop.permute.xlu0 %1018
  %v1021 = vmul.f32 %v1003, %v1019
  %v1022 = vsel %vm313, %v922, 0
  %1024 = vmatprep.subr.mxu0 0.0
  %1025 = vmatpush1.msra.mxu0 0.0
  %1026 = vmatprep.subr.mxu0 0.0
  %1027 = vmatpush1.msra.mxu0 0.0
  %1028 = vmatprep.subr.mxu0 0.0
  %1029 = vmatpush1.msra.mxu0 0.0
  %1030 = vmatprep.subr.mxu0 0.0
  %1031 = vmatpush1.msra.mxu0 0.0
  %1032 = vmatprep.subr.mxu0 0.0
  %1033 = vmatpush1.msra.mxu0 0.0
  %1034 = vmatprep.subr.mxu0 0.0
  %1035 = vmatpush1.msra.mxu0 0.0
  %1036 = vmatprep.subr.mxu0 0.0
  %1037 = vmatpush1.msra.mxu0 0.0
  %1038 = vmatprep.subr.mxu0 0.0
  %1039 = vmatpush1.msra.mxu0 0.0
  %1040 = vmatprep.subr.mxu0 0.0
  %1041 = vmatpush1.msra.mxu0 0.0
  %1042 = vmatprep.subr.mxu0 0.0
  %1043 = vmatpush1.msra.mxu0 0.0
  %1044 = vmatprep.subr.mxu0 0.0
  %1045 = vmatpush1.msra.mxu0 0.0
  %1046 = vmatprep.subr.mxu0 0.0
  %1047 = vmatpush1.msra.mxu0 0.0
  %1048 = vmatprep.subr.mxu0 0.0
  %1049 = vmatpush1.msra.mxu0 %v312
  %1050 = vmatprep.subr.mxu0 0.0
  %1051 = vmatpush1.msra.mxu0 %v311
  %1052 = vmatprep.subr.mxu0 0.0
  %1053 = vmatpush1.msra.mxu0 %v310
  %1054 = vmatprep.subr.mxu0 0.0
  %1055 = vmatpush1.msra.mxu0 %v309
  %1056 = vmatprep.subr.mxu0 0.0
  %1057 = vmatpush2.msra.mxu0 0.0
  %1058 = vmatprep.subr.mxu0 0.0
  %1059 = vmatpush2.msra.mxu0 0.0
  %1060 = vmatprep.subr.mxu0 0.0
  %1061 = vmatpush2.msra.mxu0 0.0
  %1062 = vmatprep.subr.mxu0 0.0
  %1063 = vmatpush2.msra.mxu0 0.0
  %1064 = vmatprep.subr.mxu0 0.0
  %1065 = vmatpush2.msra.mxu0 0.0
  %1066 = vmatprep.subr.mxu0 0.0
  %1067 = vmatpush2.msra.mxu0 0.0
  %1068 = vmatprep.subr.mxu0 0.0
  %1069 = vmatpush2.msra.mxu0 0.0
  %1070 = vmatprep.subr.mxu0 0.0
  %1071 = vmatpush2.msra.mxu0 0.0
  %1072 = vmatprep.subr.mxu0 0.0
  %1073 = vmatpush2.msra.mxu0 0.0
  %1074 = vmatprep.subr.mxu0 0.0
  %1075 = vmatpush2.msra.mxu0 0.0
  %1076 = vmatprep.subr.mxu0 0.0
  %1077 = vmatpush2.msra.mxu0 0.0
  %1078 = vmatprep.subr.mxu0 0.0
  %1079 = vmatpush2.msra.mxu0 0.0
  %1080 = vmatprep.subr.mxu0 0.0
  %1081 = vmatpush2.msra.mxu0 0.0
  %1082 = vmatprep.subr.mxu0 0.0
  %1083 = vmatpush2.msra.mxu0 0.0
  %1084 = vmatprep.subr.mxu0 0.0
  %1085 = vmatpush2.msra.mxu0 0.0
  %1086 = vmatprep.subr.mxu0 0.0
  %1087 = vmatpush2.msra.mxu0 0.0
  %1088 = vmatprep.mubr.f32.mxu0 0.0
  %1089 = vmatmul.mubr.f32.gmra.mxu0 %v1022
  %v1090 = vpop.f32.mrf.mxu0
  %v1091 = vadd.f32 0.0, %v1090
  %v1092 = vpop.f32.mrf.mxu0
  %1093 = vdwg.mxu0
  %v1094 = vadd.f32 %v287, %v1091
  %v1095 = vxor.u32 %v1094, 2147483648
  %v1096 = vmul.f32 %v1095, 1.442695
  %v1097 = vpow.pop %v1096
  %v1098 = vadd.f32 %v1097, 1.0
  %v1099 = vrcp.pop %v1098
  %v1100 = vmul.f32 1.0, %v1099
  %v1101 = vtanh.pop %v1094
  %v1102 = vmul.f32 %v1100, %v908
  %1104 = vrot.lane.b32.xlu0 %v1101, 64
  %v1105 = vpop.permute.xlu0 %1104
  %v1107 = vmul.f32 %v1100, %v1105
  %1109 = vrot.lane.b32.xlu0 %v1107, 32
  %v1110 = vpop.permute.xlu0 %1109
  %v1112 = vadd.f32 %v1102, %v1110
  %v1113 = vtanh.pop %v1112
  %1115 = vrot.lane.b32.xlu0 %v1113, 64
  %v1116 = vpop.permute.xlu0 %1115
  %v1118 = vmul.f32 %v1100, %v1116
  %1120 = vrot.lane.b32.xlu0 %v1021, 32
  %v1121 = vpop.permute.xlu0 %1120
  %1123 = vst.msk [vmem:[#allocation2 + $0x18] sm:$0xff] %vm313, %v1121
  %1125 = vrot.lane.b32.xlu0 %v1118, 32
  %v1126 = vpop.permute.xlu0 %1125
  %1128 = vst.msk [vmem:[#allocation3 + $0x20] sm:$0xff] %vm313, %v1126
  %v1129 = vsel %vm313, %v1121, 0
  %1131 = vmatprep.subr.mxu0 0.0
  %1132 = vmatpush1.msra.mxu0 0.0
  %1133 = vmatprep.subr.mxu0 0.0
  %1134 = vmatpush1.msra.mxu0 0.0
  %1135 = vmatprep.subr.mxu0 0.0
  %1136 = vmatpush1.msra.mxu0 0.0
  %1137 = vmatprep.subr.mxu0 0.0
  %1138 = vmatpush1.msra.mxu0 0.0
  %1139 = vmatprep.subr.mxu0 0.0
  %1140 = vmatpush1.msra.mxu0 0.0
  %1141 = vmatprep.subr.mxu0 0.0
  %1142 = vmatpush1.msra.mxu0 0.0
  %1143 = vmatprep.subr.mxu0 0.0
  %1144 = vmatpush1.msra.mxu0 0.0
  %1145 = vmatprep.subr.mxu0 0.0
  %1146 = vmatpush1.msra.mxu0 0.0
  %1147 = vmatprep.subr.mxu0 0.0
  %1148 = vmatpush1.msra.mxu0 0.0
  %1149 = vmatprep.subr.mxu0 0.0
  %1150 = vmatpush1.msra.mxu0 0.0
  %1151 = vmatprep.subr.mxu0 0.0
  %1152 = vmatpush1.msra.mxu0 0.0
  %1153 = vmatprep.subr.mxu0 0.0
  %1154 = vmatpush1.msra.mxu0 0.0
  %1155 = vmatprep.subr.mxu0 0.0
  %1156 = vmatpush1.msra.mxu0 %v308
  %1157 = vmatprep.subr.mxu0 0.0
  %1158 = vmatpush1.msra.mxu0 %v307
  %1159 = vmatprep.subr.mxu0 0.0
  %1160 = vmatpush1.msra.mxu0 %v306
  %1161 = vmatprep.subr.mxu0 0.0
  %1162 = vmatpush1.msra.mxu0 %v305
  %1163 = vmatprep.subr.mxu0 0.0
  %1164 = vmatpush2.msra.mxu0 0.0
  %1165 = vmatprep.subr.mxu0 0.0
  %1166 = vmatpush2.msra.mxu0 0.0
  %1167 = vmatprep.subr.mxu0 0.0
  %1168 = vmatpush2.msra.mxu0 0.0
  %1169 = vmatprep.subr.mxu0 0.0
  %1170 = vmatpush2.msra.mxu0 0.0
  %1171 = vmatprep.subr.mxu0 0.0
  %1172 = vmatpush2.msra.mxu0 0.0
  %1173 = vmatprep.subr.mxu0 0.0
  %1174 = vmatpush2.msra.mxu0 0.0
  %1175 = vmatprep.subr.mxu0 0.0
  %1176 = vmatpush2.msra.mxu0 0.0
  %1177 = vmatprep.subr.mxu0 0.0
  %1178 = vmatpush2.msra.mxu0 0.0
  %1179 = vmatprep.subr.mxu0 0.0
  %1180 = vmatpush2.msra.mxu0 0.0
  %1181 = vmatprep.subr.mxu0 0.0
  %1182 = vmatpush2.msra.mxu0 0.0
  %1183 = vmatprep.subr.mxu0 0.0
  %1184 = vmatpush2.msra.mxu0 0.0
  %1185 = vmatprep.subr.mxu0 0.0
  %1186 = vmatpush2.msra.mxu0 0.0
  %1187 = vmatprep.subr.mxu0 0.0
  %1188 = vmatpush2.msra.mxu0 0.0
  %1189 = vmatprep.subr.mxu0 0.0
  %1190 = vmatpush2.msra.mxu0 0.0
  %1191 = vmatprep.subr.mxu0 0.0
  %1192 = vmatpush2.msra.mxu0 0.0
  %1193 = vmatprep.subr.mxu0 0.0
  %1194 = vmatpush2.msra.mxu0 0.0
  %1195 = vmatprep.mubr.f32.mxu0 0.0
  %1196 = vmatmul.mubr.f32.gmra.mxu0 %v1129
  %v1197 = vpop.f32.mrf.mxu0
  %v1198 = vadd.f32 0.0, %v1197
  %v1199 = vpop.f32.mrf.mxu0
  %1200 = vdwg.mxu0
  %v1201 = vadd.f32 %v167, %v1198
  %v1202 = vxor.u32 %v1201, 2147483648
  %v1203 = vmul.f32 %v1202, 1.442695
  %v1204 = vpow.pop %v1203
  %v1205 = vadd.f32 %v1204, 1.0
  %v1206 = vrcp.pop %v1205
  %v1207 = vmul.f32 1.0, %v1206
  %v1208 = vtanh.pop %v1201
  %v1209 = vmul.f32 %v1207, %v1015
  %1211 = vrot.lane.b32.xlu0 %v1208, 64
  %v1212 = vpop.permute.xlu0 %1211
  %v1214 = vmul.f32 %v1207, %v1212
  %1216 = vrot.lane.b32.xlu0 %v1214, 32
  %v1217 = vpop.permute.xlu0 %1216
  %v1219 = vadd.f32 %v1209, %v1217
  %v1220 = vtanh.pop %v1219
  %1222 = vrot.lane.b32.xlu0 %v1220, 64
  %v1223 = vpop.permute.xlu0 %1222
  %v1225 = vmul.f32 %v1207, %v1223
  %v1226 = vsel %vm313, %v1126, 0
  %1228 = vmatprep.subr.mxu0 0.0
  %1229 = vmatpush1.msra.mxu0 0.0
  %1230 = vmatprep.subr.mxu0 0.0
  %1231 = vmatpush1.msra.mxu0 0.0
  %1232 = vmatprep.subr.mxu0 0.0
  %1233 = vmatpush1.msra.mxu0 0.0
  %1234 = vmatprep.subr.mxu0 0.0
  %1235 = vmatpush1.msra.mxu0 0.0
  %1236 = vmatprep.subr.mxu0 0.0
  %1237 = vmatpush1.msra.mxu0 0.0
  %1238 = vmatprep.subr.mxu0 0.0
  %1239 = vmatpush1.msra.mxu0 0.0
  %1240 = vmatprep.subr.mxu0 0.0
  %1241 = vmatpush1.msra.mxu0 0.0
  %1242 = vmatprep.subr.mxu0 0.0
  %1243 = vmatpush1.msra.mxu0 0.0
  %1244 = vmatprep.subr.mxu0 0.0
  %1245 = vmatpush1.msra.mxu0 0.0
  %1246 = vmatprep.subr.mxu0 0.0
  %1247 = vmatpush1.msra.mxu0 0.0
  %1248 = vmatprep.subr.mxu0 0.0
  %1249 = vmatpush1.msra.mxu0 0.0
  %1250 = vmatprep.subr.mxu0 0.0
  %1251 = vmatpush1.msra.mxu0 0.0
  %1252 = vmatprep.subr.mxu0 0.0
  %1253 = vmatpush1.msra.mxu0 %v312
  %1254 = vmatprep.subr.mxu0 0.0
  %1255 = vmatpush1.msra.mxu0 %v311
  %1256 = vmatprep.subr.mxu0 0.0
  %1257 = vmatpush1.msra.mxu0 %v310
  %1258 = vmatprep.subr.mxu0 0.0
  %1259 = vmatpush1.msra.mxu0 %v309
  %1260 = vmatprep.subr.mxu0 0.0
  %1261 = vmatpush2.msra.mxu0 0.0
  %1262 = vmatprep.subr.mxu0 0.0
  %1263 = vmatpush2.msra.mxu0 0.0
  %1264 = vmatprep.subr.mxu0 0.0
  %1265 = vmatpush2.msra.mxu0 0.0
  %1266 = vmatprep.subr.mxu0 0.0
  %1267 = vmatpush2.msra.mxu0 0.0
  %1268 = vmatprep.subr.mxu0 0.0
  %1269 = vmatpush2.msra.mxu0 0.0
  %1270 = vmatprep.subr.mxu0 0.0
  %1271 = vmatpush2.msra.mxu0 0.0
  %1272 = vmatprep.subr.mxu0 0.0
  %1273 = vmatpush2.msra.mxu0 0.0
  %1274 = vmatprep.subr.mxu0 0.0
  %1275 = vmatpush2.msra.mxu0 0.0
  %1276 = vmatprep.subr.mxu0 0.0
  %1277 = vmatpush2.msra.mxu0 0.0
  %1278 = vmatprep.subr.mxu0 0.0
  %1279 = vmatpush2.msra.mxu0 0.0
  %1280 = vmatprep.subr.mxu0 0.0
  %1281 = vmatpush2.msra.mxu0 0.0
  %1282 = vmatprep.subr.mxu0 0.0
  %1283 = vmatpush2.msra.mxu0 0.0
  %1284 = vmatprep.subr.mxu0 0.0
  %1285 = vmatpush2.msra.mxu0 0.0
  %1286 = vmatprep.subr.mxu0 0.0
  %1287 = vmatpush2.msra.mxu0 0.0
  %1288 = vmatprep.subr.mxu0 0.0
  %1289 = vmatpush2.msra.mxu0 0.0
  %1290 = vmatprep.subr.mxu0 0.0
  %1291 = vmatpush2.msra.mxu0 0.0
  %1292 = vmatprep.mubr.f32.mxu0 0.0
  %1293 = vmatmul.mubr.f32.gmra.mxu0 %v1226
  %v1294 = vpop.f32.mrf.mxu0
  %v1295 = vadd.f32 0.0, %v1294
  %v1296 = vpop.f32.mrf.mxu0
  %1297 = vdwg.mxu0
  %v1298 = vadd.f32 %v282, %v1295
  %v1299 = vxor.u32 %v1298, 2147483648
  %v1300 = vmul.f32 %v1299, 1.442695
  %v1301 = vpow.pop %v1300
  %v1302 = vadd.f32 %v1301, 1.0
  %v1303 = vrcp.pop %v1302
  %v1304 = vmul.f32 1.0, %v1303
  %v1305 = vtanh.pop %v1298
  %v1306 = vmul.f32 %v1304, %v1112
  %1308 = vrot.lane.b32.xlu0 %v1305, 64
  %v1309 = vpop.permute.xlu0 %1308
  %v1311 = vmul.f32 %v1304, %v1309
  %1313 = vrot.lane.b32.xlu0 %v1311, 32
  %v1314 = vpop.permute.xlu0 %1313
  %v1316 = vadd.f32 %v1306, %v1314
  %v1317 = vtanh.pop %v1316
  %1319 = vrot.lane.b32.xlu0 %v1317, 64
  %v1320 = vpop.permute.xlu0 %1319
  %v1322 = vmul.f32 %v1304, %v1320
  %1324 = vrot.lane.b32.xlu0 %v1225, 32
  %v1325 = vpop.permute.xlu0 %1324
  %1327 = vst.msk [vmem:[#allocation2 + $0x20] sm:$0xff] %vm313, %v1325
  %1329 = vrot.lane.b32.xlu0 %v1322, 32
  %v1330 = vpop.permute.xlu0 %1329
  %1332 = vst.msk [vmem:[#allocation3 + $0x18] sm:$0xff] %vm313, %v1330
  %v1333 = vsel %vm313, %v1325, 0
  %1335 = vmatprep.subr.mxu0 0.0
  %1336 = vmatpush1.msra.mxu0 0.0
  %1337 = vmatprep.subr.mxu0 0.0
  %1338 = vmatpush1.msra.mxu0 0.0
  %1339 = vmatprep.subr.mxu0 0.0
  %1340 = vmatpush1.msra.mxu0 0.0
  %1341 = vmatprep.subr.mxu0 0.0
  %1342 = vmatpush1.msra.mxu0 0.0
  %1343 = vmatprep.subr.mxu0 0.0
  %1344 = vmatpush1.msra.mxu0 0.0
  %1345 = vmatprep.subr.mxu0 0.0
  %1346 = vmatpush1.msra.mxu0 0.0
  %1347 = vmatprep.subr.mxu0 0.0
  %1348 = vmatpush1.msra.mxu0 0.0
  %1349 = vmatprep.subr.mxu0 0.0
  %1350 = vmatpush1.msra.mxu0 0.0
  %1351 = vmatprep.subr.mxu0 0.0
  %1352 = vmatpush1.msra.mxu0 0.0
  %1353 = vmatprep.subr.mxu0 0.0
  %1354 = vmatpush1.msra.mxu0 0.0
  %1355 = vmatprep.subr.mxu0 0.0
  %1356 = vmatpush1.msra.mxu0 0.0
  %1357 = vmatprep.subr.mxu0 0.0
  %1358 = vmatpush1.msra.mxu0 0.0
  %1359 = vmatprep.subr.mxu0 0.0
  %1360 = vmatpush1.msra.mxu0 %v308
  %1361 = vmatprep.subr.mxu0 0.0
  %1362 = vmatpush1.msra.mxu0 %v307
  %1363 = vmatprep.subr.mxu0 0.0
  %1364 = vmatpush1.msra.mxu0 %v306
  %1365 = vmatprep.subr.mxu0 0.0
  %1366 = vmatpush1.msra.mxu0 %v305
  %1367 = vmatprep.subr.mxu0 0.0
  %1368 = vmatpush2.msra.mxu0 0.0
  %1369 = vmatprep.subr.mxu0 0.0
  %1370 = vmatpush2.msra.mxu0 0.0
  %1371 = vmatprep.subr.mxu0 0.0
  %1372 = vmatpush2.msra.mxu0 0.0
  %1373 = vmatprep.subr.mxu0 0.0
  %1374 = vmatpush2.msra.mxu0 0.0
  %1375 = vmatprep.subr.mxu0 0.0
  %1376 = vmatpush2.msra.mxu0 0.0
  %1377 = vmatprep.subr.mxu0 0.0
  %1378 = vmatpush2.msra.mxu0 0.0
  %1379 = vmatprep.subr.mxu0 0.0
  %1380 = vmatpush2.msra.mxu0 0.0
  %1381 = vmatprep.subr.mxu0 0.0
  %1382 = vmatpush2.msra.mxu0 0.0
  %1383 = vmatprep.subr.mxu0 0.0
  %1384 = vmatpush2.msra.mxu0 0.0
  %1385 = vmatprep.subr.mxu0 0.0
  %1386 = vmatpush2.msra.mxu0 0.0
  %1387 = vmatprep.subr.mxu0 0.0
  %1388 = vmatpush2.msra.mxu0 0.0
  %1389 = vmatprep.subr.mxu0 0.0
  %1390 = vmatpush2.msra.mxu0 0.0
  %1391 = vmatprep.subr.mxu0 0.0
  %1392 = vmatpush2.msra.mxu0 0.0
  %1393 = vmatprep.subr.mxu0 0.0
  %1394 = vmatpush2.msra.mxu0 0.0
  %1395 = vmatprep.subr.mxu0 0.0
  %1396 = vmatpush2.msra.mxu0 0.0
  %1397 = vmatprep.subr.mxu0 0.0
  %1398 = vmatpush2.msra.mxu0 0.0
  %1399 = vmatprep.mubr.f32.mxu0 0.0
  %1400 = vmatmul.mubr.f32.gmra.mxu0 %v1333
  %v1401 = vpop.f32.mrf.mxu0
  %v1402 = vadd.f32 0.0, %v1401
  %v1403 = vpop.f32.mrf.mxu0
  %1404 = vdwg.mxu0
  %v1405 = vadd.f32 %v172, %v1402
  %v1406 = vxor.u32 %v1405, 2147483648
  %v1407 = vmul.f32 %v1406, 1.442695
  %v1408 = vpow.pop %v1407
  %v1409 = vadd.f32 %v1408, 1.0
  %v1410 = vrcp.pop %v1409
  %v1411 = vmul.f32 1.0, %v1410
  %v1412 = vtanh.pop %v1405
  %v1413 = vmul.f32 %v1411, %v1219
  %1415 = vrot.lane.b32.xlu0 %v1412, 64
  %v1416 = vpop.permute.xlu0 %1415
  %v1418 = vmul.f32 %v1411, %v1416
  %1420 = vrot.lane.b32.xlu0 %v1418, 32
  %v1421 = vpop.permute.xlu0 %1420
  %v1423 = vadd.f32 %v1413, %v1421
  %v1424 = vtanh.pop %v1423
  %1426 = vrot.lane.b32.xlu0 %v1424, 64
  %v1427 = vpop.permute.xlu0 %1426
  %v1429 = vmul.f32 %v1411, %v1427
  %v1430 = vsel %vm313, %v1330, 0
  %1432 = vmatprep.subr.mxu0 0.0
  %1433 = vmatpush1.msra.mxu0 0.0
  %1434 = vmatprep.subr.mxu0 0.0
  %1435 = vmatpush1.msra.mxu0 0.0
  %1436 = vmatprep.subr.mxu0 0.0
  %1437 = vmatpush1.msra.mxu0 0.0
  %1438 = vmatprep.subr.mxu0 0.0
  %1439 = vmatpush1.msra.mxu0 0.0
  %1440 = vmatprep.subr.mxu0 0.0
  %1441 = vmatpush1.msra.mxu0 0.0
  %1442 = vmatprep.subr.mxu0 0.0
  %1443 = vmatpush1.msra.mxu0 0.0
  %1444 = vmatprep.subr.mxu0 0.0
  %1445 = vmatpush1.msra.mxu0 0.0
  %1446 = vmatprep.subr.mxu0 0.0
  %1447 = vmatpush1.msra.mxu0 0.0
  %1448 = vmatprep.subr.mxu0 0.0
  %1449 = vmatpush1.msra.mxu0 0.0
  %1450 = vmatprep.subr.mxu0 0.0
  %1451 = vmatpush1.msra.mxu0 0.0
  %1452 = vmatprep.subr.mxu0 0.0
  %1453 = vmatpush1.msra.mxu0 0.0
  %1454 = vmatprep.subr.mxu0 0.0
  %1455 = vmatpush1.msra.mxu0 0.0
  %1456 = vmatprep.subr.mxu0 0.0
  %1457 = vmatpush1.msra.mxu0 %v312
  %1458 = vmatprep.subr.mxu0 0.0
  %1459 = vmatpush1.msra.mxu0 %v311
  %1460 = vmatprep.subr.mxu0 0.0
  %1461 = vmatpush1.msra.mxu0 %v310
  %1462 = vmatprep.subr.mxu0 0.0
  %1463 = vmatpush1.msra.mxu0 %v309
  %1464 = vmatprep.subr.mxu0 0.0
  %1465 = vmatpush2.msra.mxu0 0.0
  %1466 = vmatprep.subr.mxu0 0.0
  %1467 = vmatpush2.msra.mxu0 0.0
  %1468 = vmatprep.subr.mxu0 0.0
  %1469 = vmatpush2.msra.mxu0 0.0
  %1470 = vmatprep.subr.mxu0 0.0
  %1471 = vmatpush2.msra.mxu0 0.0
  %1472 = vmatprep.subr.mxu0 0.0
  %1473 = vmatpush2.msra.mxu0 0.0
  %1474 = vmatprep.subr.mxu0 0.0
  %1475 = vmatpush2.msra.mxu0 0.0
  %1476 = vmatprep.subr.mxu0 0.0
  %1477 = vmatpush2.msra.mxu0 0.0
  %1478 = vmatprep.subr.mxu0 0.0
  %1479 = vmatpush2.msra.mxu0 0.0
  %1480 = vmatprep.subr.mxu0 0.0
  %1481 = vmatpush2.msra.mxu0 0.0
  %1482 = vmatprep.subr.mxu0 0.0
  %1483 = vmatpush2.msra.mxu0 0.0
  %1484 = vmatprep.subr.mxu0 0.0
  %1485 = vmatpush2.msra.mxu0 0.0
  %1486 = vmatprep.subr.mxu0 0.0
  %1487 = vmatpush2.msra.mxu0 0.0
  %1488 = vmatprep.subr.mxu0 0.0
  %1489 = vmatpush2.msra.mxu0 0.0
  %1490 = vmatprep.subr.mxu0 0.0
  %1491 = vmatpush2.msra.mxu0 0.0
  %1492 = vmatprep.subr.mxu0 0.0
  %1493 = vmatpush2.msra.mxu0 0.0
  %1494 = vmatprep.subr.mxu0 0.0
  %1495 = vmatpush2.msra.mxu0 0.0
  %1496 = vmatprep.mubr.f32.mxu0 0.0
  %1497 = vmatmul.mubr.f32.gmra.mxu0 %v1430
  %v1498 = vpop.f32.mrf.mxu0
  %v1499 = vadd.f32 0.0, %v1498
  %v1500 = vpop.f32.mrf.mxu0
  %1501 = vdwg.mxu0
  %v1502 = vadd.f32 %v277, %v1499
  %v1503 = vxor.u32 %v1502, 2147483648
  %v1504 = vmul.f32 %v1503, 1.442695
  %v1505 = vpow.pop %v1504
  %v1506 = vadd.f32 %v1505, 1.0
  %v1507 = vrcp.pop %v1506
  %v1508 = vmul.f32 1.0, %v1507
  %v1509 = vtanh.pop %v1502
  %v1510 = vmul.f32 %v1508, %v1316
  %1512 = vrot.lane.b32.xlu0 %v1509, 64
  %v1513 = vpop.permute.xlu0 %1512
  %v1515 = vmul.f32 %v1508, %v1513
  %1517 = vrot.lane.b32.xlu0 %v1515, 32
  %v1518 = vpop.permute.xlu0 %1517
  %v1520 = vadd.f32 %v1510, %v1518
  %v1521 = vtanh.pop %v1520
  %1523 = vrot.lane.b32.xlu0 %v1521, 64
  %v1524 = vpop.permute.xlu0 %1523
  %v1526 = vmul.f32 %v1508, %v1524
  %1528 = vrot.lane.b32.xlu0 %v1429, 32
  %v1529 = vpop.permute.xlu0 %1528
  %1531 = vst.msk [vmem:[#allocation2 + $0x28] sm:$0xff] %vm313, %v1529
  %1533 = vrot.lane.b32.xlu0 %v1526, 32
  %v1534 = vpop.permute.xlu0 %1533
  %1536 = vst.msk [vmem:[#allocation3 + $0x10] sm:$0xff] %vm313, %v1534
  %v1537 = vsel %vm313, %v1529, 0
  %1539 = vmatprep.subr.mxu0 0.0
  %1540 = vmatpush1.msra.mxu0 0.0
  %1541 = vmatprep.subr.mxu0 0.0
  %1542 = vmatpush1.msra.mxu0 0.0
  %1543 = vmatprep.subr.mxu0 0.0
  %1544 = vmatpush1.msra.mxu0 0.0
  %1545 = vmatprep.subr.mxu0 0.0
  %1546 = vmatpush1.msra.mxu0 0.0
  %1547 = vmatprep.subr.mxu0 0.0
  %1548 = vmatpush1.msra.mxu0 0.0
  %1549 = vmatprep.subr.mxu0 0.0
  %1550 = vmatpush1.msra.mxu0 0.0
  %1551 = vmatprep.subr.mxu0 0.0
  %1552 = vmatpush1.msra.mxu0 0.0
  %1553 = vmatprep.subr.mxu0 0.0
  %1554 = vmatpush1.msra.mxu0 0.0
  %1555 = vmatprep.subr.mxu0 0.0
  %1556 = vmatpush1.msra.mxu0 0.0
  %1557 = vmatprep.subr.mxu0 0.0
  %1558 = vmatpush1.msra.mxu0 0.0
  %1559 = vmatprep.subr.mxu0 0.0
  %1560 = vmatpush1.msra.mxu0 0.0
  %1561 = vmatprep.subr.mxu0 0.0
  %1562 = vmatpush1.msra.mxu0 0.0
  %1563 = vmatprep.subr.mxu0 0.0
  %1564 = vmatpush1.msra.mxu0 %v308
  %1565 = vmatprep.subr.mxu0 0.0
  %1566 = vmatpush1.msra.mxu0 %v307
  %1567 = vmatprep.subr.mxu0 0.0
  %1568 = vmatpush1.msra.mxu0 %v306
  %1569 = vmatprep.subr.mxu0 0.0
  %1570 = vmatpush1.msra.mxu0 %v305
  %1571 = vmatprep.subr.mxu0 0.0
  %1572 = vmatpush2.msra.mxu0 0.0
  %1573 = vmatprep.subr.mxu0 0.0
  %1574 = vmatpush2.msra.mxu0 0.0
  %1575 = vmatprep.subr.mxu0 0.0
  %1576 = vmatpush2.msra.mxu0 0.0
  %1577 = vmatprep.subr.mxu0 0.0
  %1578 = vmatpush2.msra.mxu0 0.0
  %1579 = vmatprep.subr.mxu0 0.0
  %1580 = vmatpush2.msra.mxu0 0.0
  %1581 = vmatprep.subr.mxu0 0.0
  %1582 = vmatpush2.msra.mxu0 0.0
  %1583 = vmatprep.subr.mxu0 0.0
  %1584 = vmatpush2.msra.mxu0 0.0
  %1585 = vmatprep.subr.mxu0 0.0
  %1586 = vmatpush2.msra.mxu0 0.0
  %1587 = vmatprep.subr.mxu0 0.0
  %1588 = vmatpush2.msra.mxu0 0.0
  %1589 = vmatprep.subr.mxu0 0.0
  %1590 = vmatpush2.msra.mxu0 0.0
  %1591 = vmatprep.subr.mxu0 0.0
  %1592 = vmatpush2.msra.mxu0 0.0
  %1593 = vmatprep.subr.mxu0 0.0
  %1594 = vmatpush2.msra.mxu0 0.0
  %1595 = vmatprep.subr.mxu0 0.0
  %1596 = vmatpush2.msra.mxu0 0.0
  %1597 = vmatprep.subr.mxu0 0.0
  %1598 = vmatpush2.msra.mxu0 0.0
  %1599 = vmatprep.subr.mxu0 0.0
  %1600 = vmatpush2.msra.mxu0 0.0
  %1601 = vmatprep.subr.mxu0 0.0
  %1602 = vmatpush2.msra.mxu0 0.0
  %1603 = vmatprep.mubr.f32.mxu0 0.0
  %1604 = vmatmul.mubr.f32.gmra.mxu0 %v1537
  %v1605 = vpop.f32.mrf.mxu0
  %v1606 = vadd.f32 0.0, %v1605
  %v1607 = vpop.f32.mrf.mxu0
  %1608 = vdwg.mxu0
  %v1609 = vadd.f32 %v177, %v1606
  %v1610 = vxor.u32 %v1609, 2147483648
  %v1611 = vmul.f32 %v1610, 1.442695
  %v1612 = vpow.pop %v1611
  %v1613 = vadd.f32 %v1612, 1.0
  %v1614 = vrcp.pop %v1613
  %v1615 = vmul.f32 1.0, %v1614
  %v1616 = vtanh.pop %v1609
  %v1617 = vmul.f32 %v1615, %v1423
  %1619 = vrot.lane.b32.xlu0 %v1616, 64
  %v1620 = vpop.permute.xlu0 %1619
  %v1622 = vmul.f32 %v1615, %v1620
  %1624 = vrot.lane.b32.xlu0 %v1622, 32
  %v1625 = vpop.permute.xlu0 %1624
  %v1627 = vadd.f32 %v1617, %v1625
  %v1628 = vtanh.pop %v1627
  %1630 = vrot.lane.b32.xlu0 %v1628, 64
  %v1631 = vpop.permute.xlu0 %1630
  %v1633 = vmul.f32 %v1615, %v1631
  %v1634 = vsel %vm313, %v1534, 0
  %1636 = vmatprep.subr.mxu0 0.0
  %1637 = vmatpush1.msra.mxu0 0.0
  %1638 = vmatprep.subr.mxu0 0.0
  %1639 = vmatpush1.msra.mxu0 0.0
  %1640 = vmatprep.subr.mxu0 0.0
  %1641 = vmatpush1.msra.mxu0 0.0
  %1642 = vmatprep.subr.mxu0 0.0
  %1643 = vmatpush1.msra.mxu0 0.0
  %1644 = vmatprep.subr.mxu0 0.0
  %1645 = vmatpush1.msra.mxu0 0.0
  %1646 = vmatprep.subr.mxu0 0.0
  %1647 = vmatpush1.msra.mxu0 0.0
  %1648 = vmatprep.subr.mxu0 0.0
  %1649 = vmatpush1.msra.mxu0 0.0
  %1650 = vmatprep.subr.mxu0 0.0
  %1651 = vmatpush1.msra.mxu0 0.0
  %1652 = vmatprep.subr.mxu0 0.0
  %1653 = vmatpush1.msra.mxu0 0.0
  %1654 = vmatprep.subr.mxu0 0.0
  %1655 = vmatpush1.msra.mxu0 0.0
  %1656 = vmatprep.subr.mxu0 0.0
  %1657 = vmatpush1.msra.mxu0 0.0
  %1658 = vmatprep.subr.mxu0 0.0
  %1659 = vmatpush1.msra.mxu0 0.0
  %1660 = vmatprep.subr.mxu0 0.0
  %1661 = vmatpush1.msra.mxu0 %v312
  %1662 = vmatprep.subr.mxu0 0.0
  %1663 = vmatpush1.msra.mxu0 %v311
  %1664 = vmatprep.subr.mxu0 0.0
  %1665 = vmatpush1.msra.mxu0 %v310
  %1666 = vmatprep.subr.mxu0 0.0
  %1667 = vmatpush1.msra.mxu0 %v309
  %1668 = vmatprep.subr.mxu0 0.0
  %1669 = vmatpush2.msra.mxu0 0.0
  %1670 = vmatprep.subr.mxu0 0.0
  %1671 = vmatpush2.msra.mxu0 0.0
  %1672 = vmatprep.subr.mxu0 0.0
  %1673 = vmatpush2.msra.mxu0 0.0
  %1674 = vmatprep.subr.mxu0 0.0
  %1675 = vmatpush2.msra.mxu0 0.0
  %1676 = vmatprep.subr.mxu0 0.0
  %1677 = vmatpush2.msra.mxu0 0.0
  %1678 = vmatprep.subr.mxu0 0.0
  %1679 = vmatpush2.msra.mxu0 0.0
  %1680 = vmatprep.subr.mxu0 0.0
  %1681 = vmatpush2.msra.mxu0 0.0
  %1682 = vmatprep.subr.mxu0 0.0
  %1683 = vmatpush2.msra.mxu0 0.0
  %1684 = vmatprep.subr.mxu0 0.0
  %1685 = vmatpush2.msra.mxu0 0.0
  %1686 = vmatprep.subr.mxu0 0.0
  %1687 = vmatpush2.msra.mxu0 0.0
  %1688 = vmatprep.subr.mxu0 0.0
  %1689 = vmatpush2.msra.mxu0 0.0
  %1690 = vmatprep.subr.mxu0 0.0
  %1691 = vmatpush2.msra.mxu0 0.0
  %1692 = vmatprep.subr.mxu0 0.0
  %1693 = vmatpush2.msra.mxu0 0.0
  %1694 = vmatprep.subr.mxu0 0.0
  %1695 = vmatpush2.msra.mxu0 0.0
  %1696 = vmatprep.subr.mxu0 0.0
  %1697 = vmatpush2.msra.mxu0 0.0
  %1698 = vmatprep.subr.mxu0 0.0
  %1699 = vmatpush2.msra.mxu0 0.0
  %1700 = vmatprep.mubr.f32.mxu0 0.0
  %1701 = vmatmul.mubr.f32.gmra.mxu0 %v1634
  %v1702 = vpop.f32.mrf.mxu0
  %v1703 = vadd.f32 0.0, %v1702
  %v1704 = vpop.f32.mrf.mxu0
  %1705 = vdwg.mxu0
  %v1706 = vadd.f32 %v272, %v1703
  %v1707 = vxor.u32 %v1706, 2147483648
  %v1708 = vmul.f32 %v1707, 1.442695
  %v1709 = vpow.pop %v1708
  %v1710 = vadd.f32 %v1709, 1.0
  %v1711 = vrcp.pop %v1710
  %v1712 = vmul.f32 1.0, %v1711
  %v1713 = vtanh.pop %v1706
  %v1714 = vmul.f32 %v1712, %v1520
  %1716 = vrot.lane.b32.xlu0 %v1713, 64
  %v1717 = vpop.permute.xlu0 %1716
  %v1719 = vmul.f32 %v1712, %v1717
  %1721 = vrot.lane.b32.xlu0 %v1719, 32
  %v1722 = vpop.permute.xlu0 %1721
  %v1724 = vadd.f32 %v1714, %v1722
  %v1725 = vtanh.pop %v1724
  %1727 = vrot.lane.b32.xlu0 %v1725, 64
  %v1728 = vpop.permute.xlu0 %1727
  %v1730 = vmul.f32 %v1712, %v1728
  %1732 = vrot.lane.b32.xlu0 %v1633, 32
  %v1733 = vpop.permute.xlu0 %1732
  %1735 = vst.msk [vmem:[#allocation2 + $0x30] sm:$0xff] %vm313, %v1733
  %1737 = vrot.lane.b32.xlu0 %v1730, 32
  %v1738 = vpop.permute.xlu0 %1737
  %1740 = vst.msk [vmem:[#allocation3 + $0x8] sm:$0xff] %vm313, %v1738
  %v1741 = vsel %vm313, %v1733, 0
  %1743 = vmatprep.subr.mxu0 0.0
  %1744 = vmatpush1.msra.mxu0 0.0
  %1745 = vmatprep.subr.mxu0 0.0
  %1746 = vmatpush1.msra.mxu0 0.0
  %1747 = vmatprep.subr.mxu0 0.0
  %1748 = vmatpush1.msra.mxu0 0.0
  %1749 = vmatprep.subr.mxu0 0.0
  %1750 = vmatpush1.msra.mxu0 0.0
  %1751 = vmatprep.subr.mxu0 0.0
  %1752 = vmatpush1.msra.mxu0 0.0
  %1753 = vmatprep.subr.mxu0 0.0
  %1754 = vmatpush1.msra.mxu0 0.0
  %1755 = vmatprep.subr.mxu0 0.0
  %1756 = vmatpush1.msra.mxu0 0.0
  %1757 = vmatprep.subr.mxu0 0.0
  %1758 = vmatpush1.msra.mxu0 0.0
  %1759 = vmatprep.subr.mxu0 0.0
  %1760 = vmatpush1.msra.mxu0 0.0
  %1761 = vmatprep.subr.mxu0 0.0
  %1762 = vmatpush1.msra.mxu0 0.0
  %1763 = vmatprep.subr.mxu0 0.0
  %1764 = vmatpush1.msra.mxu0 0.0
  %1765 = vmatprep.subr.mxu0 0.0
  %1766 = vmatpush1.msra.mxu0 0.0
  %1767 = vmatprep.subr.mxu0 0.0
  %1768 = vmatpush1.msra.mxu0 %v308
  %1769 = vmatprep.subr.mxu0 0.0
  %1770 = vmatpush1.msra.mxu0 %v307
  %1771 = vmatprep.subr.mxu0 0.0
  %1772 = vmatpush1.msra.mxu0 %v306
  %1773 = vmatprep.subr.mxu0 0.0
  %1774 = vmatpush1.msra.mxu0 %v305
  %1775 = vmatprep.subr.mxu0 0.0
  %1776 = vmatpush2.msra.mxu0 0.0
  %1777 = vmatprep.subr.mxu0 0.0
  %1778 = vmatpush2.msra.mxu0 0.0
  %1779 = vmatprep.subr.mxu0 0.0
  %1780 = vmatpush2.msra.mxu0 0.0
  %1781 = vmatprep.subr.mxu0 0.0
  %1782 = vmatpush2.msra.mxu0 0.0
  %1783 = vmatprep.subr.mxu0 0.0
  %1784 = vmatpush2.msra.mxu0 0.0
  %1785 = vmatprep.subr.mxu0 0.0
  %1786 = vmatpush2.msra.mxu0 0.0
  %1787 = vmatprep.subr.mxu0 0.0
  %1788 = vmatpush2.msra.mxu0 0.0
  %1789 = vmatprep.subr.mxu0 0.0
  %1790 = vmatpush2.msra.mxu0 0.0
  %1791 = vmatprep.subr.mxu0 0.0
  %1792 = vmatpush2.msra.mxu0 0.0
  %1793 = vmatprep.subr.mxu0 0.0
  %1794 = vmatpush2.msra.mxu0 0.0
  %1795 = vmatprep.subr.mxu0 0.0
  %1796 = vmatpush2.msra.mxu0 0.0
  %1797 = vmatprep.subr.mxu0 0.0
  %1798 = vmatpush2.msra.mxu0 0.0
  %1799 = vmatprep.subr.mxu0 0.0
  %1800 = vmatpush2.msra.mxu0 0.0
  %1801 = vmatprep.subr.mxu0 0.0
  %1802 = vmatpush2.msra.mxu0 0.0
  %1803 = vmatprep.subr.mxu0 0.0
  %1804 = vmatpush2.msra.mxu0 0.0
  %1805 = vmatprep.subr.mxu0 0.0
  %1806 = vmatpush2.msra.mxu0 0.0
  %1807 = vmatprep.mubr.f32.mxu0 0.0
  %1808 = vmatmul.mubr.f32.gmra.mxu0 %v1741
  %v1809 = vpop.f32.mrf.mxu0
  %v1810 = vadd.f32 0.0, %v1809
  %v1811 = vpop.f32.mrf.mxu0
  %1812 = vdwg.mxu0
  %v1813 = vadd.f32 %v182, %v1810
  %v1814 = vxor.u32 %v1813, 2147483648
  %v1815 = vmul.f32 %v1814, 1.442695
  %v1816 = vpow.pop %v1815
  %v1817 = vadd.f32 %v1816, 1.0
  %v1818 = vrcp.pop %v1817
  %v1819 = vmul.f32 1.0, %v1818
  %v1820 = vtanh.pop %v1813
  %v1821 = vmul.f32 %v1819, %v1627
  %1823 = vrot.lane.b32.xlu0 %v1820, 64
  %v1824 = vpop.permute.xlu0 %1823
  %v1826 = vmul.f32 %v1819, %v1824
  %1828 = vrot.lane.b32.xlu0 %v1826, 32
  %v1829 = vpop.permute.xlu0 %1828
  %v1831 = vadd.f32 %v1821, %v1829
  %v1832 = vtanh.pop %v1831
  %1834 = vrot.lane.b32.xlu0 %v1832, 64
  %v1835 = vpop.permute.xlu0 %1834
  %v1837 = vmul.f32 %v1819, %v1835
  %v1838 = vsel %vm313, %v1738, 0
  %1840 = vmatprep.subr.mxu0 0.0
  %1841 = vmatpush1.msra.mxu0 0.0
  %1842 = vmatprep.subr.mxu0 0.0
  %1843 = vmatpush1.msra.mxu0 0.0
  %1844 = vmatprep.subr.mxu0 0.0
  %1845 = vmatpush1.msra.mxu0 0.0
  %1846 = vmatprep.subr.mxu0 0.0
  %1847 = vmatpush1.msra.mxu0 0.0
  %1848 = vmatprep.subr.mxu0 0.0
  %1849 = vmatpush1.msra.mxu0 0.0
  %1850 = vmatprep.subr.mxu0 0.0
  %1851 = vmatpush1.msra.mxu0 0.0
  %1852 = vmatprep.subr.mxu0 0.0
  %1853 = vmatpush1.msra.mxu0 0.0
  %1854 = vmatprep.subr.mxu0 0.0
  %1855 = vmatpush1.msra.mxu0 0.0
  %1856 = vmatprep.subr.mxu0 0.0
  %1857 = vmatpush1.msra.mxu0 0.0
  %1858 = vmatprep.subr.mxu0 0.0
  %1859 = vmatpush1.msra.mxu0 0.0
  %1860 = vmatprep.subr.mxu0 0.0
  %1861 = vmatpush1.msra.mxu0 0.0
  %1862 = vmatprep.subr.mxu0 0.0
  %1863 = vmatpush1.msra.mxu0 0.0
  %1864 = vmatprep.subr.mxu0 0.0
  %1865 = vmatpush1.msra.mxu0 %v312
  %1866 = vmatprep.subr.mxu0 0.0
  %1867 = vmatpush1.msra.mxu0 %v311
  %1868 = vmatprep.subr.mxu0 0.0
  %1869 = vmatpush1.msra.mxu0 %v310
  %1870 = vmatprep.subr.mxu0 0.0
  %1871 = vmatpush1.msra.mxu0 %v309
  %1872 = vmatprep.subr.mxu0 0.0
  %1873 = vmatpush2.msra.mxu0 0.0
  %1874 = vmatprep.subr.mxu0 0.0
  %1875 = vmatpush2.msra.mxu0 0.0
  %1876 = vmatprep.subr.mxu0 0.0
  %1877 = vmatpush2.msra.mxu0 0.0
  %1878 = vmatprep.subr.mxu0 0.0
  %1879 = vmatpush2.msra.mxu0 0.0
  %1880 = vmatprep.subr.mxu0 0.0
  %1881 = vmatpush2.msra.mxu0 0.0
  %1882 = vmatprep.subr.mxu0 0.0
  %1883 = vmatpush2.msra.mxu0 0.0
  %1884 = vmatprep.subr.mxu0 0.0
  %1885 = vmatpush2.msra.mxu0 0.0
  %1886 = vmatprep.subr.mxu0 0.0
  %1887 = vmatpush2.msra.mxu0 0.0
  %1888 = vmatprep.subr.mxu0 0.0
  %1889 = vmatpush2.msra.mxu0 0.0
  %1890 = vmatprep.subr.mxu0 0.0
  %1891 = vmatpush2.msra.mxu0 0.0
  %1892 = vmatprep.subr.mxu0 0.0
  %1893 = vmatpush2.msra.mxu0 0.0
  %1894 = vmatprep.subr.mxu0 0.0
  %1895 = vmatpush2.msra.mxu0 0.0
  %1896 = vmatprep.subr.mxu0 0.0
  %1897 = vmatpush2.msra.mxu0 0.0
  %1898 = vmatprep.subr.mxu0 0.0
  %1899 = vmatpush2.msra.mxu0 0.0
  %1900 = vmatprep.subr.mxu0 0.0
  %1901 = vmatpush2.msra.mxu0 0.0
  %1902 = vmatprep.subr.mxu0 0.0
  %1903 = vmatpush2.msra.mxu0 0.0
  %1904 = vmatprep.mubr.f32.mxu0 0.0
  %1905 = vmatmul.mubr.f32.gmra.mxu0 %v1838
  %v1906 = vpop.f32.mrf.mxu0
  %v1907 = vadd.f32 0.0, %v1906
  %v1908 = vpop.f32.mrf.mxu0
  %1909 = vdwg.mxu0
  %v1910 = vadd.f32 %v267, %v1907
  %v1911 = vxor.u32 %v1910, 2147483648
  %v1912 = vmul.f32 %v1911, 1.442695
  %v1913 = vpow.pop %v1912
  %v1914 = vadd.f32 %v1913, 1.0
  %v1915 = vrcp.pop %v1914
  %v1916 = vmul.f32 1.0, %v1915
  %v1917 = vtanh.pop %v1910
  %v1918 = vmul.f32 %v1916, %v1724
  %1920 = vrot.lane.b32.xlu0 %v1917, 64
  %v1921 = vpop.permute.xlu0 %1920
  %v1923 = vmul.f32 %v1916, %v1921
  %1925 = vrot.lane.b32.xlu0 %v1923, 32
  %v1926 = vpop.permute.xlu0 %1925
  %v1928 = vadd.f32 %v1918, %v1926
  %v1929 = vtanh.pop %v1928
  %1931 = vrot.lane.b32.xlu0 %v1929, 64
  %v1932 = vpop.permute.xlu0 %1931
  %v1934 = vmul.f32 %v1916, %v1932
  %1936 = vrot.lane.b32.xlu0 %v1837, 32
  %v1937 = vpop.permute.xlu0 %1936
  %1939 = vst.msk [vmem:[#allocation2 + $0x38] sm:$0xff] %vm313, %v1937
  %1941 = vrot.lane.b32.xlu0 %v1934, 32
  %v1942 = vpop.permute.xlu0 %1941
  %1944 = vst.msk [vmem:[#allocation3] sm:$0xff] %vm313, %v1942
  %v1945 = vld [vmem:[#allocation2] sm:$0xff]
  %v1946 = vld [vmem:[#allocation2 + $0x8] sm:$0xff]
  %v1947 = vld [vmem:[#allocation2 + $0x10] sm:$0xff]
  %v1948 = vld [vmem:[#allocation2 + $0x18] sm:$0xff]
  %v1949 = vld [vmem:[#allocation2 + $0x20] sm:$0xff]
  %v1950 = vld [vmem:[#allocation2 + $0x28] sm:$0xff]
  %v1951 = vld [vmem:[#allocation2 + $0x30] sm:$0xff]
  %v1952 = vld [vmem:[#allocation2 + $0x38] sm:$0xff]
  %v1953 = vld [vmem:[#allocation3] sm:$0xff]
  %v1954 = vld [vmem:[#allocation3 + $0x8] sm:$0xff]
  %v1955 = vld [vmem:[#allocation3 + $0x10] sm:$0xff]
  %v1956 = vld [vmem:[#allocation3 + $0x18] sm:$0xff]
  %v1957 = vld [vmem:[#allocation3 + $0x20] sm:$0xff]
  %v1958 = vld [vmem:[#allocation3 + $0x28] sm:$0xff]
  %v1959 = vld [vmem:[#allocation3 + $0x30] sm:$0xff]
  %v1960 = vld [vmem:[#allocation3 + $0x38] sm:$0xff]
  %1969 = vrot.lane.b32.xlu0 %v1953, 32
  %v1970 = vpop.permute.xlu0 %1969
  %1971 = vrot.lane.b32.xlu0 %v1954, 32
  %v1972 = vpop.permute.xlu0 %1971
  %1973 = vrot.lane.b32.xlu0 %v1955, 32
  %v1974 = vpop.permute.xlu0 %1973
  %1975 = vrot.lane.b32.xlu0 %v1956, 32
  %v1976 = vpop.permute.xlu0 %1975
  %1977 = vrot.lane.b32.xlu0 %v1957, 32
  %v1978 = vpop.permute.xlu0 %1977
  %1979 = vrot.lane.b32.xlu0 %v1958, 32
  %v1980 = vpop.permute.xlu0 %1979
  %1981 = vrot.lane.b32.xlu0 %v1959, 32
  %v1982 = vpop.permute.xlu0 %1981
  %1983 = vrot.lane.b32.xlu0 %v1960, 32
  %v1984 = vpop.permute.xlu0 %1983
  %v1993 = vsel %vm313, %v1945, %v1970
  %v1994 = vsel %vm313, %v1946, %v1972
  %v1995 = vsel %vm313, %v1947, %v1974
  %v1996 = vsel %vm313, %v1948, %v1976
  %v1997 = vsel %vm313, %v1949, %v1978
  %v1998 = vsel %vm313, %v1950, %v1980
  %v1999 = vsel %vm313, %v1951, %v1982
  %v2000 = vsel %vm313, %v1952, %v1984
  %v2001 = vld [vmem:[%s7] sm:$0xff]
  %v2002 = vld [vmem:[%s7 + $0x8] sm:$0xff]
  %v2003 = vld [vmem:[%s7 + $0x10] sm:$0xff]
  %v2004 = vld [vmem:[%s7 + $0x18] sm:$0xff]
  %v2005 = vld [vmem:[%s7 + $0x20] sm:$0xff]
  %v2006 = vld [vmem:[%s7 + $0x28] sm:$0xff]
  %v2007 = vld [vmem:[%s7 + $0x30] sm:$0xff]
  %v2008 = vld [vmem:[%s7 + $0x38] sm:$0xff]
  %v2009 = vld [vmem:[%s8] sm:$0x1]
  %v2011 = vlaneseq
  %v2012 = vshrl.u32 %v2011, 7
  %v2013 = vsub.s32 0, %v2012
  %v2014 = vrot.slane %v2009, %v2013
  %v2017 = vsel %vm55, %v1993, 0
  %v2020 = vsel %vm55, %v1994, 0
  %v2023 = vsel %vm55, %v1995, 0
  %v2026 = vsel %vm55, %v1996, 0
  %v2029 = vsel %vm55, %v1997, 0
  %v2032 = vsel %vm55, %v1998, 0
  %v2035 = vsel %vm55, %v1999, 0
  %v2038 = vsel %vm55, %v2000, 0
  %2040 = vmatprep.subr.mxu0 0.0
  %2041 = vmatpush1.msra.mxu0 0.0
  %2042 = vmatprep.subr.mxu0 0.0
  %2043 = vmatpush1.msra.mxu0 0.0
  %2044 = vmatprep.subr.mxu0 0.0
  %2045 = vmatpush1.msra.mxu0 0.0
  %2046 = vmatprep.subr.mxu0 0.0
  %2047 = vmatpush1.msra.mxu0 0.0
  %2048 = vmatprep.subr.mxu0 0.0
  %2049 = vmatpush1.msra.mxu0 0.0
  %2050 = vmatprep.subr.mxu0 0.0
  %2051 = vmatpush1.msra.mxu0 0.0
  %2052 = vmatprep.subr.mxu0 0.0
  %2053 = vmatpush1.msra.mxu0 0.0
  %2054 = vmatprep.subr.mxu0 0.0
  %2055 = vmatpush1.msra.mxu0 0.0
  %2056 = vmatprep.subr.mxu0 0.0
  %2057 = vmatpush1.msra.mxu0 %v2008
  %2058 = vmatprep.subr.mxu0 0.0
  %2059 = vmatpush1.msra.mxu0 %v2007
  %2060 = vmatprep.subr.mxu0 0.0
  %2061 = vmatpush1.msra.mxu0 %v2006
  %2062 = vmatprep.subr.mxu0 0.0
  %2063 = vmatpush1.msra.mxu0 %v2005
  %2064 = vmatprep.subr.mxu0 0.0
  %2065 = vmatpush1.msra.mxu0 %v2004
  %2066 = vmatprep.subr.mxu0 0.0
  %2067 = vmatpush1.msra.mxu0 %v2003
  %2068 = vmatprep.subr.mxu0 0.0
  %2069 = vmatpush1.msra.mxu0 %v2002
  %2070 = vmatprep.subr.mxu0 0.0
  %2071 = vmatpush1.msra.mxu0 %v2001
  %2072 = vmatprep.subr.mxu0 0.0
  %2073 = vmatpush2.msra.mxu0 0.0
  %2074 = vmatprep.subr.mxu0 0.0
  %2075 = vmatpush2.msra.mxu0 0.0
  %2076 = vmatprep.subr.mxu0 0.0
  %2077 = vmatpush2.msra.mxu0 0.0
  %2078 = vmatprep.subr.mxu0 0.0
  %2079 = vmatpush2.msra.mxu0 0.0
  %2080 = vmatprep.subr.mxu0 0.0
  %2081 = vmatpush2.msra.mxu0 0.0
  %2082 = vmatprep.subr.mxu0 0.0
  %2083 = vmatpush2.msra.mxu0 0.0
  %2084 = vmatprep.subr.mxu0 0.0
  %2085 = vmatpush2.msra.mxu0 0.0
  %2086 = vmatprep.subr.mxu0 0.0
  %2087 = vmatpush2.msra.mxu0 0.0
  %2088 = vmatprep.subr.mxu0 0.0
  %2089 = vmatpush2.msra.mxu0 0.0
  %2090 = vmatprep.subr.mxu0 0.0
  %2091 = vmatpush2.msra.mxu0 0.0
  %2092 = vmatprep.subr.mxu0 0.0
  %2093 = vmatpush2.msra.mxu0 0.0
  %2094 = vmatprep.subr.mxu0 0.0
  %2095 = vmatpush2.msra.mxu0 0.0
  %2096 = vmatprep.subr.mxu0 0.0
  %2097 = vmatpush2.msra.mxu0 0.0
  %2098 = vmatprep.subr.mxu0 0.0
  %2099 = vmatpush2.msra.mxu0 0.0
  %2100 = vmatprep.subr.mxu0 0.0
  %2101 = vmatpush2.msra.mxu0 0.0
  %2102 = vmatprep.subr.mxu0 0.0
  %2103 = vmatpush2.msra.mxu0 0.0
  %2104 = vmatprep.mubr.f32.mxu0 0.0
  %2105 = vmatmul.mubr.f32.gmra.mxu0 %v2017
  %v2106 = vpop.f32.mrf.mxu0
  %v2107 = vadd.f32 %v2014, %v2106
  %v2108 = vpop.f32.mrf.mxu0
  %2109 = vmatprep.mubr.f32.mxu0 0.0
  %2110 = vmatmul.mubr.f32.gmra.mxu0 %v2020
  %v2111 = vpop.f32.mrf.mxu0
  %v2112 = vadd.f32 %v2014, %v2111
  %v2113 = vpop.f32.mrf.mxu0
  %2114 = vmatprep.mubr.f32.mxu0 0.0
  %2115 = vmatmul.mubr.f32.gmra.mxu0 %v2023
  %v2116 = vpop.f32.mrf.mxu0
  %v2117 = vadd.f32 %v2014, %v2116
  %v2118 = vpop.f32.mrf.mxu0
  %2119 = vmatprep.mubr.f32.mxu0 0.0
  %2120 = vmatmul.mubr.f32.gmra.mxu0 %v2026
  %v2121 = vpop.f32.mrf.mxu0
  %v2122 = vadd.f32 %v2014, %v2121
  %v2123 = vpop.f32.mrf.mxu0
  %2124 = vmatprep.mubr.f32.mxu0 0.0
  %2125 = vmatmul.mubr.f32.gmra.mxu0 %v2029
  %v2126 = vpop.f32.mrf.mxu0
  %v2127 = vadd.f32 %v2014, %v2126
  %v2128 = vpop.f32.mrf.mxu0
  %2129 = vmatprep.mubr.f32.mxu0 0.0
  %2130 = vmatmul.mubr.f32.gmra.mxu0 %v2032
  %v2131 = vpop.f32.mrf.mxu0
  %v2132 = vadd.f32 %v2014, %v2131
  %v2133 = vpop.f32.mrf.mxu0
  %2134 = vmatprep.mubr.f32.mxu0 0.0
  %2135 = vmatmul.mubr.f32.gmra.mxu0 %v2035
  %v2136 = vpop.f32.mrf.mxu0
  %v2137 = vadd.f32 %v2014, %v2136
  %v2138 = vpop.f32.mrf.mxu0
  %2139 = vmatprep.mubr.f32.mxu0 0.0
  %2140 = vmatmul.mubr.f32.gmra.mxu0 %v2038
  %v2141 = vpop.f32.mrf.mxu0
  %v2142 = vadd.f32 %v2014, %v2141
  %v2143 = vpop.f32.mrf.mxu0
  %2144 = vdwg.mxu0
  %2145 = vst.msk [vmem:[%s9] sm:$0xff] %vm313, %v2107
  %2146 = vst.msk [vmem:[%s9 + $0x8] sm:$0xff] %vm313, %v2112
  %2147 = vst.msk [vmem:[%s9 + $0x10] sm:$0xff] %vm313, %v2117
  %2148 = vst.msk [vmem:[%s9 + $0x18] sm:$0xff] %vm313, %v2122
  %2149 = vst.msk [vmem:[%s9 + $0x20] sm:$0xff] %vm313, %v2127
  %2150 = vst.msk [vmem:[%s9 + $0x28] sm:$0xff] %vm313, %v2132
  %2151 = vst.msk [vmem:[%s9 + $0x30] sm:$0xff] %vm313, %v2137
  %2152 = vst.msk [vmem:[%s9 + $0x38] sm:$0xff] %vm313, %v2142
  // Predicated region
  $region38: #{forward.3} parent=0 // pred_check
    _
  $region39: #{forward.3} parent=0 // pred_check_branch
    %2154 = sbr.rel (0) target = $region41
  $region40: #{forward.3} parent=0 // pred_region
    _
  $region41: #{forward.3} parent=0 // pred_fallthru
    _
  // Predicated region
  $region42: #{forward.3} parent=0 // pred_check
    _
  $region43: #{forward.3} parent=0 // pred_check_branch
    %2156 = sbr.rel (0) target = $region45
  $region44: #{forward.3} parent=0 // pred_region
    _
  $region45: #{forward.3} parent=0 // pred_fallthru
    _

// kernel: forward.2
$region0: #{forward.2}
  #allocation0 [shape = 'u32[]', space=smem, size = 0x4, offset = 0x4, fixed_abs, tag = 'smem constant byte address 0x4 - core index']
  #allocation1 [shape = 'u32[144,128]{1,0:T(1,128)}', space=vmem, size = 0x12000, scoped, tag = 'internal scratch']
  #allocation2 [shape = 'f32[64,32]{1,0:T(8,128)}', space=vmem, size = 0x8000, scoped, tag = 'scratch operand']
  #allocation3 [shape = 'f32[64,32]{1,0:T(8,128)}', space=vmem, size = 0x8000, scoped, tag = 'scratch operand']
  %s0 = inlined_call_operand.vmem [shape: f32[64,32], index: 0, kind: input, shape index: {}]
  %s1 = inlined_call_operand.vmem [shape: f32[32,128], index: 1, kind: input, shape index: {}]
  %s2 = inlined_call_operand.vmem [shape: f32[32,128], index: 2, kind: input, shape index: {}]
  %s3 = inlined_call_operand.vmem [shape: f32[1,128], index: 3, kind: input, shape index: {}]
  %s4 = inlined_call_operand.vmem [shape: f32[32,128], index: 4, kind: input, shape index: {}]
  %s5 = inlined_call_operand.vmem [shape: f32[32,128], index: 5, kind: input, shape index: {}]
  %s6 = inlined_call_operand.vmem [shape: f32[1,128], index: 6, kind: input, shape index: {}]
  %s7 = inlined_call_operand.vmem [shape: f32[64,64], index: 7, kind: output, shape index: {}]
  %s8 = sld [smem:[#allocation0]]
  $region38: #{forward.2} parent=0
    _
  %s10 = ssub.s32 1, %s8
  %s11 = scalar_select 0, %s10, %s8
  // Predicated region
  $region2: #{forward.2} parent=0 // pred_check
    _
  $region3: #{forward.2} parent=0 // pred_check_branch
    %13 = sbr.rel (0) target = $region5
  $region4: #{forward.2} parent=0 // pred_region
    _
  $region5: #{forward.2} parent=0 // pred_fallthru
    _
  // Predicated region
  $region6: #{forward.2} parent=0 // pred_check
    _
  $region7: #{forward.2} parent=0 // pred_check_branch
    %15 = sbr.rel (0) target = $region9
  $region8: #{forward.2} parent=0 // pred_region
    _
  $region9: #{forward.2} parent=0 // pred_fallthru
    _
  // Predicated region
  $region10: #{forward.2} parent=0 // pred_check
    _
  $region11: #{forward.2} parent=0 // pred_check_branch
    %17 = sbr.rel (0) target = $region13
  $region12: #{forward.2} parent=0 // pred_region
    _
  $region13: #{forward.2} parent=0 // pred_fallthru
    _
  // Predicated region
  $region14: #{forward.2} parent=0 // pred_check
    _
  $region15: #{forward.2} parent=0 // pred_check_branch
    %19 = sbr.rel (0) target = $region17
  $region16: #{forward.2} parent=0 // pred_region
    _
  $region17: #{forward.2} parent=0 // pred_fallthru
    _
  // Predicated region
  $region18: #{forward.2} parent=0 // pred_check
    _
  $region19: #{forward.2} parent=0 // pred_check_branch
    %21 = sbr.rel (0) target = $region21
  $region20: #{forward.2} parent=0 // pred_region
    _
  $region21: #{forward.2} parent=0 // pred_fallthru
    _
  // Predicated region
  $region22: #{forward.2} parent=0 // pred_check
    _
  $region23: #{forward.2} parent=0 // pred_check_branch
    %23 = sbr.rel (0) target = $region25
  $region24: #{forward.2} parent=0 // pred_region
    _
  $region25: #{forward.2} parent=0 // pred_fallthru
    _
  // Predicated region
  $region26: #{forward.2} parent=0 // pred_check
    _
  $region27: #{forward.2} parent=0 // pred_check_branch
    %25 = sbr.rel (0) target = $region29
  $region28: #{forward.2} parent=0 // pred_region
    _
  $region29: #{forward.2} parent=0 // pred_fallthru
    _
  %v26 = vld [vmem:[%s0] sm:$0xff]
  %v27 = vld [vmem:[%s0 + $0x8] sm:$0xff]
  %v28 = vld [vmem:[%s0 + $0x10] sm:$0xff]
  %v29 = vld [vmem:[%s0 + $0x18] sm:$0xff]
  %v30 = vld [vmem:[%s0 + $0x20] sm:$0xff]
  %v31 = vld [vmem:[%s0 + $0x28] sm:$0xff]
  %v32 = vld [vmem:[%s0 + $0x30] sm:$0xff]
  %v33 = vld [vmem:[%s0 + $0x38] sm:$0xff]
  %v34 = vld [vmem:[%s1] sm:$0xff]
  %v35 = vld [vmem:[%s1 + $0x8] sm:$0xff]
  %v36 = vld [vmem:[%s1 + $0x10] sm:$0xff]
  %v37 = vld [vmem:[%s1 + $0x18] sm:$0xff]
  %v38 = vld [vmem:[%s3] sm:$0x1]
  %v40 = vlaneseq
  %v41 = vshrl.u32 %v40, 7
  %v42 = vsub.s32 0, %v41
  %v43 = vrot.slane %v38, %v42
  %vm45 = vcmask 261120
  %v47 = vsel %vm45, %v26, 0
  %v50 = vsel %vm45, %v27, 0
  %v53 = vsel %vm45, %v28, 0
  %v56 = vsel %vm45, %v29, 0
  %v59 = vsel %vm45, %v30, 0
  %v62 = vsel %vm45, %v31, 0
  %v65 = vsel %vm45, %v32, 0
  %v68 = vsel %vm45, %v33, 0
  %70 = vmatprep.subr.mxu0 0.0
  %71 = vmatpush1.msra.mxu0 0.0
  %72 = vmatprep.subr.mxu0 0.0
  %73 = vmatpush1.msra.mxu0 0.0
  %74 = vmatprep.subr.mxu0 0.0
  %75 = vmatpush1.msra.mxu0 0.0
  %76 = vmatprep.subr.mxu0 0.0
  %77 = vmatpush1.msra.mxu0 0.0
  %78 = vmatprep.subr.mxu0 0.0
  %79 = vmatpush1.msra.mxu0 0.0
  %80 = vmatprep.subr.mxu0 0.0
  %81 = vmatpush1.msra.mxu0 0.0
  %82 = vmatprep.subr.mxu0 0.0
  %83 = vmatpush1.msra.mxu0 0.0
  %84 = vmatprep.subr.mxu0 0.0
  %85 = vmatpush1.msra.mxu0 0.0
  %86 = vmatprep.subr.mxu0 0.0
  %87 = vmatpush1.msra.mxu0 0.0
  %88 = vmatprep.subr.mxu0 0.0
  %89 = vmatpush1.msra.mxu0 0.0
  %90 = vmatprep.subr.mxu0 0.0
  %91 = vmatpush1.msra.mxu0 0.0
  %92 = vmatprep.subr.mxu0 0.0
  %93 = vmatpush1.msra.mxu0 0.0
  %94 = vmatprep.subr.mxu0 0.0
  %95 = vmatpush1.msra.mxu0 %v37
  %96 = vmatprep.subr.mxu0 0.0
  %97 = vmatpush1.msra.mxu0 %v36
  %98 = vmatprep.subr.mxu0 0.0
  %99 = vmatpush1.msra.mxu0 %v35
  %100 = vmatprep.subr.mxu0 0.0
  %101 = vmatpush1.msra.mxu0 %v34
  %102 = vmatprep.subr.mxu0 0.0
  %103 = vmatpush2.msra.mxu0 0.0
  %104 = vmatprep.subr.mxu0 0.0
  %105 = vmatpush2.msra.mxu0 0.0
  %106 = vmatprep.subr.mxu0 0.0
  %107 = vmatpush2.msra.mxu0 0.0
  %108 = vmatprep.subr.mxu0 0.0
  %109 = vmatpush2.msra.mxu0 0.0
  %110 = vmatprep.subr.mxu0 0.0
  %111 = vmatpush2.msra.mxu0 0.0
  %112 = vmatprep.subr.mxu0 0.0
  %113 = vmatpush2.msra.mxu0 0.0
  %114 = vmatprep.subr.mxu0 0.0
  %115 = vmatpush2.msra.mxu0 0.0
  %116 = vmatprep.subr.mxu0 0.0
  %117 = vmatpush2.msra.mxu0 0.0
  %118 = vmatprep.subr.mxu0 0.0
  %119 = vmatpush2.msra.mxu0 0.0
  %120 = vmatprep.subr.mxu0 0.0
  %121 = vmatpush2.msra.mxu0 0.0
  %122 = vmatprep.subr.mxu0 0.0
  %123 = vmatpush2.msra.mxu0 0.0
  %124 = vmatprep.subr.mxu0 0.0
  %125 = vmatpush2.msra.mxu0 0.0
  %126 = vmatprep.subr.mxu0 0.0
  %127 = vmatpush2.msra.mxu0 0.0
  %128 = vmatprep.subr.mxu0 0.0
  %129 = vmatpush2.msra.mxu0 0.0
  %130 = vmatprep.subr.mxu0 0.0
  %131 = vmatpush2.msra.mxu0 0.0
  %132 = vmatprep.subr.mxu0 0.0
  %133 = vmatpush2.msra.mxu0 0.0
  %134 = vmatprep.mubr.f32.mxu0 0.0
  %135 = vmatmul.mubr.f32.gmra.mxu0 %v47
  %v136 = vpop.f32.mrf.mxu0
  %v137 = vadd.f32 %v43, %v136
  %v138 = vpop.f32.mrf.mxu0
  %139 = vmatprep.mubr.f32.mxu0 0.0
  %140 = vmatmul.mubr.f32.gmra.mxu0 %v50
  %v141 = vpop.f32.mrf.mxu0
  %v142 = vadd.f32 %v43, %v141
  %v143 = vpop.f32.mrf.mxu0
  %144 = vmatprep.mubr.f32.mxu0 0.0
  %145 = vmatmul.mubr.f32.gmra.mxu0 %v53
  %v146 = vpop.f32.mrf.mxu0
  %v147 = vadd.f32 %v43, %v146
  %v148 = vpop.f32.mrf.mxu0
  %149 = vmatprep.mubr.f32.mxu0 0.0
  %150 = vmatmul.mubr.f32.gmra.mxu0 %v56
  %v151 = vpop.f32.mrf.mxu0
  %v152 = vadd.f32 %v43, %v151
  %v153 = vpop.f32.mrf.mxu0
  %154 = vmatprep.mubr.f32.mxu0 0.0
  %155 = vmatmul.mubr.f32.gmra.mxu0 %v59
  %v156 = vpop.f32.mrf.mxu0
  %v157 = vadd.f32 %v43, %v156
  %v158 = vpop.f32.mrf.mxu0
  %159 = vmatprep.mubr.f32.mxu0 0.0
  %160 = vmatmul.mubr.f32.gmra.mxu0 %v62
  %v161 = vpop.f32.mrf.mxu0
  %v162 = vadd.f32 %v43, %v161
  %v163 = vpop.f32.mrf.mxu0
  %164 = vmatprep.mubr.f32.mxu0 0.0
  %165 = vmatmul.mubr.f32.gmra.mxu0 %v65
  %v166 = vpop.f32.mrf.mxu0
  %v167 = vadd.f32 %v43, %v166
  %v168 = vpop.f32.mrf.mxu0
  %169 = vmatprep.mubr.f32.mxu0 0.0
  %170 = vmatmul.mubr.f32.gmra.mxu0 %v68
  %v171 = vpop.f32.mrf.mxu0
  %v172 = vadd.f32 %v43, %v171
  %v173 = vpop.f32.mrf.mxu0
  %174 = vdwg.mxu0
  %v175 = vld [vmem:[%s4] sm:$0xff]
  %v176 = vld [vmem:[%s4 + $0x8] sm:$0xff]
  %v177 = vld [vmem:[%s4 + $0x10] sm:$0xff]
  %v178 = vld [vmem:[%s4 + $0x18] sm:$0xff]
  %v179 = vld [vmem:[%s6] sm:$0x1]
  %v181 = vlaneseq
  %v182 = vshrl.u32 %v181, 7
  %v183 = vsub.s32 0, %v182
  %v184 = vrot.slane %v179, %v183
  %186 = vmatprep.subr.mxu0 0.0
  %187 = vmatpush1.msra.mxu0 0.0
  %188 = vmatprep.subr.mxu0 0.0
  %189 = vmatpush1.msra.mxu0 0.0
  %190 = vmatprep.subr.mxu0 0.0
  %191 = vmatpush1.msra.mxu0 0.0
  %192 = vmatprep.subr.mxu0 0.0
  %193 = vmatpush1.msra.mxu0 0.0
  %194 = vmatprep.subr.mxu0 0.0
  %195 = vmatpush1.msra.mxu0 0.0
  %196 = vmatprep.subr.mxu0 0.0
  %197 = vmatpush1.msra.mxu0 0.0
  %198 = vmatprep.subr.mxu0 0.0
  %199 = vmatpush1.msra.mxu0 0.0
  %200 = vmatprep.subr.mxu0 0.0
  %201 = vmatpush1.msra.mxu0 0.0
  %202 = vmatprep.subr.mxu0 0.0
  %203 = vmatpush1.msra.mxu0 0.0
  %204 = vmatprep.subr.mxu0 0.0
  %205 = vmatpush1.msra.mxu0 0.0
  %206 = vmatprep.subr.mxu0 0.0
  %207 = vmatpush1.msra.mxu0 0.0
  %208 = vmatprep.subr.mxu0 0.0
  %209 = vmatpush1.msra.mxu0 0.0
  %210 = vmatprep.subr.mxu0 0.0
  %211 = vmatpush1.msra.mxu0 %v178
  %212 = vmatprep.subr.mxu0 0.0
  %213 = vmatpush1.msra.mxu0 %v177
  %214 = vmatprep.subr.mxu0 0.0
  %215 = vmatpush1.msra.mxu0 %v176
  %216 = vmatprep.subr.mxu0 0.0
  %217 = vmatpush1.msra.mxu0 %v175
  %218 = vmatprep.subr.mxu0 0.0
  %219 = vmatpush2.msra.mxu0 0.0
  %220 = vmatprep.subr.mxu0 0.0
  %221 = vmatpush2.msra.mxu0 0.0
  %222 = vmatprep.subr.mxu0 0.0
  %223 = vmatpush2.msra.mxu0 0.0
  %224 = vmatprep.subr.mxu0 0.0
  %225 = vmatpush2.msra.mxu0 0.0
  %226 = vmatprep.subr.mxu0 0.0
  %227 = vmatpush2.msra.mxu0 0.0
  %228 = vmatprep.subr.mxu0 0.0
  %229 = vmatpush2.msra.mxu0 0.0
  %230 = vmatprep.subr.mxu0 0.0
  %231 = vmatpush2.msra.mxu0 0.0
  %232 = vmatprep.subr.mxu0 0.0
  %233 = vmatpush2.msra.mxu0 0.0
  %234 = vmatprep.subr.mxu0 0.0
  %235 = vmatpush2.msra.mxu0 0.0
  %236 = vmatprep.subr.mxu0 0.0
  %237 = vmatpush2.msra.mxu0 0.0
  %238 = vmatprep.subr.mxu0 0.0
  %239 = vmatpush2.msra.mxu0 0.0
  %240 = vmatprep.subr.mxu0 0.0
  %241 = vmatpush2.msra.mxu0 0.0
  %242 = vmatprep.subr.mxu0 0.0
  %243 = vmatpush2.msra.mxu0 0.0
  %244 = vmatprep.subr.mxu0 0.0
  %245 = vmatpush2.msra.mxu0 0.0
  %246 = vmatprep.subr.mxu0 0.0
  %247 = vmatpush2.msra.mxu0 0.0
  %248 = vmatprep.subr.mxu0 0.0
  %249 = vmatpush2.msra.mxu0 0.0
  %250 = vmatprep.mubr.f32.mxu0 0.0
  %251 = vmatmul.mubr.f32.gmra.mxu0 %v47
  %v252 = vpop.f32.mrf.mxu0
  %v253 = vadd.f32 %v184, %v252
  %v254 = vpop.f32.mrf.mxu0
  %255 = vmatprep.mubr.f32.mxu0 0.0
  %256 = vmatmul.mubr.f32.gmra.mxu0 %v50
  %v257 = vpop.f32.mrf.mxu0
  %v258 = vadd.f32 %v184, %v257
  %v259 = vpop.f32.mrf.mxu0
  %260 = vmatprep.mubr.f32.mxu0 0.0
  %261 = vmatmul.mubr.f32.gmra.mxu0 %v53
  %v262 = vpop.f32.mrf.mxu0
  %v263 = vadd.f32 %v184, %v262
  %v264 = vpop.f32.mrf.mxu0
  %265 = vmatprep.mubr.f32.mxu0 0.0
  %266 = vmatmul.mubr.f32.gmra.mxu0 %v56
  %v267 = vpop.f32.mrf.mxu0
  %v268 = vadd.f32 %v184, %v267
  %v269 = vpop.f32.mrf.mxu0
  %270 = vmatprep.mubr.f32.mxu0 0.0
  %271 = vmatmul.mubr.f32.gmra.mxu0 %v59
  %v272 = vpop.f32.mrf.mxu0
  %v273 = vadd.f32 %v184, %v272
  %v274 = vpop.f32.mrf.mxu0
  %275 = vmatprep.mubr.f32.mxu0 0.0
  %276 = vmatmul.mubr.f32.gmra.mxu0 %v62
  %v277 = vpop.f32.mrf.mxu0
  %v278 = vadd.f32 %v184, %v277
  %v279 = vpop.f32.mrf.mxu0
  %280 = vmatprep.mubr.f32.mxu0 0.0
  %281 = vmatmul.mubr.f32.gmra.mxu0 %v65
  %v282 = vpop.f32.mrf.mxu0
  %v283 = vadd.f32 %v184, %v282
  %v284 = vpop.f32.mrf.mxu0
  %285 = vmatprep.mubr.f32.mxu0 0.0
  %286 = vmatmul.mubr.f32.gmra.mxu0 %v68
  %v287 = vpop.f32.mrf.mxu0
  %v288 = vadd.f32 %v184, %v287
  %v289 = vpop.f32.mrf.mxu0
  %290 = vdwg.mxu0
  %v291 = vld [vmem:[%s2] sm:$0xff]
  %v292 = vld [vmem:[%s2 + $0x8] sm:$0xff]
  %v293 = vld [vmem:[%s2 + $0x10] sm:$0xff]
  %v294 = vld [vmem:[%s2 + $0x18] sm:$0xff]
  %v295 = vld [vmem:[%s5] sm:$0xff]
  %v296 = vld [vmem:[%s5 + $0x8] sm:$0xff]
  %v297 = vld [vmem:[%s5 + $0x10] sm:$0xff]
  %v298 = vld [vmem:[%s5 + $0x18] sm:$0xff]
  %v300 = vsel %vm45, 0.0, 0
  %302 = vmatprep.subr.mxu0 0.0
  %303 = vmatpush1.msra.mxu0 0.0
  %304 = vmatprep.subr.mxu0 0.0
  %305 = vmatpush1.msra.mxu0 0.0
  %306 = vmatprep.subr.mxu0 0.0
  %307 = vmatpush1.msra.mxu0 0.0
  %308 = vmatprep.subr.mxu0 0.0
  %309 = vmatpush1.msra.mxu0 0.0
  %310 = vmatprep.subr.mxu0 0.0
  %311 = vmatpush1.msra.mxu0 0.0
  %312 = vmatprep.subr.mxu0 0.0
  %313 = vmatpush1.msra.mxu0 0.0
  %314 = vmatprep.subr.mxu0 0.0
  %315 = vmatpush1.msra.mxu0 0.0
  %316 = vmatprep.subr.mxu0 0.0
  %317 = vmatpush1.msra.mxu0 0.0
  %318 = vmatprep.subr.mxu0 0.0
  %319 = vmatpush1.msra.mxu0 0.0
  %320 = vmatprep.subr.mxu0 0.0
  %321 = vmatpush1.msra.mxu0 0.0
  %322 = vmatprep.subr.mxu0 0.0
  %323 = vmatpush1.msra.mxu0 0.0
  %324 = vmatprep.subr.mxu0 0.0
  %325 = vmatpush1.msra.mxu0 0.0
  %326 = vmatprep.subr.mxu0 0.0
  %327 = vmatpush1.msra.mxu0 %v294
  %328 = vmatprep.subr.mxu0 0.0
  %329 = vmatpush1.msra.mxu0 %v293
  %330 = vmatprep.subr.mxu0 0.0
  %331 = vmatpush1.msra.mxu0 %v292
  %332 = vmatprep.subr.mxu0 0.0
  %333 = vmatpush1.msra.mxu0 %v291
  %334 = vmatprep.subr.mxu0 0.0
  %335 = vmatpush2.msra.mxu0 0.0
  %336 = vmatprep.subr.mxu0 0.0
  %337 = vmatpush2.msra.mxu0 0.0
  %338 = vmatprep.subr.mxu0 0.0
  %339 = vmatpush2.msra.mxu0 0.0
  %340 = vmatprep.subr.mxu0 0.0
  %341 = vmatpush2.msra.mxu0 0.0
  %342 = vmatprep.subr.mxu0 0.0
  %343 = vmatpush2.msra.mxu0 0.0
  %344 = vmatprep.subr.mxu0 0.0
  %345 = vmatpush2.msra.mxu0 0.0
  %346 = vmatprep.subr.mxu0 0.0
  %347 = vmatpush2.msra.mxu0 0.0
  %348 = vmatprep.subr.mxu0 0.0
  %349 = vmatpush2.msra.mxu0 0.0
  %350 = vmatprep.subr.mxu0 0.0
  %351 = vmatpush2.msra.mxu0 0.0
  %352 = vmatprep.subr.mxu0 0.0
  %353 = vmatpush2.msra.mxu0 0.0
  %354 = vmatprep.subr.mxu0 0.0
  %355 = vmatpush2.msra.mxu0 0.0
  %356 = vmatprep.subr.mxu0 0.0
  %357 = vmatpush2.msra.mxu0 0.0
  %358 = vmatprep.subr.mxu0 0.0
  %359 = vmatpush2.msra.mxu0 0.0
  %360 = vmatprep.subr.mxu0 0.0
  %361 = vmatpush2.msra.mxu0 0.0
  %362 = vmatprep.subr.mxu0 0.0
  %363 = vmatpush2.msra.mxu0 0.0
  %364 = vmatprep.subr.mxu0 0.0
  %365 = vmatpush2.msra.mxu0 0.0
  %366 = vmatprep.mubr.f32.mxu0 0.0
  %367 = vmatmul.mubr.f32.gmra.mxu0 %v300
  %v368 = vpop.f32.mrf.mxu0
  %v369 = vadd.f32 0.0, %v368
  %v370 = vpop.f32.mrf.mxu0
  %371 = vdwg.mxu0
  %v372 = vadd.f32 %v137, %v369
  %v373 = vxor.u32 %v372, 2147483648
  %v374 = vmul.f32 %v373, 1.442695
  %v375 = vpow.pop %v374
  %v376 = vadd.f32 %v375, 1.0
  %v377 = vrcp.pop %v376
  %v378 = vmul.f32 1.0, %v377
  %v379 = vtanh.pop %v372
  %v380 = vmul.f32 %v378, 0.0
  %382 = vrot.lane.b32.xlu0 %v379, 64
  %v383 = vpop.permute.xlu0 %382
  %v385 = vmul.f32 %v378, %v383
  %387 = vrot.lane.b32.xlu0 %v385, 32
  %v388 = vpop.permute.xlu0 %387
  %v390 = vadd.f32 %v380, %v388
  %v391 = vtanh.pop %v390
  %393 = vrot.lane.b32.xlu0 %v391, 64
  %v394 = vpop.permute.xlu0 %393
  %v396 = vmul.f32 %v378, %v394
  %397 = vmatprep.subr.mxu0 0.0
  %398 = vmatpush1.msra.mxu0 0.0
  %399 = vmatprep.subr.mxu0 0.0
  %400 = vmatpush1.msra.mxu0 0.0
  %401 = vmatprep.subr.mxu0 0.0
  %402 = vmatpush1.msra.mxu0 0.0
  %403 = vmatprep.subr.mxu0 0.0
  %404 = vmatpush1.msra.mxu0 0.0
  %405 = vmatprep.subr.mxu0 0.0
  %406 = vmatpush1.msra.mxu0 0.0
  %407 = vmatprep.subr.mxu0 0.0
  %408 = vmatpush1.msra.mxu0 0.0
  %409 = vmatprep.subr.mxu0 0.0
  %410 = vmatpush1.msra.mxu0 0.0
  %411 = vmatprep.subr.mxu0 0.0
  %412 = vmatpush1.msra.mxu0 0.0
  %413 = vmatprep.subr.mxu0 0.0
  %414 = vmatpush1.msra.mxu0 0.0
  %415 = vmatprep.subr.mxu0 0.0
  %416 = vmatpush1.msra.mxu0 0.0
  %417 = vmatprep.subr.mxu0 0.0
  %418 = vmatpush1.msra.mxu0 0.0
  %419 = vmatprep.subr.mxu0 0.0
  %420 = vmatpush1.msra.mxu0 0.0
  %421 = vmatprep.subr.mxu0 0.0
  %422 = vmatpush1.msra.mxu0 %v298
  %423 = vmatprep.subr.mxu0 0.0
  %424 = vmatpush1.msra.mxu0 %v297
  %425 = vmatprep.subr.mxu0 0.0
  %426 = vmatpush1.msra.mxu0 %v296
  %427 = vmatprep.subr.mxu0 0.0
  %428 = vmatpush1.msra.mxu0 %v295
  %429 = vmatprep.subr.mxu0 0.0
  %430 = vmatpush2.msra.mxu0 0.0
  %431 = vmatprep.subr.mxu0 0.0
  %432 = vmatpush2.msra.mxu0 0.0
  %433 = vmatprep.subr.mxu0 0.0
  %434 = vmatpush2.msra.mxu0 0.0
  %435 = vmatprep.subr.mxu0 0.0
  %436 = vmatpush2.msra.mxu0 0.0
  %437 = vmatprep.subr.mxu0 0.0
  %438 = vmatpush2.msra.mxu0 0.0
  %439 = vmatprep.subr.mxu0 0.0
  %440 = vmatpush2.msra.mxu0 0.0
  %441 = vmatprep.subr.mxu0 0.0
  %442 = vmatpush2.msra.mxu0 0.0
  %443 = vmatprep.subr.mxu0 0.0
  %444 = vmatpush2.msra.mxu0 0.0
  %445 = vmatprep.subr.mxu0 0.0
  %446 = vmatpush2.msra.mxu0 0.0
  %447 = vmatprep.subr.mxu0 0.0
  %448 = vmatpush2.msra.mxu0 0.0
  %449 = vmatprep.subr.mxu0 0.0
  %450 = vmatpush2.msra.mxu0 0.0
  %451 = vmatprep.subr.mxu0 0.0
  %452 = vmatpush2.msra.mxu0 0.0
  %453 = vmatprep.subr.mxu0 0.0
  %454 = vmatpush2.msra.mxu0 0.0
  %455 = vmatprep.subr.mxu0 0.0
  %456 = vmatpush2.msra.mxu0 0.0
  %457 = vmatprep.subr.mxu0 0.0
  %458 = vmatpush2.msra.mxu0 0.0
  %459 = vmatprep.subr.mxu0 0.0
  %460 = vmatpush2.msra.mxu0 0.0
  %461 = vmatprep.mubr.f32.mxu0 0.0
  %462 = vmatmul.mubr.f32.gmra.mxu0 %v300
  %v463 = vpop.f32.mrf.mxu0
  %v464 = vadd.f32 0.0, %v463
  %v465 = vpop.f32.mrf.mxu0
  %466 = vdwg.mxu0
  %v467 = vadd.f32 %v288, %v464
  %v468 = vxor.u32 %v467, 2147483648
  %v469 = vmul.f32 %v468, 1.442695
  %v470 = vpow.pop %v469
  %v471 = vadd.f32 %v470, 1.0
  %v472 = vrcp.pop %v471
  %v473 = vmul.f32 1.0, %v472
  %v474 = vtanh.pop %v467
  %v475 = vmul.f32 %v473, 0.0
  %477 = vrot.lane.b32.xlu0 %v474, 64
  %v478 = vpop.permute.xlu0 %477
  %v480 = vmul.f32 %v473, %v478
  %482 = vrot.lane.b32.xlu0 %v480, 32
  %v483 = vpop.permute.xlu0 %482
  %v485 = vadd.f32 %v475, %v483
  %v486 = vtanh.pop %v485
  %488 = vrot.lane.b32.xlu0 %v486, 64
  %v489 = vpop.permute.xlu0 %488
  %v491 = vmul.f32 %v473, %v489
  %493 = vrot.lane.b32.xlu0 %v396, 32
  %v494 = vpop.permute.xlu0 %493
  %496 = vst.msk [vmem:[#allocation2] sm:$0xff] %vm45, %v494
  %498 = vrot.lane.b32.xlu0 %v491, 32
  %v499 = vpop.permute.xlu0 %498
  %501 = vst.msk [vmem:[#allocation3 + $0x38] sm:$0xff] %vm45, %v499
  %v502 = vsel %vm45, %v494, 0
  %504 = vmatprep.subr.mxu0 0.0
  %505 = vmatpush1.msra.mxu0 0.0
  %506 = vmatprep.subr.mxu0 0.0
  %507 = vmatpush1.msra.mxu0 0.0
  %508 = vmatprep.subr.mxu0 0.0
  %509 = vmatpush1.msra.mxu0 0.0
  %510 = vmatprep.subr.mxu0 0.0
  %511 = vmatpush1.msra.mxu0 0.0
  %512 = vmatprep.subr.mxu0 0.0
  %513 = vmatpush1.msra.mxu0 0.0
  %514 = vmatprep.subr.mxu0 0.0
  %515 = vmatpush1.msra.mxu0 0.0
  %516 = vmatprep.subr.mxu0 0.0
  %517 = vmatpush1.msra.mxu0 0.0
  %518 = vmatprep.subr.mxu0 0.0
  %519 = vmatpush1.msra.mxu0 0.0
  %520 = vmatprep.subr.mxu0 0.0
  %521 = vmatpush1.msra.mxu0 0.0
  %522 = vmatprep.subr.mxu0 0.0
  %523 = vmatpush1.msra.mxu0 0.0
  %524 = vmatprep.subr.mxu0 0.0
  %525 = vmatpush1.msra.mxu0 0.0
  %526 = vmatprep.subr.mxu0 0.0
  %527 = vmatpush1.msra.mxu0 0.0
  %528 = vmatprep.subr.mxu0 0.0
  %529 = vmatpush1.msra.mxu0 %v294
  %530 = vmatprep.subr.mxu0 0.0
  %531 = vmatpush1.msra.mxu0 %v293
  %532 = vmatprep.subr.mxu0 0.0
  %533 = vmatpush1.msra.mxu0 %v292
  %534 = vmatprep.subr.mxu0 0.0
  %535 = vmatpush1.msra.mxu0 %v291
  %536 = vmatprep.subr.mxu0 0.0
  %537 = vmatpush2.msra.mxu0 0.0
  %538 = vmatprep.subr.mxu0 0.0
  %539 = vmatpush2.msra.mxu0 0.0
  %540 = vmatprep.subr.mxu0 0.0
  %541 = vmatpush2.msra.mxu0 0.0
  %542 = vmatprep.subr.mxu0 0.0
  %543 = vmatpush2.msra.mxu0 0.0
  %544 = vmatprep.subr.mxu0 0.0
  %545 = vmatpush2.msra.mxu0 0.0
  %546 = vmatprep.subr.mxu0 0.0
  %547 = vmatpush2.msra.mxu0 0.0
  %548 = vmatprep.subr.mxu0 0.0
  %549 = vmatpush2.msra.mxu0 0.0
  %550 = vmatprep.subr.mxu0 0.0
  %551 = vmatpush2.msra.mxu0 0.0
  %552 = vmatprep.subr.mxu0 0.0
  %553 = vmatpush2.msra.mxu0 0.0
  %554 = vmatprep.subr.mxu0 0.0
  %555 = vmatpush2.msra.mxu0 0.0
  %556 = vmatprep.subr.mxu0 0.0
  %557 = vmatpush2.msra.mxu0 0.0
  %558 = vmatprep.subr.mxu0 0.0
  %559 = vmatpush2.msra.mxu0 0.0
  %560 = vmatprep.subr.mxu0 0.0
  %561 = vmatpush2.msra.mxu0 0.0
  %562 = vmatprep.subr.mxu0 0.0
  %563 = vmatpush2.msra.mxu0 0.0
  %564 = vmatprep.subr.mxu0 0.0
  %565 = vmatpush2.msra.mxu0 0.0
  %566 = vmatprep.subr.mxu0 0.0
  %567 = vmatpush2.msra.mxu0 0.0
  %568 = vmatprep.mubr.f32.mxu0 0.0
  %569 = vmatmul.mubr.f32.gmra.mxu0 %v502
  %v570 = vpop.f32.mrf.mxu0
  %v571 = vadd.f32 0.0, %v570
  %v572 = vpop.f32.mrf.mxu0
  %573 = vdwg.mxu0
  %v574 = vadd.f32 %v142, %v571
  %v575 = vxor.u32 %v574, 2147483648
  %v576 = vmul.f32 %v575, 1.442695
  %v577 = vpow.pop %v576
  %v578 = vadd.f32 %v577, 1.0
  %v579 = vrcp.pop %v578
  %v580 = vmul.f32 1.0, %v579
  %v581 = vtanh.pop %v574
  %v582 = vmul.f32 %v580, %v390
  %584 = vrot.lane.b32.xlu0 %v581, 64
  %v585 = vpop.permute.xlu0 %584
  %v587 = vmul.f32 %v580, %v585
  %589 = vrot.lane.b32.xlu0 %v587, 32
  %v590 = vpop.permute.xlu0 %589
  %v592 = vadd.f32 %v582, %v590
  %v593 = vtanh.pop %v592
  %595 = vrot.lane.b32.xlu0 %v593, 64
  %v596 = vpop.permute.xlu0 %595
  %v598 = vmul.f32 %v580, %v596
  %v599 = vsel %vm45, %v499, 0
  %601 = vmatprep.subr.mxu0 0.0
  %602 = vmatpush1.msra.mxu0 0.0
  %603 = vmatprep.subr.mxu0 0.0
  %604 = vmatpush1.msra.mxu0 0.0
  %605 = vmatprep.subr.mxu0 0.0
  %606 = vmatpush1.msra.mxu0 0.0
  %607 = vmatprep.subr.mxu0 0.0
  %608 = vmatpush1.msra.mxu0 0.0
  %609 = vmatprep.subr.mxu0 0.0
  %610 = vmatpush1.msra.mxu0 0.0
  %611 = vmatprep.subr.mxu0 0.0
  %612 = vmatpush1.msra.mxu0 0.0
  %613 = vmatprep.subr.mxu0 0.0
  %614 = vmatpush1.msra.mxu0 0.0
  %615 = vmatprep.subr.mxu0 0.0
  %616 = vmatpush1.msra.mxu0 0.0
  %617 = vmatprep.subr.mxu0 0.0
  %618 = vmatpush1.msra.mxu0 0.0
  %619 = vmatprep.subr.mxu0 0.0
  %620 = vmatpush1.msra.mxu0 0.0
  %621 = vmatprep.subr.mxu0 0.0
  %622 = vmatpush1.msra.mxu0 0.0
  %623 = vmatprep.subr.mxu0 0.0
  %624 = vmatpush1.msra.mxu0 0.0
  %625 = vmatprep.subr.mxu0 0.0
  %626 = vmatpush1.msra.mxu0 %v298
  %627 = vmatprep.subr.mxu0 0.0
  %628 = vmatpush1.msra.mxu0 %v297
  %629 = vmatprep.subr.mxu0 0.0
  %630 = vmatpush1.msra.mxu0 %v296
  %631 = vmatprep.subr.mxu0 0.0
  %632 = vmatpush1.msra.mxu0 %v295
  %633 = vmatprep.subr.mxu0 0.0
  %634 = vmatpush2.msra.mxu0 0.0
  %635 = vmatprep.subr.mxu0 0.0
  %636 = vmatpush2.msra.mxu0 0.0
  %637 = vmatprep.subr.mxu0 0.0
  %638 = vmatpush2.msra.mxu0 0.0
  %639 = vmatprep.subr.mxu0 0.0
  %640 = vmatpush2.msra.mxu0 0.0
  %641 = vmatprep.subr.mxu0 0.0
  %642 = vmatpush2.msra.mxu0 0.0
  %643 = vmatprep.subr.mxu0 0.0
  %644 = vmatpush2.msra.mxu0 0.0
  %645 = vmatprep.subr.mxu0 0.0
  %646 = vmatpush2.msra.mxu0 0.0
  %647 = vmatprep.subr.mxu0 0.0
  %648 = vmatpush2.msra.mxu0 0.0
  %649 = vmatprep.subr.mxu0 0.0
  %650 = vmatpush2.msra.mxu0 0.0
  %651 = vmatprep.subr.mxu0 0.0
  %652 = vmatpush2.msra.mxu0 0.0
  %653 = vmatprep.subr.mxu0 0.0
  %654 = vmatpush2.msra.mxu0 0.0
  %655 = vmatprep.subr.mxu0 0.0
  %656 = vmatpush2.msra.mxu0 0.0
  %657 = vmatprep.subr.mxu0 0.0
  %658 = vmatpush2.msra.mxu0 0.0
  %659 = vmatprep.subr.mxu0 0.0
  %660 = vmatpush2.msra.mxu0 0.0
  %661 = vmatprep.subr.mxu0 0.0
  %662 = vmatpush2.msra.mxu0 0.0
  %663 = vmatprep.subr.mxu0 0.0
  %664 = vmatpush2.msra.mxu0 0.0
  %665 = vmatprep.mubr.f32.mxu0 0.0
  %666 = vmatmul.mubr.f32.gmra.mxu0 %v599
  %v667 = vpop.f32.mrf.mxu0
  %v668 = vadd.f32 0.0, %v667
  %v669 = vpop.f32.mrf.mxu0
  %670 = vdwg.mxu0
  %v671 = vadd.f32 %v283, %v668
  %v672 = vxor.u32 %v671, 2147483648
  %v673 = vmul.f32 %v672, 1.442695
  %v674 = vpow.pop %v673
  %v675 = vadd.f32 %v674, 1.0
  %v676 = vrcp.pop %v675
  %v677 = vmul.f32 1.0, %v676
  %v678 = vtanh.pop %v671
  %v679 = vmul.f32 %v677, %v485
  %681 = vrot.lane.b32.xlu0 %v678, 64
  %v682 = vpop.permute.xlu0 %681
  %v684 = vmul.f32 %v677, %v682
  %686 = vrot.lane.b32.xlu0 %v684, 32
  %v687 = vpop.permute.xlu0 %686
  %v689 = vadd.f32 %v679, %v687
  %v690 = vtanh.pop %v689
  %692 = vrot.lane.b32.xlu0 %v690, 64
  %v693 = vpop.permute.xlu0 %692
  %v695 = vmul.f32 %v677, %v693
  %697 = vrot.lane.b32.xlu0 %v598, 32
  %v698 = vpop.permute.xlu0 %697
  %700 = vst.msk [vmem:[#allocation2 + $0x8] sm:$0xff] %vm45, %v698
  %702 = vrot.lane.b32.xlu0 %v695, 32
  %v703 = vpop.permute.xlu0 %702
  %705 = vst.msk [vmem:[#allocation3 + $0x30] sm:$0xff] %vm45, %v703
  %v706 = vsel %vm45, %v698, 0
  %708 = vmatprep.subr.mxu0 0.0
  %709 = vmatpush1.msra.mxu0 0.0
  %710 = vmatprep.subr.mxu0 0.0
  %711 = vmatpush1.msra.mxu0 0.0
  %712 = vmatprep.subr.mxu0 0.0
  %713 = vmatpush1.msra.mxu0 0.0
  %714 = vmatprep.subr.mxu0 0.0
  %715 = vmatpush1.msra.mxu0 0.0
  %716 = vmatprep.subr.mxu0 0.0
  %717 = vmatpush1.msra.mxu0 0.0
  %718 = vmatprep.subr.mxu0 0.0
  %719 = vmatpush1.msra.mxu0 0.0
  %720 = vmatprep.subr.mxu0 0.0
  %721 = vmatpush1.msra.mxu0 0.0
  %722 = vmatprep.subr.mxu0 0.0
  %723 = vmatpush1.msra.mxu0 0.0
  %724 = vmatprep.subr.mxu0 0.0
  %725 = vmatpush1.msra.mxu0 0.0
  %726 = vmatprep.subr.mxu0 0.0
  %727 = vmatpush1.msra.mxu0 0.0
  %728 = vmatprep.subr.mxu0 0.0
  %729 = vmatpush1.msra.mxu0 0.0
  %730 = vmatprep.subr.mxu0 0.0
  %731 = vmatpush1.msra.mxu0 0.0
  %732 = vmatprep.subr.mxu0 0.0
  %733 = vmatpush1.msra.mxu0 %v294
  %734 = vmatprep.subr.mxu0 0.0
  %735 = vmatpush1.msra.mxu0 %v293
  %736 = vmatprep.subr.mxu0 0.0
  %737 = vmatpush1.msra.mxu0 %v292
  %738 = vmatprep.subr.mxu0 0.0
  %739 = vmatpush1.msra.mxu0 %v291
  %740 = vmatprep.subr.mxu0 0.0
  %741 = vmatpush2.msra.mxu0 0.0
  %742 = vmatprep.subr.mxu0 0.0
  %743 = vmatpush2.msra.mxu0 0.0
  %744 = vmatprep.subr.mxu0 0.0
  %745 = vmatpush2.msra.mxu0 0.0
  %746 = vmatprep.subr.mxu0 0.0
  %747 = vmatpush2.msra.mxu0 0.0
  %748 = vmatprep.subr.mxu0 0.0
  %749 = vmatpush2.msra.mxu0 0.0
  %750 = vmatprep.subr.mxu0 0.0
  %751 = vmatpush2.msra.mxu0 0.0
  %752 = vmatprep.subr.mxu0 0.0
  %753 = vmatpush2.msra.mxu0 0.0
  %754 = vmatprep.subr.mxu0 0.0
  %755 = vmatpush2.msra.mxu0 0.0
  %756 = vmatprep.subr.mxu0 0.0
  %757 = vmatpush2.msra.mxu0 0.0
  %758 = vmatprep.subr.mxu0 0.0
  %759 = vmatpush2.msra.mxu0 0.0
  %760 = vmatprep.subr.mxu0 0.0
  %761 = vmatpush2.msra.mxu0 0.0
  %762 = vmatprep.subr.mxu0 0.0
  %763 = vmatpush2.msra.mxu0 0.0
  %764 = vmatprep.subr.mxu0 0.0
  %765 = vmatpush2.msra.mxu0 0.0
  %766 = vmatprep.subr.mxu0 0.0
  %767 = vmatpush2.msra.mxu0 0.0
  %768 = vmatprep.subr.mxu0 0.0
  %769 = vmatpush2.msra.mxu0 0.0
  %770 = vmatprep.subr.mxu0 0.0
  %771 = vmatpush2.msra.mxu0 0.0
  %772 = vmatprep.mubr.f32.mxu0 0.0
  %773 = vmatmul.mubr.f32.gmra.mxu0 %v706
  %v774 = vpop.f32.mrf.mxu0
  %v775 = vadd.f32 0.0, %v774
  %v776 = vpop.f32.mrf.mxu0
  %777 = vdwg.mxu0
  %v778 = vadd.f32 %v147, %v775
  %v779 = vxor.u32 %v778, 2147483648
  %v780 = vmul.f32 %v779, 1.442695
  %v781 = vpow.pop %v780
  %v782 = vadd.f32 %v781, 1.0
  %v783 = vrcp.pop %v782
  %v784 = vmul.f32 1.0, %v783
  %v785 = vtanh.pop %v778
  %v786 = vmul.f32 %v784, %v592
  %788 = vrot.lane.b32.xlu0 %v785, 64
  %v789 = vpop.permute.xlu0 %788
  %v791 = vmul.f32 %v784, %v789
  %793 = vrot.lane.b32.xlu0 %v791, 32
  %v794 = vpop.permute.xlu0 %793
  %v796 = vadd.f32 %v786, %v794
  %v797 = vtanh.pop %v796
  %799 = vrot.lane.b32.xlu0 %v797, 64
  %v800 = vpop.permute.xlu0 %799
  %v802 = vmul.f32 %v784, %v800
  %v803 = vsel %vm45, %v703, 0
  %805 = vmatprep.subr.mxu0 0.0
  %806 = vmatpush1.msra.mxu0 0.0
  %807 = vmatprep.subr.mxu0 0.0
  %808 = vmatpush1.msra.mxu0 0.0
  %809 = vmatprep.subr.mxu0 0.0
  %810 = vmatpush1.msra.mxu0 0.0
  %811 = vmatprep.subr.mxu0 0.0
  %812 = vmatpush1.msra.mxu0 0.0
  %813 = vmatprep.subr.mxu0 0.0
  %814 = vmatpush1.msra.mxu0 0.0
  %815 = vmatprep.subr.mxu0 0.0
  %816 = vmatpush1.msra.mxu0 0.0
  %817 = vmatprep.subr.mxu0 0.0
  %818 = vmatpush1.msra.mxu0 0.0
  %819 = vmatprep.subr.mxu0 0.0
  %820 = vmatpush1.msra.mxu0 0.0
  %821 = vmatprep.subr.mxu0 0.0
  %822 = vmatpush1.msra.mxu0 0.0
  %823 = vmatprep.subr.mxu0 0.0
  %824 = vmatpush1.msra.mxu0 0.0
  %825 = vmatprep.subr.mxu0 0.0
  %826 = vmatpush1.msra.mxu0 0.0
  %827 = vmatprep.subr.mxu0 0.0
  %828 = vmatpush1.msra.mxu0 0.0
  %829 = vmatprep.subr.mxu0 0.0
  %830 = vmatpush1.msra.mxu0 %v298
  %831 = vmatprep.subr.mxu0 0.0
  %832 = vmatpush1.msra.mxu0 %v297
  %833 = vmatprep.subr.mxu0 0.0
  %834 = vmatpush1.msra.mxu0 %v296
  %835 = vmatprep.subr.mxu0 0.0
  %836 = vmatpush1.msra.mxu0 %v295
  %837 = vmatprep.subr.mxu0 0.0
  %838 = vmatpush2.msra.mxu0 0.0
  %839 = vmatprep.subr.mxu0 0.0
  %840 = vmatpush2.msra.mxu0 0.0
  %841 = vmatprep.subr.mxu0 0.0
  %842 = vmatpush2.msra.mxu0 0.0
  %843 = vmatprep.subr.mxu0 0.0
  %844 = vmatpush2.msra.mxu0 0.0
  %845 = vmatprep.subr.mxu0 0.0
  %846 = vmatpush2.msra.mxu0 0.0
  %847 = vmatprep.subr.mxu0 0.0
  %848 = vmatpush2.msra.mxu0 0.0
  %849 = vmatprep.subr.mxu0 0.0
  %850 = vmatpush2.msra.mxu0 0.0
  %851 = vmatprep.subr.mxu0 0.0
  %852 = vmatpush2.msra.mxu0 0.0
  %853 = vmatprep.subr.mxu0 0.0
  %854 = vmatpush2.msra.mxu0 0.0
  %855 = vmatprep.subr.mxu0 0.0
  %856 = vmatpush2.msra.mxu0 0.0
  %857 = vmatprep.subr.mxu0 0.0
  %858 = vmatpush2.msra.mxu0 0.0
  %859 = vmatprep.subr.mxu0 0.0
  %860 = vmatpush2.msra.mxu0 0.0
  %861 = vmatprep.subr.mxu0 0.0
  %862 = vmatpush2.msra.mxu0 0.0
  %863 = vmatprep.subr.mxu0 0.0
  %864 = vmatpush2.msra.mxu0 0.0
  %865 = vmatprep.subr.mxu0 0.0
  %866 = vmatpush2.msra.mxu0 0.0
  %867 = vmatprep.subr.mxu0 0.0
  %868 = vmatpush2.msra.mxu0 0.0
  %869 = vmatprep.mubr.f32.mxu0 0.0
  %870 = vmatmul.mubr.f32.gmra.mxu0 %v803
  %v871 = vpop.f32.mrf.mxu0
  %v872 = vadd.f32 0.0, %v871
  %v873 = vpop.f32.mrf.mxu0
  %874 = vdwg.mxu0
  %v875 = vadd.f32 %v278, %v872
  %v876 = vxor.u32 %v875, 2147483648
  %v877 = vmul.f32 %v876, 1.442695
  %v878 = vpow.pop %v877
  %v879 = vadd.f32 %v878, 1.0
  %v880 = vrcp.pop %v879
  %v881 = vmul.f32 1.0, %v880
  %v882 = vtanh.pop %v875
  %v883 = vmul.f32 %v881, %v689
  %885 = vrot.lane.b32.xlu0 %v882, 64
  %v886 = vpop.permute.xlu0 %885
  %v888 = vmul.f32 %v881, %v886
  %890 = vrot.lane.b32.xlu0 %v888, 32
  %v891 = vpop.permute.xlu0 %890
  %v893 = vadd.f32 %v883, %v891
  %v894 = vtanh.pop %v893
  %896 = vrot.lane.b32.xlu0 %v894, 64
  %v897 = vpop.permute.xlu0 %896
  %v899 = vmul.f32 %v881, %v897
  %901 = vrot.lane.b32.xlu0 %v802, 32
  %v902 = vpop.permute.xlu0 %901
  %904 = vst.msk [vmem:[#allocation2 + $0x10] sm:$0xff] %vm45, %v902
  %906 = vrot.lane.b32.xlu0 %v899, 32
  %v907 = vpop.permute.xlu0 %906
  %909 = vst.msk [vmem:[#allocation3 + $0x28] sm:$0xff] %vm45, %v907
  %v910 = vsel %vm45, %v902, 0
  %912 = vmatprep.subr.mxu0 0.0
  %913 = vmatpush1.msra.mxu0 0.0
  %914 = vmatprep.subr.mxu0 0.0
  %915 = vmatpush1.msra.mxu0 0.0
  %916 = vmatprep.subr.mxu0 0.0
  %917 = vmatpush1.msra.mxu0 0.0
  %918 = vmatprep.subr.mxu0 0.0
  %919 = vmatpush1.msra.mxu0 0.0
  %920 = vmatprep.subr.mxu0 0.0
  %921 = vmatpush1.msra.mxu0 0.0
  %922 = vmatprep.subr.mxu0 0.0
  %923 = vmatpush1.msra.mxu0 0.0
  %924 = vmatprep.subr.mxu0 0.0
  %925 = vmatpush1.msra.mxu0 0.0
  %926 = vmatprep.subr.mxu0 0.0
  %927 = vmatpush1.msra.mxu0 0.0
  %928 = vmatprep.subr.mxu0 0.0
  %929 = vmatpush1.msra.mxu0 0.0
  %930 = vmatprep.subr.mxu0 0.0
  %931 = vmatpush1.msra.mxu0 0.0
  %932 = vmatprep.subr.mxu0 0.0
  %933 = vmatpush1.msra.mxu0 0.0
  %934 = vmatprep.subr.mxu0 0.0
  %935 = vmatpush1.msra.mxu0 0.0
  %936 = vmatprep.subr.mxu0 0.0
  %937 = vmatpush1.msra.mxu0 %v294
  %938 = vmatprep.subr.mxu0 0.0
  %939 = vmatpush1.msra.mxu0 %v293
  %940 = vmatprep.subr.mxu0 0.0
  %941 = vmatpush1.msra.mxu0 %v292
  %942 = vmatprep.subr.mxu0 0.0
  %943 = vmatpush1.msra.mxu0 %v291
  %944 = vmatprep.subr.mxu0 0.0
  %945 = vmatpush2.msra.mxu0 0.0
  %946 = vmatprep.subr.mxu0 0.0
  %947 = vmatpush2.msra.mxu0 0.0
  %948 = vmatprep.subr.mxu0 0.0
  %949 = vmatpush2.msra.mxu0 0.0
  %950 = vmatprep.subr.mxu0 0.0
  %951 = vmatpush2.msra.mxu0 0.0
  %952 = vmatprep.subr.mxu0 0.0
  %953 = vmatpush2.msra.mxu0 0.0
  %954 = vmatprep.subr.mxu0 0.0
  %955 = vmatpush2.msra.mxu0 0.0
  %956 = vmatprep.subr.mxu0 0.0
  %957 = vmatpush2.msra.mxu0 0.0
  %958 = vmatprep.subr.mxu0 0.0
  %959 = vmatpush2.msra.mxu0 0.0
  %960 = vmatprep.subr.mxu0 0.0
  %961 = vmatpush2.msra.mxu0 0.0
  %962 = vmatprep.subr.mxu0 0.0
  %963 = vmatpush2.msra.mxu0 0.0
  %964 = vmatprep.subr.mxu0 0.0
  %965 = vmatpush2.msra.mxu0 0.0
  %966 = vmatprep.subr.mxu0 0.0
  %967 = vmatpush2.msra.mxu0 0.0
  %968 = vmatprep.subr.mxu0 0.0
  %969 = vmatpush2.msra.mxu0 0.0
  %970 = vmatprep.subr.mxu0 0.0
  %971 = vmatpush2.msra.mxu0 0.0
  %972 = vmatprep.subr.mxu0 0.0
  %973 = vmatpush2.msra.mxu0 0.0
  %974 = vmatprep.subr.mxu0 0.0
  %975 = vmatpush2.msra.mxu0 0.0
  %976 = vmatprep.mubr.f32.mxu0 0.0
  %977 = vmatmul.mubr.f32.gmra.mxu0 %v910
  %v978 = vpop.f32.mrf.mxu0
  %v979 = vadd.f32 0.0, %v978
  %v980 = vpop.f32.mrf.mxu0
  %981 = vdwg.mxu0
  %v982 = vadd.f32 %v152, %v979
  %v983 = vxor.u32 %v982, 2147483648
  %v984 = vmul.f32 %v983, 1.442695
  %v985 = vpow.pop %v984
  %v986 = vadd.f32 %v985, 1.0
  %v987 = vrcp.pop %v986
  %v988 = vmul.f32 1.0, %v987
  %v989 = vtanh.pop %v982
  %v990 = vmul.f32 %v988, %v796
  %992 = vrot.lane.b32.xlu0 %v989, 64
  %v993 = vpop.permute.xlu0 %992
  %v995 = vmul.f32 %v988, %v993
  %997 = vrot.lane.b32.xlu0 %v995, 32
  %v998 = vpop.permute.xlu0 %997
  %v1000 = vadd.f32 %v990, %v998
  %v1001 = vtanh.pop %v1000
  %1003 = vrot.lane.b32.xlu0 %v1001, 64
  %v1004 = vpop.permute.xlu0 %1003
  %v1006 = vmul.f32 %v988, %v1004
  %v1007 = vsel %vm45, %v907, 0
  %1009 = vmatprep.subr.mxu0 0.0
  %1010 = vmatpush1.msra.mxu0 0.0
  %1011 = vmatprep.subr.mxu0 0.0
  %1012 = vmatpush1.msra.mxu0 0.0
  %1013 = vmatprep.subr.mxu0 0.0
  %1014 = vmatpush1.msra.mxu0 0.0
  %1015 = vmatprep.subr.mxu0 0.0
  %1016 = vmatpush1.msra.mxu0 0.0
  %1017 = vmatprep.subr.mxu0 0.0
  %1018 = vmatpush1.msra.mxu0 0.0
  %1019 = vmatprep.subr.mxu0 0.0
  %1020 = vmatpush1.msra.mxu0 0.0
  %1021 = vmatprep.subr.mxu0 0.0
  %1022 = vmatpush1.msra.mxu0 0.0
  %1023 = vmatprep.subr.mxu0 0.0
  %1024 = vmatpush1.msra.mxu0 0.0
  %1025 = vmatprep.subr.mxu0 0.0
  %1026 = vmatpush1.msra.mxu0 0.0
  %1027 = vmatprep.subr.mxu0 0.0
  %1028 = vmatpush1.msra.mxu0 0.0
  %1029 = vmatprep.subr.mxu0 0.0
  %1030 = vmatpush1.msra.mxu0 0.0
  %1031 = vmatprep.subr.mxu0 0.0
  %1032 = vmatpush1.msra.mxu0 0.0
  %1033 = vmatprep.subr.mxu0 0.0
  %1034 = vmatpush1.msra.mxu0 %v298
  %1035 = vmatprep.subr.mxu0 0.0
  %1036 = vmatpush1.msra.mxu0 %v297
  %1037 = vmatprep.subr.mxu0 0.0
  %1038 = vmatpush1.msra.mxu0 %v296
  %1039 = vmatprep.subr.mxu0 0.0
  %1040 = vmatpush1.msra.mxu0 %v295
  %1041 = vmatprep.subr.mxu0 0.0
  %1042 = vmatpush2.msra.mxu0 0.0
  %1043 = vmatprep.subr.mxu0 0.0
  %1044 = vmatpush2.msra.mxu0 0.0
  %1045 = vmatprep.subr.mxu0 0.0
  %1046 = vmatpush2.msra.mxu0 0.0
  %1047 = vmatprep.subr.mxu0 0.0
  %1048 = vmatpush2.msra.mxu0 0.0
  %1049 = vmatprep.subr.mxu0 0.0
  %1050 = vmatpush2.msra.mxu0 0.0
  %1051 = vmatprep.subr.mxu0 0.0
  %1052 = vmatpush2.msra.mxu0 0.0
  %1053 = vmatprep.subr.mxu0 0.0
  %1054 = vmatpush2.msra.mxu0 0.0
  %1055 = vmatprep.subr.mxu0 0.0
  %1056 = vmatpush2.msra.mxu0 0.0
  %1057 = vmatprep.subr.mxu0 0.0
  %1058 = vmatpush2.msra.mxu0 0.0
  %1059 = vmatprep.subr.mxu0 0.0
  %1060 = vmatpush2.msra.mxu0 0.0
  %1061 = vmatprep.subr.mxu0 0.0
  %1062 = vmatpush2.msra.mxu0 0.0
  %1063 = vmatprep.subr.mxu0 0.0
  %1064 = vmatpush2.msra.mxu0 0.0
  %1065 = vmatprep.subr.mxu0 0.0
  %1066 = vmatpush2.msra.mxu0 0.0
  %1067 = vmatprep.subr.mxu0 0.0
  %1068 = vmatpush2.msra.mxu0 0.0
  %1069 = vmatprep.subr.mxu0 0.0
  %1070 = vmatpush2.msra.mxu0 0.0
  %1071 = vmatprep.subr.mxu0 0.0
  %1072 = vmatpush2.msra.mxu0 0.0
  %1073 = vmatprep.mubr.f32.mxu0 0.0
  %1074 = vmatmul.mubr.f32.gmra.mxu0 %v1007
  %v1075 = vpop.f32.mrf.mxu0
  %v1076 = vadd.f32 0.0, %v1075
  %v1077 = vpop.f32.mrf.mxu0
  %1078 = vdwg.mxu0
  %v1079 = vadd.f32 %v273, %v1076
  %v1080 = vxor.u32 %v1079, 2147483648
  %v1081 = vmul.f32 %v1080, 1.442695
  %v1082 = vpow.pop %v1081
  %v1083 = vadd.f32 %v1082, 1.0
  %v1084 = vrcp.pop %v1083
  %v1085 = vmul.f32 1.0, %v1084
  %v1086 = vtanh.pop %v1079
  %v1087 = vmul.f32 %v1085, %v893
  %1089 = vrot.lane.b32.xlu0 %v1086, 64
  %v1090 = vpop.permute.xlu0 %1089
  %v1092 = vmul.f32 %v1085, %v1090
  %1094 = vrot.lane.b32.xlu0 %v1092, 32
  %v1095 = vpop.permute.xlu0 %1094
  %v1097 = vadd.f32 %v1087, %v1095
  %v1098 = vtanh.pop %v1097
  %1100 = vrot.lane.b32.xlu0 %v1098, 64
  %v1101 = vpop.permute.xlu0 %1100
  %v1103 = vmul.f32 %v1085, %v1101
  %1105 = vrot.lane.b32.xlu0 %v1006, 32
  %v1106 = vpop.permute.xlu0 %1105
  %1108 = vst.msk [vmem:[#allocation2 + $0x18] sm:$0xff] %vm45, %v1106
  %1110 = vrot.lane.b32.xlu0 %v1103, 32
  %v1111 = vpop.permute.xlu0 %1110
  %1113 = vst.msk [vmem:[#allocation3 + $0x20] sm:$0xff] %vm45, %v1111
  %v1114 = vsel %vm45, %v1106, 0
  %1116 = vmatprep.subr.mxu0 0.0
  %1117 = vmatpush1.msra.mxu0 0.0
  %1118 = vmatprep.subr.mxu0 0.0
  %1119 = vmatpush1.msra.mxu0 0.0
  %1120 = vmatprep.subr.mxu0 0.0
  %1121 = vmatpush1.msra.mxu0 0.0
  %1122 = vmatprep.subr.mxu0 0.0
  %1123 = vmatpush1.msra.mxu0 0.0
  %1124 = vmatprep.subr.mxu0 0.0
  %1125 = vmatpush1.msra.mxu0 0.0
  %1126 = vmatprep.subr.mxu0 0.0
  %1127 = vmatpush1.msra.mxu0 0.0
  %1128 = vmatprep.subr.mxu0 0.0
  %1129 = vmatpush1.msra.mxu0 0.0
  %1130 = vmatprep.subr.mxu0 0.0
  %1131 = vmatpush1.msra.mxu0 0.0
  %1132 = vmatprep.subr.mxu0 0.0
  %1133 = vmatpush1.msra.mxu0 0.0
  %1134 = vmatprep.subr.mxu0 0.0
  %1135 = vmatpush1.msra.mxu0 0.0
  %1136 = vmatprep.subr.mxu0 0.0
  %1137 = vmatpush1.msra.mxu0 0.0
  %1138 = vmatprep.subr.mxu0 0.0
  %1139 = vmatpush1.msra.mxu0 0.0
  %1140 = vmatprep.subr.mxu0 0.0
  %1141 = vmatpush1.msra.mxu0 %v294
  %1142 = vmatprep.subr.mxu0 0.0
  %1143 = vmatpush1.msra.mxu0 %v293
  %1144 = vmatprep.subr.mxu0 0.0
  %1145 = vmatpush1.msra.mxu0 %v292
  %1146 = vmatprep.subr.mxu0 0.0
  %1147 = vmatpush1.msra.mxu0 %v291
  %1148 = vmatprep.subr.mxu0 0.0
  %1149 = vmatpush2.msra.mxu0 0.0
  %1150 = vmatprep.subr.mxu0 0.0
  %1151 = vmatpush2.msra.mxu0 0.0
  %1152 = vmatprep.subr.mxu0 0.0
  %1153 = vmatpush2.msra.mxu0 0.0
  %1154 = vmatprep.subr.mxu0 0.0
  %1155 = vmatpush2.msra.mxu0 0.0
  %1156 = vmatprep.subr.mxu0 0.0
  %1157 = vmatpush2.msra.mxu0 0.0
  %1158 = vmatprep.subr.mxu0 0.0
  %1159 = vmatpush2.msra.mxu0 0.0
  %1160 = vmatprep.subr.mxu0 0.0
  %1161 = vmatpush2.msra.mxu0 0.0
  %1162 = vmatprep.subr.mxu0 0.0
  %1163 = vmatpush2.msra.mxu0 0.0
  %1164 = vmatprep.subr.mxu0 0.0
  %1165 = vmatpush2.msra.mxu0 0.0
  %1166 = vmatprep.subr.mxu0 0.0
  %1167 = vmatpush2.msra.mxu0 0.0
  %1168 = vmatprep.subr.mxu0 0.0
  %1169 = vmatpush2.msra.mxu0 0.0
  %1170 = vmatprep.subr.mxu0 0.0
  %1171 = vmatpush2.msra.mxu0 0.0
  %1172 = vmatprep.subr.mxu0 0.0
  %1173 = vmatpush2.msra.mxu0 0.0
  %1174 = vmatprep.subr.mxu0 0.0
  %1175 = vmatpush2.msra.mxu0 0.0
  %1176 = vmatprep.subr.mxu0 0.0
  %1177 = vmatpush2.msra.mxu0 0.0
  %1178 = vmatprep.subr.mxu0 0.0
  %1179 = vmatpush2.msra.mxu0 0.0
  %1180 = vmatprep.mubr.f32.mxu0 0.0
  %1181 = vmatmul.mubr.f32.gmra.mxu0 %v1114
  %v1182 = vpop.f32.mrf.mxu0
  %v1183 = vadd.f32 0.0, %v1182
  %v1184 = vpop.f32.mrf.mxu0
  %1185 = vdwg.mxu0
  %v1186 = vadd.f32 %v157, %v1183
  %v1187 = vxor.u32 %v1186, 2147483648
  %v1188 = vmul.f32 %v1187, 1.442695
  %v1189 = vpow.pop %v1188
  %v1190 = vadd.f32 %v1189, 1.0
  %v1191 = vrcp.pop %v1190
  %v1192 = vmul.f32 1.0, %v1191
  %v1193 = vtanh.pop %v1186
  %v1194 = vmul.f32 %v1192, %v1000
  %1196 = vrot.lane.b32.xlu0 %v1193, 64
  %v1197 = vpop.permute.xlu0 %1196
  %v1199 = vmul.f32 %v1192, %v1197
  %1201 = vrot.lane.b32.xlu0 %v1199, 32
  %v1202 = vpop.permute.xlu0 %1201
  %v1204 = vadd.f32 %v1194, %v1202
  %v1205 = vtanh.pop %v1204
  %1207 = vrot.lane.b32.xlu0 %v1205, 64
  %v1208 = vpop.permute.xlu0 %1207
  %v1210 = vmul.f32 %v1192, %v1208
  %v1211 = vsel %vm45, %v1111, 0
  %1213 = vmatprep.subr.mxu0 0.0
  %1214 = vmatpush1.msra.mxu0 0.0
  %1215 = vmatprep.subr.mxu0 0.0
  %1216 = vmatpush1.msra.mxu0 0.0
  %1217 = vmatprep.subr.mxu0 0.0
  %1218 = vmatpush1.msra.mxu0 0.0
  %1219 = vmatprep.subr.mxu0 0.0
  %1220 = vmatpush1.msra.mxu0 0.0
  %1221 = vmatprep.subr.mxu0 0.0
  %1222 = vmatpush1.msra.mxu0 0.0
  %1223 = vmatprep.subr.mxu0 0.0
  %1224 = vmatpush1.msra.mxu0 0.0
  %1225 = vmatprep.subr.mxu0 0.0
  %1226 = vmatpush1.msra.mxu0 0.0
  %1227 = vmatprep.subr.mxu0 0.0
  %1228 = vmatpush1.msra.mxu0 0.0
  %1229 = vmatprep.subr.mxu0 0.0
  %1230 = vmatpush1.msra.mxu0 0.0
  %1231 = vmatprep.subr.mxu0 0.0
  %1232 = vmatpush1.msra.mxu0 0.0
  %1233 = vmatprep.subr.mxu0 0.0
  %1234 = vmatpush1.msra.mxu0 0.0
  %1235 = vmatprep.subr.mxu0 0.0
  %1236 = vmatpush1.msra.mxu0 0.0
  %1237 = vmatprep.subr.mxu0 0.0
  %1238 = vmatpush1.msra.mxu0 %v298
  %1239 = vmatprep.subr.mxu0 0.0
  %1240 = vmatpush1.msra.mxu0 %v297
  %1241 = vmatprep.subr.mxu0 0.0
  %1242 = vmatpush1.msra.mxu0 %v296
  %1243 = vmatprep.subr.mxu0 0.0
  %1244 = vmatpush1.msra.mxu0 %v295
  %1245 = vmatprep.subr.mxu0 0.0
  %1246 = vmatpush2.msra.mxu0 0.0
  %1247 = vmatprep.subr.mxu0 0.0
  %1248 = vmatpush2.msra.mxu0 0.0
  %1249 = vmatprep.subr.mxu0 0.0
  %1250 = vmatpush2.msra.mxu0 0.0
  %1251 = vmatprep.subr.mxu0 0.0
  %1252 = vmatpush2.msra.mxu0 0.0
  %1253 = vmatprep.subr.mxu0 0.0
  %1254 = vmatpush2.msra.mxu0 0.0
  %1255 = vmatprep.subr.mxu0 0.0
  %1256 = vmatpush2.msra.mxu0 0.0
  %1257 = vmatprep.subr.mxu0 0.0
  %1258 = vmatpush2.msra.mxu0 0.0
  %1259 = vmatprep.subr.mxu0 0.0
  %1260 = vmatpush2.msra.mxu0 0.0
  %1261 = vmatprep.subr.mxu0 0.0
  %1262 = vmatpush2.msra.mxu0 0.0
  %1263 = vmatprep.subr.mxu0 0.0
  %1264 = vmatpush2.msra.mxu0 0.0
  %1265 = vmatprep.subr.mxu0 0.0
  %1266 = vmatpush2.msra.mxu0 0.0
  %1267 = vmatprep.subr.mxu0 0.0
  %1268 = vmatpush2.msra.mxu0 0.0
  %1269 = vmatprep.subr.mxu0 0.0
  %1270 = vmatpush2.msra.mxu0 0.0
  %1271 = vmatprep.subr.mxu0 0.0
  %1272 = vmatpush2.msra.mxu0 0.0
  %1273 = vmatprep.subr.mxu0 0.0
  %1274 = vmatpush2.msra.mxu0 0.0
  %1275 = vmatprep.subr.mxu0 0.0
  %1276 = vmatpush2.msra.mxu0 0.0
  %1277 = vmatprep.mubr.f32.mxu0 0.0
  %1278 = vmatmul.mubr.f32.gmra.mxu0 %v1211
  %v1279 = vpop.f32.mrf.mxu0
  %v1280 = vadd.f32 0.0, %v1279
  %v1281 = vpop.f32.mrf.mxu0
  %1282 = vdwg.mxu0
  %v1283 = vadd.f32 %v268, %v1280
  %v1284 = vxor.u32 %v1283, 2147483648
  %v1285 = vmul.f32 %v1284, 1.442695
  %v1286 = vpow.pop %v1285
  %v1287 = vadd.f32 %v1286, 1.0
  %v1288 = vrcp.pop %v1287
  %v1289 = vmul.f32 1.0, %v1288
  %v1290 = vtanh.pop %v1283
  %v1291 = vmul.f32 %v1289, %v1097
  %1293 = vrot.lane.b32.xlu0 %v1290, 64
  %v1294 = vpop.permute.xlu0 %1293
  %v1296 = vmul.f32 %v1289, %v1294
  %1298 = vrot.lane.b32.xlu0 %v1296, 32
  %v1299 = vpop.permute.xlu0 %1298
  %v1301 = vadd.f32 %v1291, %v1299
  %v1302 = vtanh.pop %v1301
  %1304 = vrot.lane.b32.xlu0 %v1302, 64
  %v1305 = vpop.permute.xlu0 %1304
  %v1307 = vmul.f32 %v1289, %v1305
  %1309 = vrot.lane.b32.xlu0 %v1210, 32
  %v1310 = vpop.permute.xlu0 %1309
  %1312 = vst.msk [vmem:[#allocation2 + $0x20] sm:$0xff] %vm45, %v1310
  %1314 = vrot.lane.b32.xlu0 %v1307, 32
  %v1315 = vpop.permute.xlu0 %1314
  %1317 = vst.msk [vmem:[#allocation3 + $0x18] sm:$0xff] %vm45, %v1315
  %v1318 = vsel %vm45, %v1310, 0
  %1320 = vmatprep.subr.mxu0 0.0
  %1321 = vmatpush1.msra.mxu0 0.0
  %1322 = vmatprep.subr.mxu0 0.0
  %1323 = vmatpush1.msra.mxu0 0.0
  %1324 = vmatprep.subr.mxu0 0.0
  %1325 = vmatpush1.msra.mxu0 0.0
  %1326 = vmatprep.subr.mxu0 0.0
  %1327 = vmatpush1.msra.mxu0 0.0
  %1328 = vmatprep.subr.mxu0 0.0
  %1329 = vmatpush1.msra.mxu0 0.0
  %1330 = vmatprep.subr.mxu0 0.0
  %1331 = vmatpush1.msra.mxu0 0.0
  %1332 = vmatprep.subr.mxu0 0.0
  %1333 = vmatpush1.msra.mxu0 0.0
  %1334 = vmatprep.subr.mxu0 0.0
  %1335 = vmatpush1.msra.mxu0 0.0
  %1336 = vmatprep.subr.mxu0 0.0
  %1337 = vmatpush1.msra.mxu0 0.0
  %1338 = vmatprep.subr.mxu0 0.0
  %1339 = vmatpush1.msra.mxu0 0.0
  %1340 = vmatprep.subr.mxu0 0.0
  %1341 = vmatpush1.msra.mxu0 0.0
  %1342 = vmatprep.subr.mxu0 0.0
  %1343 = vmatpush1.msra.mxu0 0.0
  %1344 = vmatprep.subr.mxu0 0.0
  %1345 = vmatpush1.msra.mxu0 %v294
  %1346 = vmatprep.subr.mxu0 0.0
  %1347 = vmatpush1.msra.mxu0 %v293
  %1348 = vmatprep.subr.mxu0 0.0
  %1349 = vmatpush1.msra.mxu0 %v292
  %1350 = vmatprep.subr.mxu0 0.0
  %1351 = vmatpush1.msra.mxu0 %v291
  %1352 = vmatprep.subr.mxu0 0.0
  %1353 = vmatpush2.msra.mxu0 0.0
  %1354 = vmatprep.subr.mxu0 0.0
  %1355 = vmatpush2.msra.mxu0 0.0
  %1356 = vmatprep.subr.mxu0 0.0
  %1357 = vmatpush2.msra.mxu0 0.0
  %1358 = vmatprep.subr.mxu0 0.0
  %1359 = vmatpush2.msra.mxu0 0.0
  %1360 = vmatprep.subr.mxu0 0.0
  %1361 = vmatpush2.msra.mxu0 0.0
  %1362 = vmatprep.subr.mxu0 0.0
  %1363 = vmatpush2.msra.mxu0 0.0
  %1364 = vmatprep.subr.mxu0 0.0
  %1365 = vmatpush2.msra.mxu0 0.0
  %1366 = vmatprep.subr.mxu0 0.0
  %1367 = vmatpush2.msra.mxu0 0.0
  %1368 = vmatprep.subr.mxu0 0.0
  %1369 = vmatpush2.msra.mxu0 0.0
  %1370 = vmatprep.subr.mxu0 0.0
  %1371 = vmatpush2.msra.mxu0 0.0
  %1372 = vmatprep.subr.mxu0 0.0
  %1373 = vmatpush2.msra.mxu0 0.0
  %1374 = vmatprep.subr.mxu0 0.0
  %1375 = vmatpush2.msra.mxu0 0.0
  %1376 = vmatprep.subr.mxu0 0.0
  %1377 = vmatpush2.msra.mxu0 0.0
  %1378 = vmatprep.subr.mxu0 0.0
  %1379 = vmatpush2.msra.mxu0 0.0
  %1380 = vmatprep.subr.mxu0 0.0
  %1381 = vmatpush2.msra.mxu0 0.0
  %1382 = vmatprep.subr.mxu0 0.0
  %1383 = vmatpush2.msra.mxu0 0.0
  %1384 = vmatprep.mubr.f32.mxu0 0.0
  %1385 = vmatmul.mubr.f32.gmra.mxu0 %v1318
  %v1386 = vpop.f32.mrf.mxu0
  %v1387 = vadd.f32 0.0, %v1386
  %v1388 = vpop.f32.mrf.mxu0
  %1389 = vdwg.mxu0
  %v1390 = vadd.f32 %v162, %v1387
  %v1391 = vxor.u32 %v1390, 2147483648
  %v1392 = vmul.f32 %v1391, 1.442695
  %v1393 = vpow.pop %v1392
  %v1394 = vadd.f32 %v1393, 1.0
  %v1395 = vrcp.pop %v1394
  %v1396 = vmul.f32 1.0, %v1395
  %v1397 = vtanh.pop %v1390
  %v1398 = vmul.f32 %v1396, %v1204
  %1400 = vrot.lane.b32.xlu0 %v1397, 64
  %v1401 = vpop.permute.xlu0 %1400
  %v1403 = vmul.f32 %v1396, %v1401
  %1405 = vrot.lane.b32.xlu0 %v1403, 32
  %v1406 = vpop.permute.xlu0 %1405
  %v1408 = vadd.f32 %v1398, %v1406
  %v1409 = vtanh.pop %v1408
  %1411 = vrot.lane.b32.xlu0 %v1409, 64
  %v1412 = vpop.permute.xlu0 %1411
  %v1414 = vmul.f32 %v1396, %v1412
  %v1415 = vsel %vm45, %v1315, 0
  %1417 = vmatprep.subr.mxu0 0.0
  %1418 = vmatpush1.msra.mxu0 0.0
  %1419 = vmatprep.subr.mxu0 0.0
  %1420 = vmatpush1.msra.mxu0 0.0
  %1421 = vmatprep.subr.mxu0 0.0
  %1422 = vmatpush1.msra.mxu0 0.0
  %1423 = vmatprep.subr.mxu0 0.0
  %1424 = vmatpush1.msra.mxu0 0.0
  %1425 = vmatprep.subr.mxu0 0.0
  %1426 = vmatpush1.msra.mxu0 0.0
  %1427 = vmatprep.subr.mxu0 0.0
  %1428 = vmatpush1.msra.mxu0 0.0
  %1429 = vmatprep.subr.mxu0 0.0
  %1430 = vmatpush1.msra.mxu0 0.0
  %1431 = vmatprep.subr.mxu0 0.0
  %1432 = vmatpush1.msra.mxu0 0.0
  %1433 = vmatprep.subr.mxu0 0.0
  %1434 = vmatpush1.msra.mxu0 0.0
  %1435 = vmatprep.subr.mxu0 0.0
  %1436 = vmatpush1.msra.mxu0 0.0
  %1437 = vmatprep.subr.mxu0 0.0
  %1438 = vmatpush1.msra.mxu0 0.0
  %1439 = vmatprep.subr.mxu0 0.0
  %1440 = vmatpush1.msra.mxu0 0.0
  %1441 = vmatprep.subr.mxu0 0.0
  %1442 = vmatpush1.msra.mxu0 %v298
  %1443 = vmatprep.subr.mxu0 0.0
  %1444 = vmatpush1.msra.mxu0 %v297
  %1445 = vmatprep.subr.mxu0 0.0
  %1446 = vmatpush1.msra.mxu0 %v296
  %1447 = vmatprep.subr.mxu0 0.0
  %1448 = vmatpush1.msra.mxu0 %v295
  %1449 = vmatprep.subr.mxu0 0.0
  %1450 = vmatpush2.msra.mxu0 0.0
  %1451 = vmatprep.subr.mxu0 0.0
  %1452 = vmatpush2.msra.mxu0 0.0
  %1453 = vmatprep.subr.mxu0 0.0
  %1454 = vmatpush2.msra.mxu0 0.0
  %1455 = vmatprep.subr.mxu0 0.0
  %1456 = vmatpush2.msra.mxu0 0.0
  %1457 = vmatprep.subr.mxu0 0.0
  %1458 = vmatpush2.msra.mxu0 0.0
  %1459 = vmatprep.subr.mxu0 0.0
  %1460 = vmatpush2.msra.mxu0 0.0
  %1461 = vmatprep.subr.mxu0 0.0
  %1462 = vmatpush2.msra.mxu0 0.0
  %1463 = vmatprep.subr.mxu0 0.0
  %1464 = vmatpush2.msra.mxu0 0.0
  %1465 = vmatprep.subr.mxu0 0.0
  %1466 = vmatpush2.msra.mxu0 0.0
  %1467 = vmatprep.subr.mxu0 0.0
  %1468 = vmatpush2.msra.mxu0 0.0
  %1469 = vmatprep.subr.mxu0 0.0
  %1470 = vmatpush2.msra.mxu0 0.0
  %1471 = vmatprep.subr.mxu0 0.0
  %1472 = vmatpush2.msra.mxu0 0.0
  %1473 = vmatprep.subr.mxu0 0.0
  %1474 = vmatpush2.msra.mxu0 0.0
  %1475 = vmatprep.subr.mxu0 0.0
  %1476 = vmatpush2.msra.mxu0 0.0
  %1477 = vmatprep.subr.mxu0 0.0
  %1478 = vmatpush2.msra.mxu0 0.0
  %1479 = vmatprep.subr.mxu0 0.0
  %1480 = vmatpush2.msra.mxu0 0.0
  %1481 = vmatprep.mubr.f32.mxu0 0.0
  %1482 = vmatmul.mubr.f32.gmra.mxu0 %v1415
  %v1483 = vpop.f32.mrf.mxu0
  %v1484 = vadd.f32 0.0, %v1483
  %v1485 = vpop.f32.mrf.mxu0
  %1486 = vdwg.mxu0
  %v1487 = vadd.f32 %v263, %v1484
  %v1488 = vxor.u32 %v1487, 2147483648
  %v1489 = vmul.f32 %v1488, 1.442695
  %v1490 = vpow.pop %v1489
  %v1491 = vadd.f32 %v1490, 1.0
  %v1492 = vrcp.pop %v1491
  %v1493 = vmul.f32 1.0, %v1492
  %v1494 = vtanh.pop %v1487
  %v1495 = vmul.f32 %v1493, %v1301
  %1497 = vrot.lane.b32.xlu0 %v1494, 64
  %v1498 = vpop.permute.xlu0 %1497
  %v1500 = vmul.f32 %v1493, %v1498
  %1502 = vrot.lane.b32.xlu0 %v1500, 32
  %v1503 = vpop.permute.xlu0 %1502
  %v1505 = vadd.f32 %v1495, %v1503
  %v1506 = vtanh.pop %v1505
  %1508 = vrot.lane.b32.xlu0 %v1506, 64
  %v1509 = vpop.permute.xlu0 %1508
  %v1511 = vmul.f32 %v1493, %v1509
  %1513 = vrot.lane.b32.xlu0 %v1414, 32
  %v1514 = vpop.permute.xlu0 %1513
  %1516 = vst.msk [vmem:[#allocation2 + $0x28] sm:$0xff] %vm45, %v1514
  %1518 = vrot.lane.b32.xlu0 %v1511, 32
  %v1519 = vpop.permute.xlu0 %1518
  %1521 = vst.msk [vmem:[#allocation3 + $0x10] sm:$0xff] %vm45, %v1519
  %v1522 = vsel %vm45, %v1514, 0
  %1524 = vmatprep.subr.mxu0 0.0
  %1525 = vmatpush1.msra.mxu0 0.0
  %1526 = vmatprep.subr.mxu0 0.0
  %1527 = vmatpush1.msra.mxu0 0.0
  %1528 = vmatprep.subr.mxu0 0.0
  %1529 = vmatpush1.msra.mxu0 0.0
  %1530 = vmatprep.subr.mxu0 0.0
  %1531 = vmatpush1.msra.mxu0 0.0
  %1532 = vmatprep.subr.mxu0 0.0
  %1533 = vmatpush1.msra.mxu0 0.0
  %1534 = vmatprep.subr.mxu0 0.0
  %1535 = vmatpush1.msra.mxu0 0.0
  %1536 = vmatprep.subr.mxu0 0.0
  %1537 = vmatpush1.msra.mxu0 0.0
  %1538 = vmatprep.subr.mxu0 0.0
  %1539 = vmatpush1.msra.mxu0 0.0
  %1540 = vmatprep.subr.mxu0 0.0
  %1541 = vmatpush1.msra.mxu0 0.0
  %1542 = vmatprep.subr.mxu0 0.0
  %1543 = vmatpush1.msra.mxu0 0.0
  %1544 = vmatprep.subr.mxu0 0.0
  %1545 = vmatpush1.msra.mxu0 0.0
  %1546 = vmatprep.subr.mxu0 0.0
  %1547 = vmatpush1.msra.mxu0 0.0
  %1548 = vmatprep.subr.mxu0 0.0
  %1549 = vmatpush1.msra.mxu0 %v294
  %1550 = vmatprep.subr.mxu0 0.0
  %1551 = vmatpush1.msra.mxu0 %v293
  %1552 = vmatprep.subr.mxu0 0.0
  %1553 = vmatpush1.msra.mxu0 %v292
  %1554 = vmatprep.subr.mxu0 0.0
  %1555 = vmatpush1.msra.mxu0 %v291
  %1556 = vmatprep.subr.mxu0 0.0
  %1557 = vmatpush2.msra.mxu0 0.0
  %1558 = vmatprep.subr.mxu0 0.0
  %1559 = vmatpush2.msra.mxu0 0.0
  %1560 = vmatprep.subr.mxu0 0.0
  %1561 = vmatpush2.msra.mxu0 0.0
  %1562 = vmatprep.subr.mxu0 0.0
  %1563 = vmatpush2.msra.mxu0 0.0
  %1564 = vmatprep.subr.mxu0 0.0
  %1565 = vmatpush2.msra.mxu0 0.0
  %1566 = vmatprep.subr.mxu0 0.0
  %1567 = vmatpush2.msra.mxu0 0.0
  %1568 = vmatprep.subr.mxu0 0.0
  %1569 = vmatpush2.msra.mxu0 0.0
  %1570 = vmatprep.subr.mxu0 0.0
  %1571 = vmatpush2.msra.mxu0 0.0
  %1572 = vmatprep.subr.mxu0 0.0
  %1573 = vmatpush2.msra.mxu0 0.0
  %1574 = vmatprep.subr.mxu0 0.0
  %1575 = vmatpush2.msra.mxu0 0.0
  %1576 = vmatprep.subr.mxu0 0.0
  %1577 = vmatpush2.msra.mxu0 0.0
  %1578 = vmatprep.subr.mxu0 0.0
  %1579 = vmatpush2.msra.mxu0 0.0
  %1580 = vmatprep.subr.mxu0 0.0
  %1581 = vmatpush2.msra.mxu0 0.0
  %1582 = vmatprep.subr.mxu0 0.0
  %1583 = vmatpush2.msra.mxu0 0.0
  %1584 = vmatprep.subr.mxu0 0.0
  %1585 = vmatpush2.msra.mxu0 0.0
  %1586 = vmatprep.subr.mxu0 0.0
  %1587 = vmatpush2.msra.mxu0 0.0
  %1588 = vmatprep.mubr.f32.mxu0 0.0
  %1589 = vmatmul.mubr.f32.gmra.mxu0 %v1522
  %v1590 = vpop.f32.mrf.mxu0
  %v1591 = vadd.f32 0.0, %v1590
  %v1592 = vpop.f32.mrf.mxu0
  %1593 = vdwg.mxu0
  %v1594 = vadd.f32 %v167, %v1591
  %v1595 = vxor.u32 %v1594, 2147483648
  %v1596 = vmul.f32 %v1595, 1.442695
  %v1597 = vpow.pop %v1596
  %v1598 = vadd.f32 %v1597, 1.0
  %v1599 = vrcp.pop %v1598
  %v1600 = vmul.f32 1.0, %v1599
  %v1601 = vtanh.pop %v1594
  %v1602 = vmul.f32 %v1600, %v1408
  %1604 = vrot.lane.b32.xlu0 %v1601, 64
  %v1605 = vpop.permute.xlu0 %1604
  %v1607 = vmul.f32 %v1600, %v1605
  %1609 = vrot.lane.b32.xlu0 %v1607, 32
  %v1610 = vpop.permute.xlu0 %1609
  %v1612 = vadd.f32 %v1602, %v1610
  %v1613 = vtanh.pop %v1612
  %1615 = vrot.lane.b32.xlu0 %v1613, 64
  %v1616 = vpop.permute.xlu0 %1615
  %v1618 = vmul.f32 %v1600, %v1616
  %v1619 = vsel %vm45, %v1519, 0
  %1621 = vmatprep.subr.mxu0 0.0
  %1622 = vmatpush1.msra.mxu0 0.0
  %1623 = vmatprep.subr.mxu0 0.0
  %1624 = vmatpush1.msra.mxu0 0.0
  %1625 = vmatprep.subr.mxu0 0.0
  %1626 = vmatpush1.msra.mxu0 0.0
  %1627 = vmatprep.subr.mxu0 0.0
  %1628 = vmatpush1.msra.mxu0 0.0
  %1629 = vmatprep.subr.mxu0 0.0
  %1630 = vmatpush1.msra.mxu0 0.0
  %1631 = vmatprep.subr.mxu0 0.0
  %1632 = vmatpush1.msra.mxu0 0.0
  %1633 = vmatprep.subr.mxu0 0.0
  %1634 = vmatpush1.msra.mxu0 0.0
  %1635 = vmatprep.subr.mxu0 0.0
  %1636 = vmatpush1.msra.mxu0 0.0
  %1637 = vmatprep.subr.mxu0 0.0
  %1638 = vmatpush1.msra.mxu0 0.0
  %1639 = vmatprep.subr.mxu0 0.0
  %1640 = vmatpush1.msra.mxu0 0.0
  %1641 = vmatprep.subr.mxu0 0.0
  %1642 = vmatpush1.msra.mxu0 0.0
  %1643 = vmatprep.subr.mxu0 0.0
  %1644 = vmatpush1.msra.mxu0 0.0
  %1645 = vmatprep.subr.mxu0 0.0
  %1646 = vmatpush1.msra.mxu0 %v298
  %1647 = vmatprep.subr.mxu0 0.0
  %1648 = vmatpush1.msra.mxu0 %v297
  %1649 = vmatprep.subr.mxu0 0.0
  %1650 = vmatpush1.msra.mxu0 %v296
  %1651 = vmatprep.subr.mxu0 0.0
  %1652 = vmatpush1.msra.mxu0 %v295
  %1653 = vmatprep.subr.mxu0 0.0
  %1654 = vmatpush2.msra.mxu0 0.0
  %1655 = vmatprep.subr.mxu0 0.0
  %1656 = vmatpush2.msra.mxu0 0.0
  %1657 = vmatprep.subr.mxu0 0.0
  %1658 = vmatpush2.msra.mxu0 0.0
  %1659 = vmatprep.subr.mxu0 0.0
  %1660 = vmatpush2.msra.mxu0 0.0
  %1661 = vmatprep.subr.mxu0 0.0
  %1662 = vmatpush2.msra.mxu0 0.0
  %1663 = vmatprep.subr.mxu0 0.0
  %1664 = vmatpush2.msra.mxu0 0.0
  %1665 = vmatprep.subr.mxu0 0.0
  %1666 = vmatpush2.msra.mxu0 0.0
  %1667 = vmatprep.subr.mxu0 0.0
  %1668 = vmatpush2.msra.mxu0 0.0
  %1669 = vmatprep.subr.mxu0 0.0
  %1670 = vmatpush2.msra.mxu0 0.0
  %1671 = vmatprep.subr.mxu0 0.0
  %1672 = vmatpush2.msra.mxu0 0.0
  %1673 = vmatprep.subr.mxu0 0.0
  %1674 = vmatpush2.msra.mxu0 0.0
  %1675 = vmatprep.subr.mxu0 0.0
  %1676 = vmatpush2.msra.mxu0 0.0
  %1677 = vmatprep.subr.mxu0 0.0
  %1678 = vmatpush2.msra.mxu0 0.0
  %1679 = vmatprep.subr.mxu0 0.0
  %1680 = vmatpush2.msra.mxu0 0.0
  %1681 = vmatprep.subr.mxu0 0.0
  %1682 = vmatpush2.msra.mxu0 0.0
  %1683 = vmatprep.subr.mxu0 0.0
  %1684 = vmatpush2.msra.mxu0 0.0
  %1685 = vmatprep.mubr.f32.mxu0 0.0
  %1686 = vmatmul.mubr.f32.gmra.mxu0 %v1619
  %v1687 = vpop.f32.mrf.mxu0
  %v1688 = vadd.f32 0.0, %v1687
  %v1689 = vpop.f32.mrf.mxu0
  %1690 = vdwg.mxu0
  %v1691 = vadd.f32 %v258, %v1688
  %v1692 = vxor.u32 %v1691, 2147483648
  %v1693 = vmul.f32 %v1692, 1.442695
  %v1694 = vpow.pop %v1693
  %v1695 = vadd.f32 %v1694, 1.0
  %v1696 = vrcp.pop %v1695
  %v1697 = vmul.f32 1.0, %v1696
  %v1698 = vtanh.pop %v1691
  %v1699 = vmul.f32 %v1697, %v1505
  %1701 = vrot.lane.b32.xlu0 %v1698, 64
  %v1702 = vpop.permute.xlu0 %1701
  %v1704 = vmul.f32 %v1697, %v1702
  %1706 = vrot.lane.b32.xlu0 %v1704, 32
  %v1707 = vpop.permute.xlu0 %1706
  %v1709 = vadd.f32 %v1699, %v1707
  %v1710 = vtanh.pop %v1709
  %1712 = vrot.lane.b32.xlu0 %v1710, 64
  %v1713 = vpop.permute.xlu0 %1712
  %v1715 = vmul.f32 %v1697, %v1713
  %1717 = vrot.lane.b32.xlu0 %v1618, 32
  %v1718 = vpop.permute.xlu0 %1717
  %1720 = vst.msk [vmem:[#allocation2 + $0x30] sm:$0xff] %vm45, %v1718
  %1722 = vrot.lane.b32.xlu0 %v1715, 32
  %v1723 = vpop.permute.xlu0 %1722
  %1725 = vst.msk [vmem:[#allocation3 + $0x8] sm:$0xff] %vm45, %v1723
  %v1726 = vsel %vm45, %v1718, 0
  %1728 = vmatprep.subr.mxu0 0.0
  %1729 = vmatpush1.msra.mxu0 0.0
  %1730 = vmatprep.subr.mxu0 0.0
  %1731 = vmatpush1.msra.mxu0 0.0
  %1732 = vmatprep.subr.mxu0 0.0
  %1733 = vmatpush1.msra.mxu0 0.0
  %1734 = vmatprep.subr.mxu0 0.0
  %1735 = vmatpush1.msra.mxu0 0.0
  %1736 = vmatprep.subr.mxu0 0.0
  %1737 = vmatpush1.msra.mxu0 0.0
  %1738 = vmatprep.subr.mxu0 0.0
  %1739 = vmatpush1.msra.mxu0 0.0
  %1740 = vmatprep.subr.mxu0 0.0
  %1741 = vmatpush1.msra.mxu0 0.0
  %1742 = vmatprep.subr.mxu0 0.0
  %1743 = vmatpush1.msra.mxu0 0.0
  %1744 = vmatprep.subr.mxu0 0.0
  %1745 = vmatpush1.msra.mxu0 0.0
  %1746 = vmatprep.subr.mxu0 0.0
  %1747 = vmatpush1.msra.mxu0 0.0
  %1748 = vmatprep.subr.mxu0 0.0
  %1749 = vmatpush1.msra.mxu0 0.0
  %1750 = vmatprep.subr.mxu0 0.0
  %1751 = vmatpush1.msra.mxu0 0.0
  %1752 = vmatprep.subr.mxu0 0.0
  %1753 = vmatpush1.msra.mxu0 %v294
  %1754 = vmatprep.subr.mxu0 0.0
  %1755 = vmatpush1.msra.mxu0 %v293
  %1756 = vmatprep.subr.mxu0 0.0
  %1757 = vmatpush1.msra.mxu0 %v292
  %1758 = vmatprep.subr.mxu0 0.0
  %1759 = vmatpush1.msra.mxu0 %v291
  %1760 = vmatprep.subr.mxu0 0.0
  %1761 = vmatpush2.msra.mxu0 0.0
  %1762 = vmatprep.subr.mxu0 0.0
  %1763 = vmatpush2.msra.mxu0 0.0
  %1764 = vmatprep.subr.mxu0 0.0
  %1765 = vmatpush2.msra.mxu0 0.0
  %1766 = vmatprep.subr.mxu0 0.0
  %1767 = vmatpush2.msra.mxu0 0.0
  %1768 = vmatprep.subr.mxu0 0.0
  %1769 = vmatpush2.msra.mxu0 0.0
  %1770 = vmatprep.subr.mxu0 0.0
  %1771 = vmatpush2.msra.mxu0 0.0
  %1772 = vmatprep.subr.mxu0 0.0
  %1773 = vmatpush2.msra.mxu0 0.0
  %1774 = vmatprep.subr.mxu0 0.0
  %1775 = vmatpush2.msra.mxu0 0.0
  %1776 = vmatprep.subr.mxu0 0.0
  %1777 = vmatpush2.msra.mxu0 0.0
  %1778 = vmatprep.subr.mxu0 0.0
  %1779 = vmatpush2.msra.mxu0 0.0
  %1780 = vmatprep.subr.mxu0 0.0
  %1781 = vmatpush2.msra.mxu0 0.0
  %1782 = vmatprep.subr.mxu0 0.0
  %1783 = vmatpush2.msra.mxu0 0.0
  %1784 = vmatprep.subr.mxu0 0.0
  %1785 = vmatpush2.msra.mxu0 0.0
  %1786 = vmatprep.subr.mxu0 0.0
  %1787 = vmatpush2.msra.mxu0 0.0
  %1788 = vmatprep.subr.mxu0 0.0
  %1789 = vmatpush2.msra.mxu0 0.0
  %1790 = vmatprep.subr.mxu0 0.0
  %1791 = vmatpush2.msra.mxu0 0.0
  %1792 = vmatprep.mubr.f32.mxu0 0.0
  %1793 = vmatmul.mubr.f32.gmra.mxu0 %v1726
  %v1794 = vpop.f32.mrf.mxu0
  %v1795 = vadd.f32 0.0, %v1794
  %v1796 = vpop.f32.mrf.mxu0
  %1797 = vdwg.mxu0
  %v1798 = vadd.f32 %v172, %v1795
  %v1799 = vxor.u32 %v1798, 2147483648
  %v1800 = vmul.f32 %v1799, 1.442695
  %v1801 = vpow.pop %v1800
  %v1802 = vadd.f32 %v1801, 1.0
  %v1803 = vrcp.pop %v1802
  %v1804 = vmul.f32 1.0, %v1803
  %v1805 = vtanh.pop %v1798
  %v1806 = vmul.f32 %v1804, %v1612
  %1808 = vrot.lane.b32.xlu0 %v1805, 64
  %v1809 = vpop.permute.xlu0 %1808
  %v1811 = vmul.f32 %v1804, %v1809
  %1813 = vrot.lane.b32.xlu0 %v1811, 32
  %v1814 = vpop.permute.xlu0 %1813
  %v1816 = vadd.f32 %v1806, %v1814
  %v1817 = vtanh.pop %v1816
  %1819 = vrot.lane.b32.xlu0 %v1817, 64
  %v1820 = vpop.permute.xlu0 %1819
  %v1822 = vmul.f32 %v1804, %v1820
  %v1823 = vsel %vm45, %v1723, 0
  %1825 = vmatprep.subr.mxu0 0.0
  %1826 = vmatpush1.msra.mxu0 0.0
  %1827 = vmatprep.subr.mxu0 0.0
  %1828 = vmatpush1.msra.mxu0 0.0
  %1829 = vmatprep.subr.mxu0 0.0
  %1830 = vmatpush1.msra.mxu0 0.0
  %1831 = vmatprep.subr.mxu0 0.0
  %1832 = vmatpush1.msra.mxu0 0.0
  %1833 = vmatprep.subr.mxu0 0.0
  %1834 = vmatpush1.msra.mxu0 0.0
  %1835 = vmatprep.subr.mxu0 0.0
  %1836 = vmatpush1.msra.mxu0 0.0
  %1837 = vmatprep.subr.mxu0 0.0
  %1838 = vmatpush1.msra.mxu0 0.0
  %1839 = vmatprep.subr.mxu0 0.0
  %1840 = vmatpush1.msra.mxu0 0.0
  %1841 = vmatprep.subr.mxu0 0.0
  %1842 = vmatpush1.msra.mxu0 0.0
  %1843 = vmatprep.subr.mxu0 0.0
  %1844 = vmatpush1.msra.mxu0 0.0
  %1845 = vmatprep.subr.mxu0 0.0
  %1846 = vmatpush1.msra.mxu0 0.0
  %1847 = vmatprep.subr.mxu0 0.0
  %1848 = vmatpush1.msra.mxu0 0.0
  %1849 = vmatprep.subr.mxu0 0.0
  %1850 = vmatpush1.msra.mxu0 %v298
  %1851 = vmatprep.subr.mxu0 0.0
  %1852 = vmatpush1.msra.mxu0 %v297
  %1853 = vmatprep.subr.mxu0 0.0
  %1854 = vmatpush1.msra.mxu0 %v296
  %1855 = vmatprep.subr.mxu0 0.0
  %1856 = vmatpush1.msra.mxu0 %v295
  %1857 = vmatprep.subr.mxu0 0.0
  %1858 = vmatpush2.msra.mxu0 0.0
  %1859 = vmatprep.subr.mxu0 0.0
  %1860 = vmatpush2.msra.mxu0 0.0
  %1861 = vmatprep.subr.mxu0 0.0
  %1862 = vmatpush2.msra.mxu0 0.0
  %1863 = vmatprep.subr.mxu0 0.0
  %1864 = vmatpush2.msra.mxu0 0.0
  %1865 = vmatprep.subr.mxu0 0.0
  %1866 = vmatpush2.msra.mxu0 0.0
  %1867 = vmatprep.subr.mxu0 0.0
  %1868 = vmatpush2.msra.mxu0 0.0
  %1869 = vmatprep.subr.mxu0 0.0
  %1870 = vmatpush2.msra.mxu0 0.0
  %1871 = vmatprep.subr.mxu0 0.0
  %1872 = vmatpush2.msra.mxu0 0.0
  %1873 = vmatprep.subr.mxu0 0.0
  %1874 = vmatpush2.msra.mxu0 0.0
  %1875 = vmatprep.subr.mxu0 0.0
  %1876 = vmatpush2.msra.mxu0 0.0
  %1877 = vmatprep.subr.mxu0 0.0
  %1878 = vmatpush2.msra.mxu0 0.0
  %1879 = vmatprep.subr.mxu0 0.0
  %1880 = vmatpush2.msra.mxu0 0.0
  %1881 = vmatprep.subr.mxu0 0.0
  %1882 = vmatpush2.msra.mxu0 0.0
  %1883 = vmatprep.subr.mxu0 0.0
  %1884 = vmatpush2.msra.mxu0 0.0
  %1885 = vmatprep.subr.mxu0 0.0
  %1886 = vmatpush2.msra.mxu0 0.0
  %1887 = vmatprep.subr.mxu0 0.0
  %1888 = vmatpush2.msra.mxu0 0.0
  %1889 = vmatprep.mubr.f32.mxu0 0.0
  %1890 = vmatmul.mubr.f32.gmra.mxu0 %v1823
  %v1891 = vpop.f32.mrf.mxu0
  %v1892 = vadd.f32 0.0, %v1891
  %v1893 = vpop.f32.mrf.mxu0
  %1894 = vdwg.mxu0
  %v1895 = vadd.f32 %v253, %v1892
  %v1896 = vxor.u32 %v1895, 2147483648
  %v1897 = vmul.f32 %v1896, 1.442695
  %v1898 = vpow.pop %v1897
  %v1899 = vadd.f32 %v1898, 1.0
  %v1900 = vrcp.pop %v1899
  %v1901 = vmul.f32 1.0, %v1900
  %v1902 = vtanh.pop %v1895
  %v1903 = vmul.f32 %v1901, %v1709
  %1905 = vrot.lane.b32.xlu0 %v1902, 64
  %v1906 = vpop.permute.xlu0 %1905
  %v1908 = vmul.f32 %v1901, %v1906
  %1910 = vrot.lane.b32.xlu0 %v1908, 32
  %v1911 = vpop.permute.xlu0 %1910
  %v1913 = vadd.f32 %v1903, %v1911
  %v1914 = vtanh.pop %v1913
  %1916 = vrot.lane.b32.xlu0 %v1914, 64
  %v1917 = vpop.permute.xlu0 %1916
  %v1919 = vmul.f32 %v1901, %v1917
  %1921 = vrot.lane.b32.xlu0 %v1822, 32
  %v1922 = vpop.permute.xlu0 %1921
  %1924 = vst.msk [vmem:[#allocation2 + $0x38] sm:$0xff] %vm45, %v1922
  %1926 = vrot.lane.b32.xlu0 %v1919, 32
  %v1927 = vpop.permute.xlu0 %1926
  %1929 = vst.msk [vmem:[#allocation3] sm:$0xff] %vm45, %v1927
  %v1930 = vld [vmem:[#allocation2] sm:$0xff]
  %v1931 = vld [vmem:[#allocation2 + $0x8] sm:$0xff]
  %v1932 = vld [vmem:[#allocation2 + $0x10] sm:$0xff]
  %v1933 = vld [vmem:[#allocation2 + $0x18] sm:$0xff]
  %v1934 = vld [vmem:[#allocation2 + $0x20] sm:$0xff]
  %v1935 = vld [vmem:[#allocation2 + $0x28] sm:$0xff]
  %v1936 = vld [vmem:[#allocation2 + $0x30] sm:$0xff]
  %v1937 = vld [vmem:[#allocation2 + $0x38] sm:$0xff]
  %v1938 = vld [vmem:[#allocation3] sm:$0xff]
  %v1939 = vld [vmem:[#allocation3 + $0x8] sm:$0xff]
  %v1940 = vld [vmem:[#allocation3 + $0x10] sm:$0xff]
  %v1941 = vld [vmem:[#allocation3 + $0x18] sm:$0xff]
  %v1942 = vld [vmem:[#allocation3 + $0x20] sm:$0xff]
  %v1943 = vld [vmem:[#allocation3 + $0x28] sm:$0xff]
  %v1944 = vld [vmem:[#allocation3 + $0x30] sm:$0xff]
  %v1945 = vld [vmem:[#allocation3 + $0x38] sm:$0xff]
  %1954 = vrot.lane.b32.xlu0 %v1938, 32
  %v1955 = vpop.permute.xlu0 %1954
  %1956 = vrot.lane.b32.xlu0 %v1939, 32
  %v1957 = vpop.permute.xlu0 %1956
  %1958 = vrot.lane.b32.xlu0 %v1940, 32
  %v1959 = vpop.permute.xlu0 %1958
  %1960 = vrot.lane.b32.xlu0 %v1941, 32
  %v1961 = vpop.permute.xlu0 %1960
  %1962 = vrot.lane.b32.xlu0 %v1942, 32
  %v1963 = vpop.permute.xlu0 %1962
  %1964 = vrot.lane.b32.xlu0 %v1943, 32
  %v1965 = vpop.permute.xlu0 %1964
  %1966 = vrot.lane.b32.xlu0 %v1944, 32
  %v1967 = vpop.permute.xlu0 %1966
  %1968 = vrot.lane.b32.xlu0 %v1945, 32
  %v1969 = vpop.permute.xlu0 %1968
  %v1978 = vsel %vm45, %v1930, %v1955
  %v1979 = vsel %vm45, %v1931, %v1957
  %v1980 = vsel %vm45, %v1932, %v1959
  %v1981 = vsel %vm45, %v1933, %v1961
  %v1982 = vsel %vm45, %v1934, %v1963
  %v1983 = vsel %vm45, %v1935, %v1965
  %v1984 = vsel %vm45, %v1936, %v1967
  %v1985 = vsel %vm45, %v1937, %v1969
  %vm1986 = vcmask 523264
  %1987 = vst.msk [vmem:[%s7] sm:$0xff] %vm1986, %v1978
  %1988 = vst.msk [vmem:[%s7 + $0x8] sm:$0xff] %vm1986, %v1979
  %1989 = vst.msk [vmem:[%s7 + $0x10] sm:$0xff] %vm1986, %v1980
  %1990 = vst.msk [vmem:[%s7 + $0x18] sm:$0xff] %vm1986, %v1981
  %1991 = vst.msk [vmem:[%s7 + $0x20] sm:$0xff] %vm1986, %v1982
  %1992 = vst.msk [vmem:[%s7 + $0x28] sm:$0xff] %vm1986, %v1983
  %1993 = vst.msk [vmem:[%s7 + $0x30] sm:$0xff] %vm1986, %v1984
  %1994 = vst.msk [vmem:[%s7 + $0x38] sm:$0xff] %vm1986, %v1985
  // Predicated region
  $region30: #{forward.2} parent=0 // pred_check
    _
  $region31: #{forward.2} parent=0 // pred_check_branch
    %1996 = sbr.rel (0) target = $region33
  $region32: #{forward.2} parent=0 // pred_region
    _
  $region33: #{forward.2} parent=0 // pred_fallthru
    _
  // Predicated region
  $region34: #{forward.2} parent=0 // pred_check
    _
  $region35: #{forward.2} parent=0 // pred_check_branch
    %1998 = sbr.rel (0) target = $region37
  $region36: #{forward.2} parent=0 // pred_region
    _
  $region37: #{forward.2} parent=0 // pred_fallthru
    _

</llo_original>
